<compile_context>
chip_gen: v5e
topology: v5e:2x2
jax: 0.10.0
libtpu: 0.0.40
codegen_flags: <defaults>
</compile_context>

<pallas_src>
import functools

import jax
import jax.numpy as jnp
import numpy as np
from jax.experimental import pallas as pl
from jax.experimental.pallas import tpu as pltpu

# Use full-precision f32 matmuls everywhere (kernel and reference) so the
# MXU result matches the pure-JAX reference tightly.
jax.config.update("jax_default_matmul_precision", "highest")


def _sigmoid(x):
    # Explicit formula (exp + reciprocal on the EUP) so the kernel and the
    # pure-JAX reference use identical math.
    return 1.0 / (1.0 + jnp.exp(-x))


def _lstm_cell(gates, c):
    """PyTorch LSTM cell: gates laid out as [i | f | g | o] chunks of R."""
    R = gates.shape[1] // 4
    i = _sigmoid(gates[:, 0 * R:1 * R])
    f = _sigmoid(gates[:, 1 * R:2 * R])
    g = jnp.tanh(gates[:, 2 * R:3 * R])
    o = _sigmoid(gates[:, 3 * R:4 * R])
    c_new = f * c + i * g
    h_new = o * jnp.tanh(c_new)
    return h_new, c_new


def code_attn_kernel(x_ref, wih0_ref, whh0_ref, b0_ref, w1_ref, b1_ref,
                     wfc_ref, out_ref, *, batch):
    """x_ref: (T*B, F) time-major embedded sequence.
    wih0: (F,4R)  whh0: (R,4R)  b0: (1,4R)   -- layer 0 (biases combined)
    w1:   (2R,4R) [W_ih_l1.T ; W_hh_l1.T]  b1: (1,4R) -- layer 1
    wfc:  (1, R)  -- attention scorer (Linear(R,1,bias=False))
    out:  (B, R)
    """
    TB, _ = x_ref.shape
    B = batch
    T = TB // B
    R = out_ref.shape[1]

    # Layer-0 input-gate contributions for ALL timesteps in ONE MXU matmul,
    # with the combined bias folded directly into the accumulator.
    xg0 = jnp.dot(x_ref[...], wih0_ref[...],
                  preferred_element_type=jnp.float32) + b0_ref[...]   # (T*B, 4R)

    whh0 = whh0_ref[...]
    w1 = w1_ref[...]
    b1 = b1_ref[...]
    wfc = wfc_ref[...]                                                # (1, R)

    h0 = jnp.zeros((B, R), jnp.float32)
    c0 = jnp.zeros((B, R), jnp.float32)
    h1 = jnp.zeros((B, R), jnp.float32)
    c1 = jnp.zeros((B, R), jnp.float32)
    acc = jnp.zeros((B, R), jnp.float32)

    # Small static trip count -> fully unrolled, fully visible to the scheduler.
    for t in range(T):
        # ---- LSTM layer 0: only the recurrent term remains per step ----
        g0 = xg0[t * B:(t + 1) * B, :] + jnp.dot(
            h0, whh0, preferred_element_type=jnp.float32)
        h0, c0 = _lstm_cell(g0, c0)

        # ---- LSTM layer 1: input + recurrent fused into ONE K=2R matmul ----
        g1 = jnp.dot(jnp.concatenate([h0, h1], axis=-1), w1,
                     preferred_element_type=jnp.float32) + b1
        h1, c1 = _lstm_cell(g1, c1)

        # ---- attention logit: Linear(R, 1, bias=False) ----
        logit = jnp.sum(h1 * wfc, axis=-1, keepdims=True)             # (B, 1)

        # F.softmax with no dim on a 3-D tensor uses implicit dim=0 in PyTorch,
        # i.e. softmax across the BATCH axis, independently per timestep.
        e = jnp.exp(logit - jnp.max(logit, axis=0, keepdims=True))
        a = e / jnp.sum(e, axis=0, keepdims=True)                     # (B, 1)

        # Weighted sum over the time axis, accumulated on the fly.
        acc = acc + h1 * a

    out_ref[...] = acc


def prepare_code_attn_params(emb_w,
                             w_ih_l0, w_hh_l0, b_ih_l0, b_hh_l0,
                             w_ih_l1, w_hh_l1, b_ih_l1, b_hh_l1,
                             w_fc):
    """One-time parameter re-layout into kernel-friendly shapes (done outside
    the hot path so no per-call transposes/reshapes are paid)."""
    f32 = jnp.float32
    return dict(
        emb=emb_w.astype(f32),                                        # (V, E)
        wih0=jnp.transpose(w_ih_l0).astype(f32),                      # (F, 4R)
        whh0=jnp.transpose(w_hh_l0).astype(f32),                      # (R, 4R)
        b0=(b_ih_l0 + b_hh_l0).astype(f32).reshape(1, -1),            # (1, 4R)
        w1=jnp.concatenate([jnp.transpose(w_ih_l1),
                            jnp.transpose(w_hh_l1)], axis=0).astype(f32),  # (2R, 4R)
        b1=(b_ih_l1 + b_hh_l1).astype(f32).reshape(1, -1),            # (1, 4R)
        wfc=w_fc.astype(f32).reshape(1, -1),                          # (1, R)
    )


def code_attn_forward(code, params):
    """code: int32 (B, S, N) = (batch, code_seq_len, codes-per-step).
    Returns (B, rnn_size) float32, matching CodeAttn.forward (signal=True)."""
    B, S, N = code.shape
    emb = params["emb"]
    E = emb.shape[1]
    F = S * E
    R = params["whh0"].shape[0]

    # --- glue: embedding gather + the module's transpose(1,2)/reshape ---
    x = emb[code]                                                     # (B,S,N,E)
    x = jnp.transpose(x, (0, 2, 1, 3)).reshape(B, N, F)               # (B,T,F)
    x = jnp.transpose(x, (1, 0, 2)).reshape(N * B, F)                 # (T*B, F) time-major

    grid_spec = pltpu.PrefetchScalarGridSpec(
        num_scalar_prefetch=0,
        grid=(1,),
        in_specs=[
            pl.BlockSpec((N * B, F), lambda i: (0, 0)),       # x
            pl.BlockSpec((F, 4 * R), lambda i: (0, 0)),       # wih0
            pl.BlockSpec((R, 4 * R), lambda i: (0, 0)),       # whh0
            pl.BlockSpec((1, 4 * R), lambda i: (0, 0)),       # b0
            pl.BlockSpec((2 * R, 4 * R), lambda i: (0, 0)),   # w1 (stacked)
            pl.BlockSpec((1, 4 * R), lambda i: (0, 0)),       # b1
            pl.BlockSpec((1, R), lambda i: (0, 0)),           # wfc
        ],
        out_specs=pl.BlockSpec((B, R), lambda i: (0, 0)),
    )
    return pl.pallas_call(
        functools.partial(code_attn_kernel, batch=B),
        out_shape=jax.ShapeDtypeStruct((B, R), jnp.float32),
        grid_spec=grid_spec,
        compiler_params=pltpu.CompilerParams(
            dimension_semantics=("arbitrary",)),
    )(x, params["wih0"], params["whh0"], params["b0"],
      params["w1"], params["b1"], params["wfc"])


if __name__ == "__main__":
    # Small shapes consistent with the module:
    B = 2        # batch_size
    S = 4        # code_seq_len
    N = 8        # codes per step  -> LSTM sequence length
    V = 16       # code_vocab_size
    E = 8        # embed_size      -> LSTM input_size = S*E = 32
    R = 32       # rnn_size        -> 4R = 128 (lane-dense gate slabs)
    F = S * E

    key = jax.random.PRNGKey(0)
    ks = jax.random.split(key, 12)

    # nn.Embedding(V, E, padding_idx=0): N(0,1) init, padding row zeroed.
    emb_w = jax.random.normal(ks[0], (V, E), dtype=jnp.float32)
    emb_w = emb_w.at[0].set(0.0)

    # nn.LSTM(S*E, R, num_layers=2): all weights/biases ~ U(-1/sqrt(R), 1/sqrt(R)).
    bound = 1.0 / np.sqrt(R)

    def u(k, shape):
        return jax.random.uniform(k, shape, minval=-bound, maxval=bound,
                                  dtype=jnp.float32)

    w_ih_l0 = u(ks[1], (4 * R, F)); w_hh_l0 = u(ks[2], (4 * R, R))
    b_ih_l0 = u(ks[3], (4 * R,));   b_hh_l0 = u(ks[4], (4 * R,))
    w_ih_l1 = u(ks[5], (4 * R, R)); w_hh_l1 = u(ks[6], (4 * R, R))
    b_ih_l1 = u(ks[7], (4 * R,));   b_hh_l1 = u(ks[8], (4 * R,))
    # nn.Linear(R, 1, bias=False)
    w_fc = u(ks[9], (1, R))

    code = jax.random.randint(ks[10], (B, S, N), 0, V, dtype=jnp.int32)

    params = prepare_code_attn_params(
        emb_w, w_ih_l0, w_hh_l0, b_ih_l0, b_hh_l0,
        w_ih_l1, w_hh_l1, b_ih_l1, b_hh_l1, w_fc)

    out = jax.block_until_ready(code_attn_forward(code, params))

    # ---- pure-JAX reference of the PyTorch forward (eval mode) ----
    x = emb_w[code]                                            # (B,S,N,E)
    x = jnp.transpose(x, (0, 2, 1, 3)).reshape(B, N, F)        # (B,T,F)

    def lstm_layer(seq, w_ih, w_hh, b_ih, b_hh):
        h = jnp.zeros((B, R), jnp.float32)
        c = jnp.zeros((B, R), jnp.float32)
        outs = []
        for t in range(seq.shape[1]):
            g = seq[:, t, :] @ w_ih.T + b_ih + h @ w_hh.T + b_hh
            i = _sigmoid(g[:, :R]); f = _sigmoid(g[:, R:2 * R])
            gg = jnp.tanh(g[:, 2 * R:3 * R]); o = _sigmoid(g[:, 3 * R:])
            c = f * c + i * gg
            h = o * jnp.tanh(c)
            outs.append(h)
        return jnp.stack(outs, axis=1)                         # (B,T,R)

    h_l0 = lstm_layer(x, w_ih_l0, w_hh_l0, b_ih_l0, b_hh_l0)
    h_l1 = lstm_layer(h_l0, w_ih_l1, w_hh_l1, b_ih_l1, b_hh_l1)
    logits = h_l1 @ w_fc.T                                     # (B,T,1)
    attn = jax.nn.softmax(logits, axis=0)     # literal F.softmax -> dim=0 for 3-D
    ref = jnp.sum(h_l1 * attn, axis=1)                         # (B,R)

    # Tolerance accounts for MXU-vs-XLA f32 rounding in the recurrent matmuls.
    np.testing.assert_allclose(np.asarray(out), np.asarray(ref),
                               rtol=5e-3, atol=5e-3)

    print("KERNEL_OK")
</pallas_src>

<mosaic_0001>
module attributes {stable_mosaic.version = 11 : i64} {
  func.func @code_attn_kernel(%arg0: i32, %arg1: memref<16x32xf32, #tpu.memory_space<vmem>>, %arg2: memref<32x128xf32, #tpu.memory_space<vmem>>, %arg3: memref<32x128xf32, #tpu.memory_space<vmem>>, %arg4: memref<1x128xf32, #tpu.memory_space<vmem>>, %arg5: memref<64x128xf32, #tpu.memory_space<vmem>>, %arg6: memref<1x128xf32, #tpu.memory_space<vmem>>, %arg7: memref<1x32xf32, #tpu.memory_space<vmem>>, %arg8: memref<2x32xf32, #tpu.memory_space<vmem>>) attributes {dimension_semantics = [#tpu.dimension_semantics<arbitrary>], iteration_bounds = array<i64: 1>, scalar_prefetch = 0 : i64, scratch_operands = 0 : i64, tpu.core_type = #tpu.core_type<tc>, window_params = [{pipeline_mode = #tpu.pipeline_mode<synchronous>, transform_indices = @transform_0, window_bounds = array<i64: 16, 32>}, {pipeline_mode = #tpu.pipeline_mode<synchronous>, transform_indices = @transform_1, window_bounds = array<i64: 32, 128>}, {pipeline_mode = #tpu.pipeline_mode<synchronous>, transform_indices = @transform_2, window_bounds = array<i64: 32, 128>}, {pipeline_mode = #tpu.pipeline_mode<synchronous>, transform_indices = @transform_3, window_bounds = array<i64: 1, 128>}, {pipeline_mode = #tpu.pipeline_mode<synchronous>, transform_indices = @transform_4, window_bounds = array<i64: 64, 128>}, {pipeline_mode = #tpu.pipeline_mode<synchronous>, transform_indices = @transform_5, window_bounds = array<i64: 1, 128>}, {pipeline_mode = #tpu.pipeline_mode<synchronous>, transform_indices = @transform_6, window_bounds = array<i64: 1, 32>}, {pipeline_mode = #tpu.pipeline_mode<synchronous>, transform_indices = @transform_7, window_bounds = array<i64: 2, 32>}]} {
    %c0 = arith.constant 0 : index
    %c0_0 = arith.constant 0 : index
    %0 = vector.load %arg1[%c0, %c0_0] : memref<16x32xf32, #tpu.memory_space<vmem>>, vector<16x32xf32>
    %c0_1 = arith.constant 0 : index
    %c0_2 = arith.constant 0 : index
    %1 = vector.load %arg2[%c0_1, %c0_2] : memref<32x128xf32, #tpu.memory_space<vmem>>, vector<32x128xf32>
    %cst = arith.constant dense<0.000000e+00> : vector<16x128xf32>
    %2 = tpu.matmul %0, %1, %cst {dimension_numbers = #tpu.dot_dimension_numbers<[1], [0], [0], [1], [0, 0, 1, 1], [], []>, precision = #tpu.contract_precision<fp32>} : vector<16x32xf32>, vector<32x128xf32>, vector<16x128xf32> -> vector<16x128xf32>
    %c0_3 = arith.constant 0 : index
    %c0_4 = arith.constant 0 : index
    %3 = vector.load %arg4[%c0_3, %c0_4] : memref<1x128xf32, #tpu.memory_space<vmem>>, vector<1x128xf32>
    %4 = vector.broadcast %3 : vector<1x128xf32> to vector<16x128xf32>
    %5 = arith.addf %2, %4 : vector<16x128xf32>
    %c0_5 = arith.constant 0 : index
    %c0_6 = arith.constant 0 : index
    %6 = vector.load %arg3[%c0_5, %c0_6] : memref<32x128xf32, #tpu.memory_space<vmem>>, vector<32x128xf32>
    %c0_7 = arith.constant 0 : index
    %c0_8 = arith.constant 0 : index
    %7 = vector.load %arg5[%c0_7, %c0_8] : memref<64x128xf32, #tpu.memory_space<vmem>>, vector<64x128xf32>
    %c0_9 = arith.constant 0 : index
    %c0_10 = arith.constant 0 : index
    %8 = vector.load %arg6[%c0_9, %c0_10] : memref<1x128xf32, #tpu.memory_space<vmem>>, vector<1x128xf32>
    %c0_11 = arith.constant 0 : index
    %c0_12 = arith.constant 0 : index
    %9 = vector.load %arg7[%c0_11, %c0_12] : memref<1x32xf32, #tpu.memory_space<vmem>>, vector<1x32xf32>
    %cst_13 = arith.constant 0.000000e+00 : f32
    %10 = vector.broadcast %cst_13 : f32 to vector<2x32xf32>
    %cst_14 = arith.constant 0.000000e+00 : f32
    %11 = vector.broadcast %cst_14 : f32 to vector<2x32xf32>
    %cst_15 = arith.constant 0.000000e+00 : f32
    %12 = vector.broadcast %cst_15 : f32 to vector<2x32xf32>
    %cst_16 = arith.constant 0.000000e+00 : f32
    %13 = vector.broadcast %cst_16 : f32 to vector<2x32xf32>
    %cst_17 = arith.constant 0.000000e+00 : f32
    %14 = vector.broadcast %cst_17 : f32 to vector<2x32xf32>
    %15 = vector.extract_strided_slice %5 {offsets = [0, 0], sizes = [2, 128], strides = [1, 1]} : vector<16x128xf32> to vector<2x128xf32>
    %cst_18 = arith.constant dense<0.000000e+00> : vector<2x128xf32>
    %16 = tpu.matmul %10, %6, %cst_18 {dimension_numbers = #tpu.dot_dimension_numbers<[1], [0], [0], [1], [0, 0, 1, 1], [], []>, precision = #tpu.contract_precision<fp32>} : vector<2x32xf32>, vector<32x128xf32>, vector<2x128xf32> -> vector<2x128xf32>
    %17 = arith.addf %15, %16 : vector<2x128xf32>
    %18 = vector.extract_strided_slice %17 {offsets = [0, 0], sizes = [2, 32], strides = [1, 1]} : vector<2x128xf32> to vector<2x32xf32>
    %cst_19 = arith.constant 0.000000e+00 : f32
    %19 = vector.broadcast %cst_19 : f32 to vector<2x32xf32>
    %20 = arith.subf %19, %18 : vector<2x32xf32>
    %21 = math.exp %20 : vector<2x32xf32>
    %cst_20 = arith.constant 1.000000e+00 : f32
    %22 = vector.broadcast %cst_20 : f32 to vector<2x32xf32>
    %23 = arith.addf %22, %21 : vector<2x32xf32>
    %cst_21 = arith.constant 1.000000e+00 : f32
    %24 = vector.broadcast %cst_21 : f32 to vector<2x32xf32>
    %25 = arith.divf %24, %23 : vector<2x32xf32>
    %26 = vector.extract_strided_slice %17 {offsets = [0, 32], sizes = [2, 32], strides = [1, 1]} : vector<2x128xf32> to vector<2x32xf32>
    %cst_22 = arith.constant 0.000000e+00 : f32
    %27 = vector.broadcast %cst_22 : f32 to vector<2x32xf32>
    %28 = arith.subf %27, %26 : vector<2x32xf32>
    %29 = math.exp %28 : vector<2x32xf32>
    %cst_23 = arith.constant 1.000000e+00 : f32
    %30 = vector.broadcast %cst_23 : f32 to vector<2x32xf32>
    %31 = arith.addf %30, %29 : vector<2x32xf32>
    %cst_24 = arith.constant 1.000000e+00 : f32
    %32 = vector.broadcast %cst_24 : f32 to vector<2x32xf32>
    %33 = arith.divf %32, %31 : vector<2x32xf32>
    %34 = vector.extract_strided_slice %17 {offsets = [0, 64], sizes = [2, 32], strides = [1, 1]} : vector<2x128xf32> to vector<2x32xf32>
    %35 = math.tanh %34 : vector<2x32xf32>
    %36 = vector.extract_strided_slice %17 {offsets = [0, 96], sizes = [2, 32], strides = [1, 1]} : vector<2x128xf32> to vector<2x32xf32>
    %cst_25 = arith.constant 0.000000e+00 : f32
    %37 = vector.broadcast %cst_25 : f32 to vector<2x32xf32>
    %38 = arith.subf %37, %36 : vector<2x32xf32>
    %39 = math.exp %38 : vector<2x32xf32>
    %cst_26 = arith.constant 1.000000e+00 : f32
    %40 = vector.broadcast %cst_26 : f32 to vector<2x32xf32>
    %41 = arith.addf %40, %39 : vector<2x32xf32>
    %cst_27 = arith.constant 1.000000e+00 : f32
    %42 = vector.broadcast %cst_27 : f32 to vector<2x32xf32>
    %43 = arith.divf %42, %41 : vector<2x32xf32>
    %44 = arith.mulf %33, %11 : vector<2x32xf32>
    %45 = arith.mulf %25, %35 : vector<2x32xf32>
    %46 = arith.addf %44, %45 : vector<2x32xf32>
    %47 = math.tanh %46 : vector<2x32xf32>
    %48 = arith.mulf %43, %47 : vector<2x32xf32>
    %49 = tpu.concatenate %48, %12 in 1 : vector<2x32xf32>, vector<2x32xf32> -> vector<2x64xf32>
    %cst_28 = arith.constant dense<0.000000e+00> : vector<2x128xf32>
    %50 = tpu.matmul %49, %7, %cst_28 {dimension_numbers = #tpu.dot_dimension_numbers<[1], [0], [0], [1], [0, 0, 1, 1], [], []>, precision = #tpu.contract_precision<fp32>} : vector<2x64xf32>, vector<64x128xf32>, vector<2x128xf32> -> vector<2x128xf32>
    %51 = vector.broadcast %8 : vector<1x128xf32> to vector<2x128xf32>
    %52 = arith.addf %50, %51 : vector<2x128xf32>
    %53 = vector.extract_strided_slice %52 {offsets = [0, 0], sizes = [2, 32], strides = [1, 1]} : vector<2x128xf32> to vector<2x32xf32>
    %cst_29 = arith.constant 0.000000e+00 : f32
    %54 = vector.broadcast %cst_29 : f32 to vector<2x32xf32>
    %55 = arith.subf %54, %53 : vector<2x32xf32>
    %56 = math.exp %55 : vector<2x32xf32>
    %cst_30 = arith.constant 1.000000e+00 : f32
    %57 = vector.broadcast %cst_30 : f32 to vector<2x32xf32>
    %58 = arith.addf %57, %56 : vector<2x32xf32>
    %cst_31 = arith.constant 1.000000e+00 : f32
    %59 = vector.broadcast %cst_31 : f32 to vector<2x32xf32>
    %60 = arith.divf %59, %58 : vector<2x32xf32>
    %61 = vector.extract_strided_slice %52 {offsets = [0, 32], sizes = [2, 32], strides = [1, 1]} : vector<2x128xf32> to vector<2x32xf32>
    %cst_32 = arith.constant 0.000000e+00 : f32
    %62 = vector.broadcast %cst_32 : f32 to vector<2x32xf32>
    %63 = arith.subf %62, %61 : vector<2x32xf32>
    %64 = math.exp %63 : vector<2x32xf32>
    %cst_33 = arith.constant 1.000000e+00 : f32
    %65 = vector.broadcast %cst_33 : f32 to vector<2x32xf32>
    %66 = arith.addf %65, %64 : vector<2x32xf32>
    %cst_34 = arith.constant 1.000000e+00 : f32
    %67 = vector.broadcast %cst_34 : f32 to vector<2x32xf32>
    %68 = arith.divf %67, %66 : vector<2x32xf32>
    %69 = vector.extract_strided_slice %52 {offsets = [0, 64], sizes = [2, 32], strides = [1, 1]} : vector<2x128xf32> to vector<2x32xf32>
    %70 = math.tanh %69 : vector<2x32xf32>
    %71 = vector.extract_strided_slice %52 {offsets = [0, 96], sizes = [2, 32], strides = [1, 1]} : vector<2x128xf32> to vector<2x32xf32>
    %cst_35 = arith.constant 0.000000e+00 : f32
    %72 = vector.broadcast %cst_35 : f32 to vector<2x32xf32>
    %73 = arith.subf %72, %71 : vector<2x32xf32>
    %74 = math.exp %73 : vector<2x32xf32>
    %cst_36 = arith.constant 1.000000e+00 : f32
    %75 = vector.broadcast %cst_36 : f32 to vector<2x32xf32>
    %76 = arith.addf %75, %74 : vector<2x32xf32>
    %cst_37 = arith.constant 1.000000e+00 : f32
    %77 = vector.broadcast %cst_37 : f32 to vector<2x32xf32>
    %78 = arith.divf %77, %76 : vector<2x32xf32>
    %79 = arith.mulf %68, %13 : vector<2x32xf32>
    %80 = arith.mulf %60, %70 : vector<2x32xf32>
    %81 = arith.addf %79, %80 : vector<2x32xf32>
    %82 = math.tanh %81 : vector<2x32xf32>
    %83 = arith.mulf %78, %82 : vector<2x32xf32>
    %84 = vector.broadcast %9 : vector<1x32xf32> to vector<2x32xf32>
    %85 = arith.mulf %83, %84 : vector<2x32xf32>
    %cst_38 = arith.constant dense<0.000000e+00> : vector<2xf32>
    %86 = vector.multi_reduction <add>, %85, %cst_38 [1] : vector<2x32xf32> to vector<2xf32>
    %87 = vector.shape_cast %86 : vector<2xf32> to vector<2x1xf32>
    %cst_39 = arith.constant dense<0xFF800000> : vector<1xf32>
    %88 = vector.multi_reduction <maximumf>, %87, %cst_39 [0] : vector<2x1xf32> to vector<1xf32>
    %89 = vector.shape_cast %88 : vector<1xf32> to vector<1x1xf32>
    %90 = vector.broadcast %89 : vector<1x1xf32> to vector<2x1xf32>
    %91 = arith.subf %87, %90 : vector<2x1xf32>
    %92 = math.exp %91 : vector<2x1xf32>
    %cst_40 = arith.constant dense<0.000000e+00> : vector<1xf32>
    %93 = vector.multi_reduction <add>, %92, %cst_40 [0] : vector<2x1xf32> to vector<1xf32>
    %94 = vector.shape_cast %93 : vector<1xf32> to vector<1x1xf32>
    %95 = vector.broadcast %94 : vector<1x1xf32> to vector<2x1xf32>
    %96 = arith.divf %92, %95 : vector<2x1xf32>
    %97 = vector.broadcast %96 : vector<2x1xf32> to vector<2x32xf32>
    %98 = arith.mulf %83, %97 : vector<2x32xf32>
    %99 = arith.addf %14, %98 : vector<2x32xf32>
    %100 = vector.extract_strided_slice %5 {offsets = [2, 0], sizes = [2, 128], strides = [1, 1]} : vector<16x128xf32> to vector<2x128xf32>
    %cst_41 = arith.constant dense<0.000000e+00> : vector<2x128xf32>
    %101 = tpu.matmul %48, %6, %cst_41 {dimension_numbers = #tpu.dot_dimension_numbers<[1], [0], [0], [1], [0, 0, 1, 1], [], []>, precision = #tpu.contract_precision<fp32>} : vector<2x32xf32>, vector<32x128xf32>, vector<2x128xf32> -> vector<2x128xf32>
    %102 = arith.addf %100, %101 : vector<2x128xf32>
    %103 = vector.extract_strided_slice %102 {offsets = [0, 0], sizes = [2, 32], strides = [1, 1]} : vector<2x128xf32> to vector<2x32xf32>
    %cst_42 = arith.constant 0.000000e+00 : f32
    %104 = vector.broadcast %cst_42 : f32 to vector<2x32xf32>
    %105 = arith.subf %104, %103 : vector<2x32xf32>
    %106 = math.exp %105 : vector<2x32xf32>
    %cst_43 = arith.constant 1.000000e+00 : f32
    %107 = vector.broadcast %cst_43 : f32 to vector<2x32xf32>
    %108 = arith.addf %107, %106 : vector<2x32xf32>
    %cst_44 = arith.constant 1.000000e+00 : f32
    %109 = vector.broadcast %cst_44 : f32 to vector<2x32xf32>
    %110 = arith.divf %109, %108 : vector<2x32xf32>
    %111 = vector.extract_strided_slice %102 {offsets = [0, 32], sizes = [2, 32], strides = [1, 1]} : vector<2x128xf32> to vector<2x32xf32>
    %cst_45 = arith.constant 0.000000e+00 : f32
    %112 = vector.broadcast %cst_45 : f32 to vector<2x32xf32>
    %113 = arith.subf %112, %111 : vector<2x32xf32>
    %114 = math.exp %113 : vector<2x32xf32>
    %cst_46 = arith.constant 1.000000e+00 : f32
    %115 = vector.broadcast %cst_46 : f32 to vector<2x32xf32>
    %116 = arith.addf %115, %114 : vector<2x32xf32>
    %cst_47 = arith.constant 1.000000e+00 : f32
    %117 = vector.broadcast %cst_47 : f32 to vector<2x32xf32>
    %118 = arith.divf %117, %116 : vector<2x32xf32>
    %119 = vector.extract_strided_slice %102 {offsets = [0, 64], sizes = [2, 32], strides = [1, 1]} : vector<2x128xf32> to vector<2x32xf32>
    %120 = math.tanh %119 : vector<2x32xf32>
    %121 = vector.extract_strided_slice %102 {offsets = [0, 96], sizes = [2, 32], strides = [1, 1]} : vector<2x128xf32> to vector<2x32xf32>
    %cst_48 = arith.constant 0.000000e+00 : f32
    %122 = vector.broadcast %cst_48 : f32 to vector<2x32xf32>
    %123 = arith.subf %122, %121 : vector<2x32xf32>
    %124 = math.exp %123 : vector<2x32xf32>
    %cst_49 = arith.constant 1.000000e+00 : f32
    %125 = vector.broadcast %cst_49 : f32 to vector<2x32xf32>
    %126 = arith.addf %125, %124 : vector<2x32xf32>
    %cst_50 = arith.constant 1.000000e+00 : f32
    %127 = vector.broadcast %cst_50 : f32 to vector<2x32xf32>
    %128 = arith.divf %127, %126 : vector<2x32xf32>
    %129 = arith.mulf %118, %46 : vector<2x32xf32>
    %130 = arith.mulf %110, %120 : vector<2x32xf32>
    %131 = arith.addf %129, %130 : vector<2x32xf32>
    %132 = math.tanh %131 : vector<2x32xf32>
    %133 = arith.mulf %128, %132 : vector<2x32xf32>
    %134 = tpu.concatenate %133, %83 in 1 : vector<2x32xf32>, vector<2x32xf32> -> vector<2x64xf32>
    %cst_51 = arith.constant dense<0.000000e+00> : vector<2x128xf32>
    %135 = tpu.matmul %134, %7, %cst_51 {dimension_numbers = #tpu.dot_dimension_numbers<[1], [0], [0], [1], [0, 0, 1, 1], [], []>, precision = #tpu.contract_precision<fp32>} : vector<2x64xf32>, vector<64x128xf32>, vector<2x128xf32> -> vector<2x128xf32>
    %136 = vector.broadcast %8 : vector<1x128xf32> to vector<2x128xf32>
    %137 = arith.addf %135, %136 : vector<2x128xf32>
    %138 = vector.extract_strided_slice %137 {offsets = [0, 0], sizes = [2, 32], strides = [1, 1]} : vector<2x128xf32> to vector<2x32xf32>
    %cst_52 = arith.constant 0.000000e+00 : f32
    %139 = vector.broadcast %cst_52 : f32 to vector<2x32xf32>
    %140 = arith.subf %139, %138 : vector<2x32xf32>
    %141 = math.exp %140 : vector<2x32xf32>
    %cst_53 = arith.constant 1.000000e+00 : f32
    %142 = vector.broadcast %cst_53 : f32 to vector<2x32xf32>
    %143 = arith.addf %142, %141 : vector<2x32xf32>
    %cst_54 = arith.constant 1.000000e+00 : f32
    %144 = vector.broadcast %cst_54 : f32 to vector<2x32xf32>
    %145 = arith.divf %144, %143 : vector<2x32xf32>
    %146 = vector.extract_strided_slice %137 {offsets = [0, 32], sizes = [2, 32], strides = [1, 1]} : vector<2x128xf32> to vector<2x32xf32>
    %cst_55 = arith.constant 0.000000e+00 : f32
    %147 = vector.broadcast %cst_55 : f32 to vector<2x32xf32>
    %148 = arith.subf %147, %146 : vector<2x32xf32>
    %149 = math.exp %148 : vector<2x32xf32>
    %cst_56 = arith.constant 1.000000e+00 : f32
    %150 = vector.broadcast %cst_56 : f32 to vector<2x32xf32>
    %151 = arith.addf %150, %149 : vector<2x32xf32>
    %cst_57 = arith.constant 1.000000e+00 : f32
    %152 = vector.broadcast %cst_57 : f32 to vector<2x32xf32>
    %153 = arith.divf %152, %151 : vector<2x32xf32>
    %154 = vector.extract_strided_slice %137 {offsets = [0, 64], sizes = [2, 32], strides = [1, 1]} : vector<2x128xf32> to vector<2x32xf32>
    %155 = math.tanh %154 : vector<2x32xf32>
    %156 = vector.extract_strided_slice %137 {offsets = [0, 96], sizes = [2, 32], strides = [1, 1]} : vector<2x128xf32> to vector<2x32xf32>
    %cst_58 = arith.constant 0.000000e+00 : f32
    %157 = vector.broadcast %cst_58 : f32 to vector<2x32xf32>
    %158 = arith.subf %157, %156 : vector<2x32xf32>
    %159 = math.exp %158 : vector<2x32xf32>
    %cst_59 = arith.constant 1.000000e+00 : f32
    %160 = vector.broadcast %cst_59 : f32 to vector<2x32xf32>
    %161 = arith.addf %160, %159 : vector<2x32xf32>
    %cst_60 = arith.constant 1.000000e+00 : f32
    %162 = vector.broadcast %cst_60 : f32 to vector<2x32xf32>
    %163 = arith.divf %162, %161 : vector<2x32xf32>
    %164 = arith.mulf %153, %81 : vector<2x32xf32>
    %165 = arith.mulf %145, %155 : vector<2x32xf32>
    %166 = arith.addf %164, %165 : vector<2x32xf32>
    %167 = math.tanh %166 : vector<2x32xf32>
    %168 = arith.mulf %163, %167 : vector<2x32xf32>
    %169 = vector.broadcast %9 : vector<1x32xf32> to vector<2x32xf32>
    %170 = arith.mulf %168, %169 : vector<2x32xf32>
    %cst_61 = arith.constant dense<0.000000e+00> : vector<2xf32>
    %171 = vector.multi_reduction <add>, %170, %cst_61 [1] : vector<2x32xf32> to vector<2xf32>
    %172 = vector.shape_cast %171 : vector<2xf32> to vector<2x1xf32>
    %cst_62 = arith.constant dense<0xFF800000> : vector<1xf32>
    %173 = vector.multi_reduction <maximumf>, %172, %cst_62 [0] : vector<2x1xf32> to vector<1xf32>
    %174 = vector.shape_cast %173 : vector<1xf32> to vector<1x1xf32>
    %175 = vector.broadcast %174 : vector<1x1xf32> to vector<2x1xf32>
    %176 = arith.subf %172, %175 : vector<2x1xf32>
    %177 = math.exp %176 : vector<2x1xf32>
    %cst_63 = arith.constant dense<0.000000e+00> : vector<1xf32>
    %178 = vector.multi_reduction <add>, %177, %cst_63 [0] : vector<2x1xf32> to vector<1xf32>
    %179 = vector.shape_cast %178 : vector<1xf32> to vector<1x1xf32>
    %180 = vector.broadcast %179 : vector<1x1xf32> to vector<2x1xf32>
    %181 = arith.divf %177, %180 : vector<2x1xf32>
    %182 = vector.broadcast %181 : vector<2x1xf32> to vector<2x32xf32>
    %183 = arith.mulf %168, %182 : vector<2x32xf32>
    %184 = arith.addf %99, %183 : vector<2x32xf32>
    %185 = vector.extract_strided_slice %5 {offsets = [4, 0], sizes = [2, 128], strides = [1, 1]} : vector<16x128xf32> to vector<2x128xf32>
    %cst_64 = arith.constant dense<0.000000e+00> : vector<2x128xf32>
    %186 = tpu.matmul %133, %6, %cst_64 {dimension_numbers = #tpu.dot_dimension_numbers<[1], [0], [0], [1], [0, 0, 1, 1], [], []>, precision = #tpu.contract_precision<fp32>} : vector<2x32xf32>, vector<32x128xf32>, vector<2x128xf32> -> vector<2x128xf32>
    %187 = arith.addf %185, %186 : vector<2x128xf32>
    %188 = vector.extract_strided_slice %187 {offsets = [0, 0], sizes = [2, 32], strides = [1, 1]} : vector<2x128xf32> to vector<2x32xf32>
    %cst_65 = arith.constant 0.000000e+00 : f32
    %189 = vector.broadcast %cst_65 : f32 to vector<2x32xf32>
    %190 = arith.subf %189, %188 : vector<2x32xf32>
    %191 = math.exp %190 : vector<2x32xf32>
    %cst_66 = arith.constant 1.000000e+00 : f32
    %192 = vector.broadcast %cst_66 : f32 to vector<2x32xf32>
    %193 = arith.addf %192, %191 : vector<2x32xf32>
    %cst_67 = arith.constant 1.000000e+00 : f32
    %194 = vector.broadcast %cst_67 : f32 to vector<2x32xf32>
    %195 = arith.divf %194, %193 : vector<2x32xf32>
    %196 = vector.extract_strided_slice %187 {offsets = [0, 32], sizes = [2, 32], strides = [1, 1]} : vector<2x128xf32> to vector<2x32xf32>
    %cst_68 = arith.constant 0.000000e+00 : f32
    %197 = vector.broadcast %cst_68 : f32 to vector<2x32xf32>
    %198 = arith.subf %197, %196 : vector<2x32xf32>
    %199 = math.exp %198 : vector<2x32xf32>
    %cst_69 = arith.constant 1.000000e+00 : f32
    %200 = vector.broadcast %cst_69 : f32 to vector<2x32xf32>
    %201 = arith.addf %200, %199 : vector<2x32xf32>
    %cst_70 = arith.constant 1.000000e+00 : f32
    %202 = vector.broadcast %cst_70 : f32 to vector<2x32xf32>
    %203 = arith.divf %202, %201 : vector<2x32xf32>
    %204 = vector.extract_strided_slice %187 {offsets = [0, 64], sizes = [2, 32], strides = [1, 1]} : vector<2x128xf32> to vector<2x32xf32>
    %205 = math.tanh %204 : vector<2x32xf32>
    %206 = vector.extract_strided_slice %187 {offsets = [0, 96], sizes = [2, 32], strides = [1, 1]} : vector<2x128xf32> to vector<2x32xf32>
    %cst_71 = arith.constant 0.000000e+00 : f32
    %207 = vector.broadcast %cst_71 : f32 to vector<2x32xf32>
    %208 = arith.subf %207, %206 : vector<2x32xf32>
    %209 = math.exp %208 : vector<2x32xf32>
    %cst_72 = arith.constant 1.000000e+00 : f32
    %210 = vector.broadcast %cst_72 : f32 to vector<2x32xf32>
    %211 = arith.addf %210, %209 : vector<2x32xf32>
    %cst_73 = arith.constant 1.000000e+00 : f32
    %212 = vector.broadcast %cst_73 : f32 to vector<2x32xf32>
    %213 = arith.divf %212, %211 : vector<2x32xf32>
    %214 = arith.mulf %203, %131 : vector<2x32xf32>
    %215 = arith.mulf %195, %205 : vector<2x32xf32>
    %216 = arith.addf %214, %215 : vector<2x32xf32>
    %217 = math.tanh %216 : vector<2x32xf32>
    %218 = arith.mulf %213, %217 : vector<2x32xf32>
    %219 = tpu.concatenate %218, %168 in 1 : vector<2x32xf32>, vector<2x32xf32> -> vector<2x64xf32>
    %cst_74 = arith.constant dense<0.000000e+00> : vector<2x128xf32>
    %220 = tpu.matmul %219, %7, %cst_74 {dimension_numbers = #tpu.dot_dimension_numbers<[1], [0], [0], [1], [0, 0, 1, 1], [], []>, precision = #tpu.contract_precision<fp32>} : vector<2x64xf32>, vector<64x128xf32>, vector<2x128xf32> -> vector<2x128xf32>
    %221 = vector.broadcast %8 : vector<1x128xf32> to vector<2x128xf32>
    %222 = arith.addf %220, %221 : vector<2x128xf32>
    %223 = vector.extract_strided_slice %222 {offsets = [0, 0], sizes = [2, 32], strides = [1, 1]} : vector<2x128xf32> to vector<2x32xf32>
    %cst_75 = arith.constant 0.000000e+00 : f32
    %224 = vector.broadcast %cst_75 : f32 to vector<2x32xf32>
    %225 = arith.subf %224, %223 : vector<2x32xf32>
    %226 = math.exp %225 : vector<2x32xf32>
    %cst_76 = arith.constant 1.000000e+00 : f32
    %227 = vector.broadcast %cst_76 : f32 to vector<2x32xf32>
    %228 = arith.addf %227, %226 : vector<2x32xf32>
    %cst_77 = arith.constant 1.000000e+00 : f32
    %229 = vector.broadcast %cst_77 : f32 to vector<2x32xf32>
    %230 = arith.divf %229, %228 : vector<2x32xf32>
    %231 = vector.extract_strided_slice %222 {offsets = [0, 32], sizes = [2, 32], strides = [1, 1]} : vector<2x128xf32> to vector<2x32xf32>
    %cst_78 = arith.constant 0.000000e+00 : f32
    %232 = vector.broadcast %cst_78 : f32 to vector<2x32xf32>
    %233 = arith.subf %232, %231 : vector<2x32xf32>
    %234 = math.exp %233 : vector<2x32xf32>
    %cst_79 = arith.constant 1.000000e+00 : f32
    %235 = vector.broadcast %cst_79 : f32 to vector<2x32xf32>
    %236 = arith.addf %235, %234 : vector<2x32xf32>
    %cst_80 = arith.constant 1.000000e+00 : f32
    %237 = vector.broadcast %cst_80 : f32 to vector<2x32xf32>
    %238 = arith.divf %237, %236 : vector<2x32xf32>
    %239 = vector.extract_strided_slice %222 {offsets = [0, 64], sizes = [2, 32], strides = [1, 1]} : vector<2x128xf32> to vector<2x32xf32>
    %240 = math.tanh %239 : vector<2x32xf32>
    %241 = vector.extract_strided_slice %222 {offsets = [0, 96], sizes = [2, 32], strides = [1, 1]} : vector<2x128xf32> to vector<2x32xf32>
    %cst_81 = arith.constant 0.000000e+00 : f32
    %242 = vector.broadcast %cst_81 : f32 to vector<2x32xf32>
    %243 = arith.subf %242, %241 : vector<2x32xf32>
    %244 = math.exp %243 : vector<2x32xf32>
    %cst_82 = arith.constant 1.000000e+00 : f32
    %245 = vector.broadcast %cst_82 : f32 to vector<2x32xf32>
    %246 = arith.addf %245, %244 : vector<2x32xf32>
    %cst_83 = arith.constant 1.000000e+00 : f32
    %247 = vector.broadcast %cst_83 : f32 to vector<2x32xf32>
    %248 = arith.divf %247, %246 : vector<2x32xf32>
    %249 = arith.mulf %238, %166 : vector<2x32xf32>
    %250 = arith.mulf %230, %240 : vector<2x32xf32>
    %251 = arith.addf %249, %250 : vector<2x32xf32>
    %252 = math.tanh %251 : vector<2x32xf32>
    %253 = arith.mulf %248, %252 : vector<2x32xf32>
    %254 = vector.broadcast %9 : vector<1x32xf32> to vector<2x32xf32>
    %255 = arith.mulf %253, %254 : vector<2x32xf32>
    %cst_84 = arith.constant dense<0.000000e+00> : vector<2xf32>
    %256 = vector.multi_reduction <add>, %255, %cst_84 [1] : vector<2x32xf32> to vector<2xf32>
    %257 = vector.shape_cast %256 : vector<2xf32> to vector<2x1xf32>
    %cst_85 = arith.constant dense<0xFF800000> : vector<1xf32>
    %258 = vector.multi_reduction <maximumf>, %257, %cst_85 [0] : vector<2x1xf32> to vector<1xf32>
    %259 = vector.shape_cast %258 : vector<1xf32> to vector<1x1xf32>
    %260 = vector.broadcast %259 : vector<1x1xf32> to vector<2x1xf32>
    %261 = arith.subf %257, %260 : vector<2x1xf32>
    %262 = math.exp %261 : vector<2x1xf32>
    %cst_86 = arith.constant dense<0.000000e+00> : vector<1xf32>
    %263 = vector.multi_reduction <add>, %262, %cst_86 [0] : vector<2x1xf32> to vector<1xf32>
    %264 = vector.shape_cast %263 : vector<1xf32> to vector<1x1xf32>
    %265 = vector.broadcast %264 : vector<1x1xf32> to vector<2x1xf32>
    %266 = arith.divf %262, %265 : vector<2x1xf32>
    %267 = vector.broadcast %266 : vector<2x1xf32> to vector<2x32xf32>
    %268 = arith.mulf %253, %267 : vector<2x32xf32>
    %269 = arith.addf %184, %268 : vector<2x32xf32>
    %270 = vector.extract_strided_slice %5 {offsets = [6, 0], sizes = [2, 128], strides = [1, 1]} : vector<16x128xf32> to vector<2x128xf32>
    %cst_87 = arith.constant dense<0.000000e+00> : vector<2x128xf32>
    %271 = tpu.matmul %218, %6, %cst_87 {dimension_numbers = #tpu.dot_dimension_numbers<[1], [0], [0], [1], [0, 0, 1, 1], [], []>, precision = #tpu.contract_precision<fp32>} : vector<2x32xf32>, vector<32x128xf32>, vector<2x128xf32> -> vector<2x128xf32>
    %272 = arith.addf %270, %271 : vector<2x128xf32>
    %273 = vector.extract_strided_slice %272 {offsets = [0, 0], sizes = [2, 32], strides = [1, 1]} : vector<2x128xf32> to vector<2x32xf32>
    %cst_88 = arith.constant 0.000000e+00 : f32
    %274 = vector.broadcast %cst_88 : f32 to vector<2x32xf32>
    %275 = arith.subf %274, %273 : vector<2x32xf32>
    %276 = math.exp %275 : vector<2x32xf32>
    %cst_89 = arith.constant 1.000000e+00 : f32
    %277 = vector.broadcast %cst_89 : f32 to vector<2x32xf32>
    %278 = arith.addf %277, %276 : vector<2x32xf32>
    %cst_90 = arith.constant 1.000000e+00 : f32
    %279 = vector.broadcast %cst_90 : f32 to vector<2x32xf32>
    %280 = arith.divf %279, %278 : vector<2x32xf32>
    %281 = vector.extract_strided_slice %272 {offsets = [0, 32], sizes = [2, 32], strides = [1, 1]} : vector<2x128xf32> to vector<2x32xf32>
    %cst_91 = arith.constant 0.000000e+00 : f32
    %282 = vector.broadcast %cst_91 : f32 to vector<2x32xf32>
    %283 = arith.subf %282, %281 : vector<2x32xf32>
    %284 = math.exp %283 : vector<2x32xf32>
    %cst_92 = arith.constant 1.000000e+00 : f32
    %285 = vector.broadcast %cst_92 : f32 to vector<2x32xf32>
    %286 = arith.addf %285, %284 : vector<2x32xf32>
    %cst_93 = arith.constant 1.000000e+00 : f32
    %287 = vector.broadcast %cst_93 : f32 to vector<2x32xf32>
    %288 = arith.divf %287, %286 : vector<2x32xf32>
    %289 = vector.extract_strided_slice %272 {offsets = [0, 64], sizes = [2, 32], strides = [1, 1]} : vector<2x128xf32> to vector<2x32xf32>
    %290 = math.tanh %289 : vector<2x32xf32>
    %291 = vector.extract_strided_slice %272 {offsets = [0, 96], sizes = [2, 32], strides = [1, 1]} : vector<2x128xf32> to vector<2x32xf32>
    %cst_94 = arith.constant 0.000000e+00 : f32
    %292 = vector.broadcast %cst_94 : f32 to vector<2x32xf32>
    %293 = arith.subf %292, %291 : vector<2x32xf32>
    %294 = math.exp %293 : vector<2x32xf32>
    %cst_95 = arith.constant 1.000000e+00 : f32
    %295 = vector.broadcast %cst_95 : f32 to vector<2x32xf32>
    %296 = arith.addf %295, %294 : vector<2x32xf32>
    %cst_96 = arith.constant 1.000000e+00 : f32
    %297 = vector.broadcast %cst_96 : f32 to vector<2x32xf32>
    %298 = arith.divf %297, %296 : vector<2x32xf32>
    %299 = arith.mulf %288, %216 : vector<2x32xf32>
    %300 = arith.mulf %280, %290 : vector<2x32xf32>
    %301 = arith.addf %299, %300 : vector<2x32xf32>
    %302 = math.tanh %301 : vector<2x32xf32>
    %303 = arith.mulf %298, %302 : vector<2x32xf32>
    %304 = tpu.concatenate %303, %253 in 1 : vector<2x32xf32>, vector<2x32xf32> -> vector<2x64xf32>
    %cst_97 = arith.constant dense<0.000000e+00> : vector<2x128xf32>
    %305 = tpu.matmul %304, %7, %cst_97 {dimension_numbers = #tpu.dot_dimension_numbers<[1], [0], [0], [1], [0, 0, 1, 1], [], []>, precision = #tpu.contract_precision<fp32>} : vector<2x64xf32>, vector<64x128xf32>, vector<2x128xf32> -> vector<2x128xf32>
    %306 = vector.broadcast %8 : vector<1x128xf32> to vector<2x128xf32>
    %307 = arith.addf %305, %306 : vector<2x128xf32>
    %308 = vector.extract_strided_slice %307 {offsets = [0, 0], sizes = [2, 32], strides = [1, 1]} : vector<2x128xf32> to vector<2x32xf32>
    %cst_98 = arith.constant 0.000000e+00 : f32
    %309 = vector.broadcast %cst_98 : f32 to vector<2x32xf32>
    %310 = arith.subf %309, %308 : vector<2x32xf32>
    %311 = math.exp %310 : vector<2x32xf32>
    %cst_99 = arith.constant 1.000000e+00 : f32
    %312 = vector.broadcast %cst_99 : f32 to vector<2x32xf32>
    %313 = arith.addf %312, %311 : vector<2x32xf32>
    %cst_100 = arith.constant 1.000000e+00 : f32
    %314 = vector.broadcast %cst_100 : f32 to vector<2x32xf32>
    %315 = arith.divf %314, %313 : vector<2x32xf32>
    %316 = vector.extract_strided_slice %307 {offsets = [0, 32], sizes = [2, 32], strides = [1, 1]} : vector<2x128xf32> to vector<2x32xf32>
    %cst_101 = arith.constant 0.000000e+00 : f32
    %317 = vector.broadcast %cst_101 : f32 to vector<2x32xf32>
    %318 = arith.subf %317, %316 : vector<2x32xf32>
    %319 = math.exp %318 : vector<2x32xf32>
    %cst_102 = arith.constant 1.000000e+00 : f32
    %320 = vector.broadcast %cst_102 : f32 to vector<2x32xf32>
    %321 = arith.addf %320, %319 : vector<2x32xf32>
    %cst_103 = arith.constant 1.000000e+00 : f32
    %322 = vector.broadcast %cst_103 : f32 to vector<2x32xf32>
    %323 = arith.divf %322, %321 : vector<2x32xf32>
    %324 = vector.extract_strided_slice %307 {offsets = [0, 64], sizes = [2, 32], strides = [1, 1]} : vector<2x128xf32> to vector<2x32xf32>
    %325 = math.tanh %324 : vector<2x32xf32>
    %326 = vector.extract_strided_slice %307 {offsets = [0, 96], sizes = [2, 32], strides = [1, 1]} : vector<2x128xf32> to vector<2x32xf32>
    %cst_104 = arith.constant 0.000000e+00 : f32
    %327 = vector.broadcast %cst_104 : f32 to vector<2x32xf32>
    %328 = arith.subf %327, %326 : vector<2x32xf32>
    %329 = math.exp %328 : vector<2x32xf32>
    %cst_105 = arith.constant 1.000000e+00 : f32
    %330 = vector.broadcast %cst_105 : f32 to vector<2x32xf32>
    %331 = arith.addf %330, %329 : vector<2x32xf32>
    %cst_106 = arith.constant 1.000000e+00 : f32
    %332 = vector.broadcast %cst_106 : f32 to vector<2x32xf32>
    %333 = arith.divf %332, %331 : vector<2x32xf32>
    %334 = arith.mulf %323, %251 : vector<2x32xf32>
    %335 = arith.mulf %315, %325 : vector<2x32xf32>
    %336 = arith.addf %334, %335 : vector<2x32xf32>
    %337 = math.tanh %336 : vector<2x32xf32>
    %338 = arith.mulf %333, %337 : vector<2x32xf32>
    %339 = vector.broadcast %9 : vector<1x32xf32> to vector<2x32xf32>
    %340 = arith.mulf %338, %339 : vector<2x32xf32>
    %cst_107 = arith.constant dense<0.000000e+00> : vector<2xf32>
    %341 = vector.multi_reduction <add>, %340, %cst_107 [1] : vector<2x32xf32> to vector<2xf32>
    %342 = vector.shape_cast %341 : vector<2xf32> to vector<2x1xf32>
    %cst_108 = arith.constant dense<0xFF800000> : vector<1xf32>
    %343 = vector.multi_reduction <maximumf>, %342, %cst_108 [0] : vector<2x1xf32> to vector<1xf32>
    %344 = vector.shape_cast %343 : vector<1xf32> to vector<1x1xf32>
    %345 = vector.broadcast %344 : vector<1x1xf32> to vector<2x1xf32>
    %346 = arith.subf %342, %345 : vector<2x1xf32>
    %347 = math.exp %346 : vector<2x1xf32>
    %cst_109 = arith.constant dense<0.000000e+00> : vector<1xf32>
    %348 = vector.multi_reduction <add>, %347, %cst_109 [0] : vector<2x1xf32> to vector<1xf32>
    %349 = vector.shape_cast %348 : vector<1xf32> to vector<1x1xf32>
    %350 = vector.broadcast %349 : vector<1x1xf32> to vector<2x1xf32>
    %351 = arith.divf %347, %350 : vector<2x1xf32>
    %352 = vector.broadcast %351 : vector<2x1xf32> to vector<2x32xf32>
    %353 = arith.mulf %338, %352 : vector<2x32xf32>
    %354 = arith.addf %269, %353 : vector<2x32xf32>
    %355 = vector.extract_strided_slice %5 {offsets = [8, 0], sizes = [2, 128], strides = [1, 1]} : vector<16x128xf32> to vector<2x128xf32>
    %cst_110 = arith.constant dense<0.000000e+00> : vector<2x128xf32>
    %356 = tpu.matmul %303, %6, %cst_110 {dimension_numbers = #tpu.dot_dimension_numbers<[1], [0], [0], [1], [0, 0, 1, 1], [], []>, precision = #tpu.contract_precision<fp32>} : vector<2x32xf32>, vector<32x128xf32>, vector<2x128xf32> -> vector<2x128xf32>
    %357 = arith.addf %355, %356 : vector<2x128xf32>
    %358 = vector.extract_strided_slice %357 {offsets = [0, 0], sizes = [2, 32], strides = [1, 1]} : vector<2x128xf32> to vector<2x32xf32>
    %cst_111 = arith.constant 0.000000e+00 : f32
    %359 = vector.broadcast %cst_111 : f32 to vector<2x32xf32>
    %360 = arith.subf %359, %358 : vector<2x32xf32>
    %361 = math.exp %360 : vector<2x32xf32>
    %cst_112 = arith.constant 1.000000e+00 : f32
    %362 = vector.broadcast %cst_112 : f32 to vector<2x32xf32>
    %363 = arith.addf %362, %361 : vector<2x32xf32>
    %cst_113 = arith.constant 1.000000e+00 : f32
    %364 = vector.broadcast %cst_113 : f32 to vector<2x32xf32>
    %365 = arith.divf %364, %363 : vector<2x32xf32>
    %366 = vector.extract_strided_slice %357 {offsets = [0, 32], sizes = [2, 32], strides = [1, 1]} : vector<2x128xf32> to vector<2x32xf32>
    %cst_114 = arith.constant 0.000000e+00 : f32
    %367 = vector.broadcast %cst_114 : f32 to vector<2x32xf32>
    %368 = arith.subf %367, %366 : vector<2x32xf32>
    %369 = math.exp %368 : vector<2x32xf32>
    %cst_115 = arith.constant 1.000000e+00 : f32
    %370 = vector.broadcast %cst_115 : f32 to vector<2x32xf32>
    %371 = arith.addf %370, %369 : vector<2x32xf32>
    %cst_116 = arith.constant 1.000000e+00 : f32
    %372 = vector.broadcast %cst_116 : f32 to vector<2x32xf32>
    %373 = arith.divf %372, %371 : vector<2x32xf32>
    %374 = vector.extract_strided_slice %357 {offsets = [0, 64], sizes = [2, 32], strides = [1, 1]} : vector<2x128xf32> to vector<2x32xf32>
    %375 = math.tanh %374 : vector<2x32xf32>
    %376 = vector.extract_strided_slice %357 {offsets = [0, 96], sizes = [2, 32], strides = [1, 1]} : vector<2x128xf32> to vector<2x32xf32>
    %cst_117 = arith.constant 0.000000e+00 : f32
    %377 = vector.broadcast %cst_117 : f32 to vector<2x32xf32>
    %378 = arith.subf %377, %376 : vector<2x32xf32>
    %379 = math.exp %378 : vector<2x32xf32>
    %cst_118 = arith.constant 1.000000e+00 : f32
    %380 = vector.broadcast %cst_118 : f32 to vector<2x32xf32>
    %381 = arith.addf %380, %379 : vector<2x32xf32>
    %cst_119 = arith.constant 1.000000e+00 : f32
    %382 = vector.broadcast %cst_119 : f32 to vector<2x32xf32>
    %383 = arith.divf %382, %381 : vector<2x32xf32>
    %384 = arith.mulf %373, %301 : vector<2x32xf32>
    %385 = arith.mulf %365, %375 : vector<2x32xf32>
    %386 = arith.addf %384, %385 : vector<2x32xf32>
    %387 = math.tanh %386 : vector<2x32xf32>
    %388 = arith.mulf %383, %387 : vector<2x32xf32>
    %389 = tpu.concatenate %388, %338 in 1 : vector<2x32xf32>, vector<2x32xf32> -> vector<2x64xf32>
    %cst_120 = arith.constant dense<0.000000e+00> : vector<2x128xf32>
    %390 = tpu.matmul %389, %7, %cst_120 {dimension_numbers = #tpu.dot_dimension_numbers<[1], [0], [0], [1], [0, 0, 1, 1], [], []>, precision = #tpu.contract_precision<fp32>} : vector<2x64xf32>, vector<64x128xf32>, vector<2x128xf32> -> vector<2x128xf32>
    %391 = vector.broadcast %8 : vector<1x128xf32> to vector<2x128xf32>
    %392 = arith.addf %390, %391 : vector<2x128xf32>
    %393 = vector.extract_strided_slice %392 {offsets = [0, 0], sizes = [2, 32], strides = [1, 1]} : vector<2x128xf32> to vector<2x32xf32>
    %cst_121 = arith.constant 0.000000e+00 : f32
    %394 = vector.broadcast %cst_121 : f32 to vector<2x32xf32>
    %395 = arith.subf %394, %393 : vector<2x32xf32>
    %396 = math.exp %395 : vector<2x32xf32>
    %cst_122 = arith.constant 1.000000e+00 : f32
    %397 = vector.broadcast %cst_122 : f32 to vector<2x32xf32>
    %398 = arith.addf %397, %396 : vector<2x32xf32>
    %cst_123 = arith.constant 1.000000e+00 : f32
    %399 = vector.broadcast %cst_123 : f32 to vector<2x32xf32>
    %400 = arith.divf %399, %398 : vector<2x32xf32>
    %401 = vector.extract_strided_slice %392 {offsets = [0, 32], sizes = [2, 32], strides = [1, 1]} : vector<2x128xf32> to vector<2x32xf32>
    %cst_124 = arith.constant 0.000000e+00 : f32
    %402 = vector.broadcast %cst_124 : f32 to vector<2x32xf32>
    %403 = arith.subf %402, %401 : vector<2x32xf32>
    %404 = math.exp %403 : vector<2x32xf32>
    %cst_125 = arith.constant 1.000000e+00 : f32
    %405 = vector.broadcast %cst_125 : f32 to vector<2x32xf32>
    %406 = arith.addf %405, %404 : vector<2x32xf32>
    %cst_126 = arith.constant 1.000000e+00 : f32
    %407 = vector.broadcast %cst_126 : f32 to vector<2x32xf32>
    %408 = arith.divf %407, %406 : vector<2x32xf32>
    %409 = vector.extract_strided_slice %392 {offsets = [0, 64], sizes = [2, 32], strides = [1, 1]} : vector<2x128xf32> to vector<2x32xf32>
    %410 = math.tanh %409 : vector<2x32xf32>
    %411 = vector.extract_strided_slice %392 {offsets = [0, 96], sizes = [2, 32], strides = [1, 1]} : vector<2x128xf32> to vector<2x32xf32>
    %cst_127 = arith.constant 0.000000e+00 : f32
    %412 = vector.broadcast %cst_127 : f32 to vector<2x32xf32>
    %413 = arith.subf %412, %411 : vector<2x32xf32>
    %414 = math.exp %413 : vector<2x32xf32>
    %cst_128 = arith.constant 1.000000e+00 : f32
    %415 = vector.broadcast %cst_128 : f32 to vector<2x32xf32>
    %416 = arith.addf %415, %414 : vector<2x32xf32>
    %cst_129 = arith.constant 1.000000e+00 : f32
    %417 = vector.broadcast %cst_129 : f32 to vector<2x32xf32>
    %418 = arith.divf %417, %416 : vector<2x32xf32>
    %419 = arith.mulf %408, %336 : vector<2x32xf32>
    %420 = arith.mulf %400, %410 : vector<2x32xf32>
    %421 = arith.addf %419, %420 : vector<2x32xf32>
    %422 = math.tanh %421 : vector<2x32xf32>
    %423 = arith.mulf %418, %422 : vector<2x32xf32>
    %424 = vector.broadcast %9 : vector<1x32xf32> to vector<2x32xf32>
    %425 = arith.mulf %423, %424 : vector<2x32xf32>
    %cst_130 = arith.constant dense<0.000000e+00> : vector<2xf32>
    %426 = vector.multi_reduction <add>, %425, %cst_130 [1] : vector<2x32xf32> to vector<2xf32>
    %427 = vector.shape_cast %426 : vector<2xf32> to vector<2x1xf32>
    %cst_131 = arith.constant dense<0xFF800000> : vector<1xf32>
    %428 = vector.multi_reduction <maximumf>, %427, %cst_131 [0] : vector<2x1xf32> to vector<1xf32>
    %429 = vector.shape_cast %428 : vector<1xf32> to vector<1x1xf32>
    %430 = vector.broadcast %429 : vector<1x1xf32> to vector<2x1xf32>
    %431 = arith.subf %427, %430 : vector<2x1xf32>
    %432 = math.exp %431 : vector<2x1xf32>
    %cst_132 = arith.constant dense<0.000000e+00> : vector<1xf32>
    %433 = vector.multi_reduction <add>, %432, %cst_132 [0] : vector<2x1xf32> to vector<1xf32>
    %434 = vector.shape_cast %433 : vector<1xf32> to vector<1x1xf32>
    %435 = vector.broadcast %434 : vector<1x1xf32> to vector<2x1xf32>
    %436 = arith.divf %432, %435 : vector<2x1xf32>
    %437 = vector.broadcast %436 : vector<2x1xf32> to vector<2x32xf32>
    %438 = arith.mulf %423, %437 : vector<2x32xf32>
    %439 = arith.addf %354, %438 : vector<2x32xf32>
    %440 = vector.extract_strided_slice %5 {offsets = [10, 0], sizes = [2, 128], strides = [1, 1]} : vector<16x128xf32> to vector<2x128xf32>
    %cst_133 = arith.constant dense<0.000000e+00> : vector<2x128xf32>
    %441 = tpu.matmul %388, %6, %cst_133 {dimension_numbers = #tpu.dot_dimension_numbers<[1], [0], [0], [1], [0, 0, 1, 1], [], []>, precision = #tpu.contract_precision<fp32>} : vector<2x32xf32>, vector<32x128xf32>, vector<2x128xf32> -> vector<2x128xf32>
    %442 = arith.addf %440, %441 : vector<2x128xf32>
    %443 = vector.extract_strided_slice %442 {offsets = [0, 0], sizes = [2, 32], strides = [1, 1]} : vector<2x128xf32> to vector<2x32xf32>
    %cst_134 = arith.constant 0.000000e+00 : f32
    %444 = vector.broadcast %cst_134 : f32 to vector<2x32xf32>
    %445 = arith.subf %444, %443 : vector<2x32xf32>
    %446 = math.exp %445 : vector<2x32xf32>
    %cst_135 = arith.constant 1.000000e+00 : f32
    %447 = vector.broadcast %cst_135 : f32 to vector<2x32xf32>
    %448 = arith.addf %447, %446 : vector<2x32xf32>
    %cst_136 = arith.constant 1.000000e+00 : f32
    %449 = vector.broadcast %cst_136 : f32 to vector<2x32xf32>
    %450 = arith.divf %449, %448 : vector<2x32xf32>
    %451 = vector.extract_strided_slice %442 {offsets = [0, 32], sizes = [2, 32], strides = [1, 1]} : vector<2x128xf32> to vector<2x32xf32>
    %cst_137 = arith.constant 0.000000e+00 : f32
    %452 = vector.broadcast %cst_137 : f32 to vector<2x32xf32>
    %453 = arith.subf %452, %451 : vector<2x32xf32>
    %454 = math.exp %453 : vector<2x32xf32>
    %cst_138 = arith.constant 1.000000e+00 : f32
    %455 = vector.broadcast %cst_138 : f32 to vector<2x32xf32>
    %456 = arith.addf %455, %454 : vector<2x32xf32>
    %cst_139 = arith.constant 1.000000e+00 : f32
    %457 = vector.broadcast %cst_139 : f32 to vector<2x32xf32>
    %458 = arith.divf %457, %456 : vector<2x32xf32>
    %459 = vector.extract_strided_slice %442 {offsets = [0, 64], sizes = [2, 32], strides = [1, 1]} : vector<2x128xf32> to vector<2x32xf32>
    %460 = math.tanh %459 : vector<2x32xf32>
    %461 = vector.extract_strided_slice %442 {offsets = [0, 96], sizes = [2, 32], strides = [1, 1]} : vector<2x128xf32> to vector<2x32xf32>
    %cst_140 = arith.constant 0.000000e+00 : f32
    %462 = vector.broadcast %cst_140 : f32 to vector<2x32xf32>
    %463 = arith.subf %462, %461 : vector<2x32xf32>
    %464 = math.exp %463 : vector<2x32xf32>
    %cst_141 = arith.constant 1.000000e+00 : f32
    %465 = vector.broadcast %cst_141 : f32 to vector<2x32xf32>
    %466 = arith.addf %465, %464 : vector<2x32xf32>
    %cst_142 = arith.constant 1.000000e+00 : f32
    %467 = vector.broadcast %cst_142 : f32 to vector<2x32xf32>
    %468 = arith.divf %467, %466 : vector<2x32xf32>
    %469 = arith.mulf %458, %386 : vector<2x32xf32>
    %470 = arith.mulf %450, %460 : vector<2x32xf32>
    %471 = arith.addf %469, %470 : vector<2x32xf32>
    %472 = math.tanh %471 : vector<2x32xf32>
    %473 = arith.mulf %468, %472 : vector<2x32xf32>
    %474 = tpu.concatenate %473, %423 in 1 : vector<2x32xf32>, vector<2x32xf32> -> vector<2x64xf32>
    %cst_143 = arith.constant dense<0.000000e+00> : vector<2x128xf32>
    %475 = tpu.matmul %474, %7, %cst_143 {dimension_numbers = #tpu.dot_dimension_numbers<[1], [0], [0], [1], [0, 0, 1, 1], [], []>, precision = #tpu.contract_precision<fp32>} : vector<2x64xf32>, vector<64x128xf32>, vector<2x128xf32> -> vector<2x128xf32>
    %476 = vector.broadcast %8 : vector<1x128xf32> to vector<2x128xf32>
    %477 = arith.addf %475, %476 : vector<2x128xf32>
    %478 = vector.extract_strided_slice %477 {offsets = [0, 0], sizes = [2, 32], strides = [1, 1]} : vector<2x128xf32> to vector<2x32xf32>
    %cst_144 = arith.constant 0.000000e+00 : f32
    %479 = vector.broadcast %cst_144 : f32 to vector<2x32xf32>
    %480 = arith.subf %479, %478 : vector<2x32xf32>
    %481 = math.exp %480 : vector<2x32xf32>
    %cst_145 = arith.constant 1.000000e+00 : f32
    %482 = vector.broadcast %cst_145 : f32 to vector<2x32xf32>
    %483 = arith.addf %482, %481 : vector<2x32xf32>
    %cst_146 = arith.constant 1.000000e+00 : f32
    %484 = vector.broadcast %cst_146 : f32 to vector<2x32xf32>
    %485 = arith.divf %484, %483 : vector<2x32xf32>
    %486 = vector.extract_strided_slice %477 {offsets = [0, 32], sizes = [2, 32], strides = [1, 1]} : vector<2x128xf32> to vector<2x32xf32>
    %cst_147 = arith.constant 0.000000e+00 : f32
    %487 = vector.broadcast %cst_147 : f32 to vector<2x32xf32>
    %488 = arith.subf %487, %486 : vector<2x32xf32>
    %489 = math.exp %488 : vector<2x32xf32>
    %cst_148 = arith.constant 1.000000e+00 : f32
    %490 = vector.broadcast %cst_148 : f32 to vector<2x32xf32>
    %491 = arith.addf %490, %489 : vector<2x32xf32>
    %cst_149 = arith.constant 1.000000e+00 : f32
    %492 = vector.broadcast %cst_149 : f32 to vector<2x32xf32>
    %493 = arith.divf %492, %491 : vector<2x32xf32>
    %494 = vector.extract_strided_slice %477 {offsets = [0, 64], sizes = [2, 32], strides = [1, 1]} : vector<2x128xf32> to vector<2x32xf32>
    %495 = math.tanh %494 : vector<2x32xf32>
    %496 = vector.extract_strided_slice %477 {offsets = [0, 96], sizes = [2, 32], strides = [1, 1]} : vector<2x128xf32> to vector<2x32xf32>
    %cst_150 = arith.constant 0.000000e+00 : f32
    %497 = vector.broadcast %cst_150 : f32 to vector<2x32xf32>
    %498 = arith.subf %497, %496 : vector<2x32xf32>
    %499 = math.exp %498 : vector<2x32xf32>
    %cst_151 = arith.constant 1.000000e+00 : f32
    %500 = vector.broadcast %cst_151 : f32 to vector<2x32xf32>
    %501 = arith.addf %500, %499 : vector<2x32xf32>
    %cst_152 = arith.constant 1.000000e+00 : f32
    %502 = vector.broadcast %cst_152 : f32 to vector<2x32xf32>
    %503 = arith.divf %502, %501 : vector<2x32xf32>
    %504 = arith.mulf %493, %421 : vector<2x32xf32>
    %505 = arith.mulf %485, %495 : vector<2x32xf32>
    %506 = arith.addf %504, %505 : vector<2x32xf32>
    %507 = math.tanh %506 : vector<2x32xf32>
    %508 = arith.mulf %503, %507 : vector<2x32xf32>
    %509 = vector.broadcast %9 : vector<1x32xf32> to vector<2x32xf32>
    %510 = arith.mulf %508, %509 : vector<2x32xf32>
    %cst_153 = arith.constant dense<0.000000e+00> : vector<2xf32>
    %511 = vector.multi_reduction <add>, %510, %cst_153 [1] : vector<2x32xf32> to vector<2xf32>
    %512 = vector.shape_cast %511 : vector<2xf32> to vector<2x1xf32>
    %cst_154 = arith.constant dense<0xFF800000> : vector<1xf32>
    %513 = vector.multi_reduction <maximumf>, %512, %cst_154 [0] : vector<2x1xf32> to vector<1xf32>
    %514 = vector.shape_cast %513 : vector<1xf32> to vector<1x1xf32>
    %515 = vector.broadcast %514 : vector<1x1xf32> to vector<2x1xf32>
    %516 = arith.subf %512, %515 : vector<2x1xf32>
    %517 = math.exp %516 : vector<2x1xf32>
    %cst_155 = arith.constant dense<0.000000e+00> : vector<1xf32>
    %518 = vector.multi_reduction <add>, %517, %cst_155 [0] : vector<2x1xf32> to vector<1xf32>
    %519 = vector.shape_cast %518 : vector<1xf32> to vector<1x1xf32>
    %520 = vector.broadcast %519 : vector<1x1xf32> to vector<2x1xf32>
    %521 = arith.divf %517, %520 : vector<2x1xf32>
    %522 = vector.broadcast %521 : vector<2x1xf32> to vector<2x32xf32>
    %523 = arith.mulf %508, %522 : vector<2x32xf32>
    %524 = arith.addf %439, %523 : vector<2x32xf32>
    %525 = vector.extract_strided_slice %5 {offsets = [12, 0], sizes = [2, 128], strides = [1, 1]} : vector<16x128xf32> to vector<2x128xf32>
    %cst_156 = arith.constant dense<0.000000e+00> : vector<2x128xf32>
    %526 = tpu.matmul %473, %6, %cst_156 {dimension_numbers = #tpu.dot_dimension_numbers<[1], [0], [0], [1], [0, 0, 1, 1], [], []>, precision = #tpu.contract_precision<fp32>} : vector<2x32xf32>, vector<32x128xf32>, vector<2x128xf32> -> vector<2x128xf32>
    %527 = arith.addf %525, %526 : vector<2x128xf32>
    %528 = vector.extract_strided_slice %527 {offsets = [0, 0], sizes = [2, 32], strides = [1, 1]} : vector<2x128xf32> to vector<2x32xf32>
    %cst_157 = arith.constant 0.000000e+00 : f32
    %529 = vector.broadcast %cst_157 : f32 to vector<2x32xf32>
    %530 = arith.subf %529, %528 : vector<2x32xf32>
    %531 = math.exp %530 : vector<2x32xf32>
    %cst_158 = arith.constant 1.000000e+00 : f32
    %532 = vector.broadcast %cst_158 : f32 to vector<2x32xf32>
    %533 = arith.addf %532, %531 : vector<2x32xf32>
    %cst_159 = arith.constant 1.000000e+00 : f32
    %534 = vector.broadcast %cst_159 : f32 to vector<2x32xf32>
    %535 = arith.divf %534, %533 : vector<2x32xf32>
    %536 = vector.extract_strided_slice %527 {offsets = [0, 32], sizes = [2, 32], strides = [1, 1]} : vector<2x128xf32> to vector<2x32xf32>
    %cst_160 = arith.constant 0.000000e+00 : f32
    %537 = vector.broadcast %cst_160 : f32 to vector<2x32xf32>
    %538 = arith.subf %537, %536 : vector<2x32xf32>
    %539 = math.exp %538 : vector<2x32xf32>
    %cst_161 = arith.constant 1.000000e+00 : f32
    %540 = vector.broadcast %cst_161 : f32 to vector<2x32xf32>
    %541 = arith.addf %540, %539 : vector<2x32xf32>
    %cst_162 = arith.constant 1.000000e+00 : f32
    %542 = vector.broadcast %cst_162 : f32 to vector<2x32xf32>
    %543 = arith.divf %542, %541 : vector<2x32xf32>
    %544 = vector.extract_strided_slice %527 {offsets = [0, 64], sizes = [2, 32], strides = [1, 1]} : vector<2x128xf32> to vector<2x32xf32>
    %545 = math.tanh %544 : vector<2x32xf32>
    %546 = vector.extract_strided_slice %527 {offsets = [0, 96], sizes = [2, 32], strides = [1, 1]} : vector<2x128xf32> to vector<2x32xf32>
    %cst_163 = arith.constant 0.000000e+00 : f32
    %547 = vector.broadcast %cst_163 : f32 to vector<2x32xf32>
    %548 = arith.subf %547, %546 : vector<2x32xf32>
    %549 = math.exp %548 : vector<2x32xf32>
    %cst_164 = arith.constant 1.000000e+00 : f32
    %550 = vector.broadcast %cst_164 : f32 to vector<2x32xf32>
    %551 = arith.addf %550, %549 : vector<2x32xf32>
    %cst_165 = arith.constant 1.000000e+00 : f32
    %552 = vector.broadcast %cst_165 : f32 to vector<2x32xf32>
    %553 = arith.divf %552, %551 : vector<2x32xf32>
    %554 = arith.mulf %543, %471 : vector<2x32xf32>
    %555 = arith.mulf %535, %545 : vector<2x32xf32>
    %556 = arith.addf %554, %555 : vector<2x32xf32>
    %557 = math.tanh %556 : vector<2x32xf32>
    %558 = arith.mulf %553, %557 : vector<2x32xf32>
    %559 = tpu.concatenate %558, %508 in 1 : vector<2x32xf32>, vector<2x32xf32> -> vector<2x64xf32>
    %cst_166 = arith.constant dense<0.000000e+00> : vector<2x128xf32>
    %560 = tpu.matmul %559, %7, %cst_166 {dimension_numbers = #tpu.dot_dimension_numbers<[1], [0], [0], [1], [0, 0, 1, 1], [], []>, precision = #tpu.contract_precision<fp32>} : vector<2x64xf32>, vector<64x128xf32>, vector<2x128xf32> -> vector<2x128xf32>
    %561 = vector.broadcast %8 : vector<1x128xf32> to vector<2x128xf32>
    %562 = arith.addf %560, %561 : vector<2x128xf32>
    %563 = vector.extract_strided_slice %562 {offsets = [0, 0], sizes = [2, 32], strides = [1, 1]} : vector<2x128xf32> to vector<2x32xf32>
    %cst_167 = arith.constant 0.000000e+00 : f32
    %564 = vector.broadcast %cst_167 : f32 to vector<2x32xf32>
    %565 = arith.subf %564, %563 : vector<2x32xf32>
    %566 = math.exp %565 : vector<2x32xf32>
    %cst_168 = arith.constant 1.000000e+00 : f32
    %567 = vector.broadcast %cst_168 : f32 to vector<2x32xf32>
    %568 = arith.addf %567, %566 : vector<2x32xf32>
    %cst_169 = arith.constant 1.000000e+00 : f32
    %569 = vector.broadcast %cst_169 : f32 to vector<2x32xf32>
    %570 = arith.divf %569, %568 : vector<2x32xf32>
    %571 = vector.extract_strided_slice %562 {offsets = [0, 32], sizes = [2, 32], strides = [1, 1]} : vector<2x128xf32> to vector<2x32xf32>
    %cst_170 = arith.constant 0.000000e+00 : f32
    %572 = vector.broadcast %cst_170 : f32 to vector<2x32xf32>
    %573 = arith.subf %572, %571 : vector<2x32xf32>
    %574 = math.exp %573 : vector<2x32xf32>
    %cst_171 = arith.constant 1.000000e+00 : f32
    %575 = vector.broadcast %cst_171 : f32 to vector<2x32xf32>
    %576 = arith.addf %575, %574 : vector<2x32xf32>
    %cst_172 = arith.constant 1.000000e+00 : f32
    %577 = vector.broadcast %cst_172 : f32 to vector<2x32xf32>
    %578 = arith.divf %577, %576 : vector<2x32xf32>
    %579 = vector.extract_strided_slice %562 {offsets = [0, 64], sizes = [2, 32], strides = [1, 1]} : vector<2x128xf32> to vector<2x32xf32>
    %580 = math.tanh %579 : vector<2x32xf32>
    %581 = vector.extract_strided_slice %562 {offsets = [0, 96], sizes = [2, 32], strides = [1, 1]} : vector<2x128xf32> to vector<2x32xf32>
    %cst_173 = arith.constant 0.000000e+00 : f32
    %582 = vector.broadcast %cst_173 : f32 to vector<2x32xf32>
    %583 = arith.subf %582, %581 : vector<2x32xf32>
    %584 = math.exp %583 : vector<2x32xf32>
    %cst_174 = arith.constant 1.000000e+00 : f32
    %585 = vector.broadcast %cst_174 : f32 to vector<2x32xf32>
    %586 = arith.addf %585, %584 : vector<2x32xf32>
    %cst_175 = arith.constant 1.000000e+00 : f32
    %587 = vector.broadcast %cst_175 : f32 to vector<2x32xf32>
    %588 = arith.divf %587, %586 : vector<2x32xf32>
    %589 = arith.mulf %578, %506 : vector<2x32xf32>
    %590 = arith.mulf %570, %580 : vector<2x32xf32>
    %591 = arith.addf %589, %590 : vector<2x32xf32>
    %592 = math.tanh %591 : vector<2x32xf32>
    %593 = arith.mulf %588, %592 : vector<2x32xf32>
    %594 = vector.broadcast %9 : vector<1x32xf32> to vector<2x32xf32>
    %595 = arith.mulf %593, %594 : vector<2x32xf32>
    %cst_176 = arith.constant dense<0.000000e+00> : vector<2xf32>
    %596 = vector.multi_reduction <add>, %595, %cst_176 [1] : vector<2x32xf32> to vector<2xf32>
    %597 = vector.shape_cast %596 : vector<2xf32> to vector<2x1xf32>
    %cst_177 = arith.constant dense<0xFF800000> : vector<1xf32>
    %598 = vector.multi_reduction <maximumf>, %597, %cst_177 [0] : vector<2x1xf32> to vector<1xf32>
    %599 = vector.shape_cast %598 : vector<1xf32> to vector<1x1xf32>
    %600 = vector.broadcast %599 : vector<1x1xf32> to vector<2x1xf32>
    %601 = arith.subf %597, %600 : vector<2x1xf32>
    %602 = math.exp %601 : vector<2x1xf32>
    %cst_178 = arith.constant dense<0.000000e+00> : vector<1xf32>
    %603 = vector.multi_reduction <add>, %602, %cst_178 [0] : vector<2x1xf32> to vector<1xf32>
    %604 = vector.shape_cast %603 : vector<1xf32> to vector<1x1xf32>
    %605 = vector.broadcast %604 : vector<1x1xf32> to vector<2x1xf32>
    %606 = arith.divf %602, %605 : vector<2x1xf32>
    %607 = vector.broadcast %606 : vector<2x1xf32> to vector<2x32xf32>
    %608 = arith.mulf %593, %607 : vector<2x32xf32>
    %609 = arith.addf %524, %608 : vector<2x32xf32>
    %610 = vector.extract_strided_slice %5 {offsets = [14, 0], sizes = [2, 128], strides = [1, 1]} : vector<16x128xf32> to vector<2x128xf32>
    %cst_179 = arith.constant dense<0.000000e+00> : vector<2x128xf32>
    %611 = tpu.matmul %558, %6, %cst_179 {dimension_numbers = #tpu.dot_dimension_numbers<[1], [0], [0], [1], [0, 0, 1, 1], [], []>, precision = #tpu.contract_precision<fp32>} : vector<2x32xf32>, vector<32x128xf32>, vector<2x128xf32> -> vector<2x128xf32>
    %612 = arith.addf %610, %611 : vector<2x128xf32>
    %613 = vector.extract_strided_slice %612 {offsets = [0, 0], sizes = [2, 32], strides = [1, 1]} : vector<2x128xf32> to vector<2x32xf32>
    %cst_180 = arith.constant 0.000000e+00 : f32
    %614 = vector.broadcast %cst_180 : f32 to vector<2x32xf32>
    %615 = arith.subf %614, %613 : vector<2x32xf32>
    %616 = math.exp %615 : vector<2x32xf32>
    %cst_181 = arith.constant 1.000000e+00 : f32
    %617 = vector.broadcast %cst_181 : f32 to vector<2x32xf32>
    %618 = arith.addf %617, %616 : vector<2x32xf32>
    %cst_182 = arith.constant 1.000000e+00 : f32
    %619 = vector.broadcast %cst_182 : f32 to vector<2x32xf32>
    %620 = arith.divf %619, %618 : vector<2x32xf32>
    %621 = vector.extract_strided_slice %612 {offsets = [0, 32], sizes = [2, 32], strides = [1, 1]} : vector<2x128xf32> to vector<2x32xf32>
    %cst_183 = arith.constant 0.000000e+00 : f32
    %622 = vector.broadcast %cst_183 : f32 to vector<2x32xf32>
    %623 = arith.subf %622, %621 : vector<2x32xf32>
    %624 = math.exp %623 : vector<2x32xf32>
    %cst_184 = arith.constant 1.000000e+00 : f32
    %625 = vector.broadcast %cst_184 : f32 to vector<2x32xf32>
    %626 = arith.addf %625, %624 : vector<2x32xf32>
    %cst_185 = arith.constant 1.000000e+00 : f32
    %627 = vector.broadcast %cst_185 : f32 to vector<2x32xf32>
    %628 = arith.divf %627, %626 : vector<2x32xf32>
    %629 = vector.extract_strided_slice %612 {offsets = [0, 64], sizes = [2, 32], strides = [1, 1]} : vector<2x128xf32> to vector<2x32xf32>
    %630 = math.tanh %629 : vector<2x32xf32>
    %631 = vector.extract_strided_slice %612 {offsets = [0, 96], sizes = [2, 32], strides = [1, 1]} : vector<2x128xf32> to vector<2x32xf32>
    %cst_186 = arith.constant 0.000000e+00 : f32
    %632 = vector.broadcast %cst_186 : f32 to vector<2x32xf32>
    %633 = arith.subf %632, %631 : vector<2x32xf32>
    %634 = math.exp %633 : vector<2x32xf32>
    %cst_187 = arith.constant 1.000000e+00 : f32
    %635 = vector.broadcast %cst_187 : f32 to vector<2x32xf32>
    %636 = arith.addf %635, %634 : vector<2x32xf32>
    %cst_188 = arith.constant 1.000000e+00 : f32
    %637 = vector.broadcast %cst_188 : f32 to vector<2x32xf32>
    %638 = arith.divf %637, %636 : vector<2x32xf32>
    %639 = arith.mulf %628, %556 : vector<2x32xf32>
    %640 = arith.mulf %620, %630 : vector<2x32xf32>
    %641 = arith.addf %639, %640 : vector<2x32xf32>
    %642 = math.tanh %641 : vector<2x32xf32>
    %643 = arith.mulf %638, %642 : vector<2x32xf32>
    %644 = tpu.concatenate %643, %593 in 1 : vector<2x32xf32>, vector<2x32xf32> -> vector<2x64xf32>
    %cst_189 = arith.constant dense<0.000000e+00> : vector<2x128xf32>
    %645 = tpu.matmul %644, %7, %cst_189 {dimension_numbers = #tpu.dot_dimension_numbers<[1], [0], [0], [1], [0, 0, 1, 1], [], []>, precision = #tpu.contract_precision<fp32>} : vector<2x64xf32>, vector<64x128xf32>, vector<2x128xf32> -> vector<2x128xf32>
    %646 = vector.broadcast %8 : vector<1x128xf32> to vector<2x128xf32>
    %647 = arith.addf %645, %646 : vector<2x128xf32>
    %648 = vector.extract_strided_slice %647 {offsets = [0, 0], sizes = [2, 32], strides = [1, 1]} : vector<2x128xf32> to vector<2x32xf32>
    %cst_190 = arith.constant 0.000000e+00 : f32
    %649 = vector.broadcast %cst_190 : f32 to vector<2x32xf32>
    %650 = arith.subf %649, %648 : vector<2x32xf32>
    %651 = math.exp %650 : vector<2x32xf32>
    %cst_191 = arith.constant 1.000000e+00 : f32
    %652 = vector.broadcast %cst_191 : f32 to vector<2x32xf32>
    %653 = arith.addf %652, %651 : vector<2x32xf32>
    %cst_192 = arith.constant 1.000000e+00 : f32
    %654 = vector.broadcast %cst_192 : f32 to vector<2x32xf32>
    %655 = arith.divf %654, %653 : vector<2x32xf32>
    %656 = vector.extract_strided_slice %647 {offsets = [0, 32], sizes = [2, 32], strides = [1, 1]} : vector<2x128xf32> to vector<2x32xf32>
    %cst_193 = arith.constant 0.000000e+00 : f32
    %657 = vector.broadcast %cst_193 : f32 to vector<2x32xf32>
    %658 = arith.subf %657, %656 : vector<2x32xf32>
    %659 = math.exp %658 : vector<2x32xf32>
    %cst_194 = arith.constant 1.000000e+00 : f32
    %660 = vector.broadcast %cst_194 : f32 to vector<2x32xf32>
    %661 = arith.addf %660, %659 : vector<2x32xf32>
    %cst_195 = arith.constant 1.000000e+00 : f32
    %662 = vector.broadcast %cst_195 : f32 to vector<2x32xf32>
    %663 = arith.divf %662, %661 : vector<2x32xf32>
    %664 = vector.extract_strided_slice %647 {offsets = [0, 64], sizes = [2, 32], strides = [1, 1]} : vector<2x128xf32> to vector<2x32xf32>
    %665 = math.tanh %664 : vector<2x32xf32>
    %666 = vector.extract_strided_slice %647 {offsets = [0, 96], sizes = [2, 32], strides = [1, 1]} : vector<2x128xf32> to vector<2x32xf32>
    %cst_196 = arith.constant 0.000000e+00 : f32
    %667 = vector.broadcast %cst_196 : f32 to vector<2x32xf32>
    %668 = arith.subf %667, %666 : vector<2x32xf32>
    %669 = math.exp %668 : vector<2x32xf32>
    %cst_197 = arith.constant 1.000000e+00 : f32
    %670 = vector.broadcast %cst_197 : f32 to vector<2x32xf32>
    %671 = arith.addf %670, %669 : vector<2x32xf32>
    %cst_198 = arith.constant 1.000000e+00 : f32
    %672 = vector.broadcast %cst_198 : f32 to vector<2x32xf32>
    %673 = arith.divf %672, %671 : vector<2x32xf32>
    %674 = arith.mulf %663, %591 : vector<2x32xf32>
    %675 = arith.mulf %655, %665 : vector<2x32xf32>
    %676 = arith.addf %674, %675 : vector<2x32xf32>
    %677 = math.tanh %676 : vector<2x32xf32>
    %678 = arith.mulf %673, %677 : vector<2x32xf32>
    %679 = vector.broadcast %9 : vector<1x32xf32> to vector<2x32xf32>
    %680 = arith.mulf %678, %679 : vector<2x32xf32>
    %cst_199 = arith.constant dense<0.000000e+00> : vector<2xf32>
    %681 = vector.multi_reduction <add>, %680, %cst_199 [1] : vector<2x32xf32> to vector<2xf32>
    %682 = vector.shape_cast %681 : vector<2xf32> to vector<2x1xf32>
    %cst_200 = arith.constant dense<0xFF800000> : vector<1xf32>
    %683 = vector.multi_reduction <maximumf>, %682, %cst_200 [0] : vector<2x1xf32> to vector<1xf32>
    %684 = vector.shape_cast %683 : vector<1xf32> to vector<1x1xf32>
    %685 = vector.broadcast %684 : vector<1x1xf32> to vector<2x1xf32>
    %686 = arith.subf %682, %685 : vector<2x1xf32>
    %687 = math.exp %686 : vector<2x1xf32>
    %cst_201 = arith.constant dense<0.000000e+00> : vector<1xf32>
    %688 = vector.multi_reduction <add>, %687, %cst_201 [0] : vector<2x1xf32> to vector<1xf32>
    %689 = vector.shape_cast %688 : vector<1xf32> to vector<1x1xf32>
    %690 = vector.broadcast %689 : vector<1x1xf32> to vector<2x1xf32>
    %691 = arith.divf %687, %690 : vector<2x1xf32>
    %692 = vector.broadcast %691 : vector<2x1xf32> to vector<2x32xf32>
    %693 = arith.mulf %678, %692 : vector<2x32xf32>
    %694 = arith.addf %609, %693 : vector<2x32xf32>
    %c0_202 = arith.constant 0 : index
    %c0_203 = arith.constant 0 : index
    %695 = vector.load %arg8[%c0_202, %c0_203] : memref<2x32xf32, #tpu.memory_space<vmem>>, vector<2x32xf32>
    tpu.vector_store %arg8[%c0_202, %c0_203], %694 {strides = array<i32>} : memref<2x32xf32, #tpu.memory_space<vmem>>, vector<2x32xf32>,
    return
  }
  func.func @transform_0(%arg0: i32) -> (i32, i32) {
    %c0_i32 = arith.constant 0 : i32
    %c0_i32_0 = arith.constant 0 : i32
    %c0_i32_1 = arith.constant 0 : i32
    return %c0_i32, %c0_i32_0 : i32, i32
  }
  func.func @transform_1(%arg0: i32) -> (i32, i32) {
    %c0_i32 = arith.constant 0 : i32
    %c0_i32_0 = arith.constant 0 : i32
    %c0_i32_1 = arith.constant 0 : i32
    return %c0_i32, %c0_i32_0 : i32, i32
  }
  func.func @transform_2(%arg0: i32) -> (i32, i32) {
    %c0_i32 = arith.constant 0 : i32
    %c0_i32_0 = arith.constant 0 : i32
    %c0_i32_1 = arith.constant 0 : i32
    return %c0_i32, %c0_i32_0 : i32, i32
  }
  func.func @transform_3(%arg0: i32) -> (i32, i32) {
    %c0_i32 = arith.constant 0 : i32
    %c0_i32_0 = arith.constant 0 : i32
    %c0_i32_1 = arith.constant 0 : i32
    return %c0_i32, %c0_i32_0 : i32, i32
  }
  func.func @transform_4(%arg0: i32) -> (i32, i32) {
    %c0_i32 = arith.constant 0 : i32
    %c0_i32_0 = arith.constant 0 : i32
    %c0_i32_1 = arith.constant 0 : i32
    return %c0_i32, %c0_i32_0 : i32, i32
  }
  func.func @transform_5(%arg0: i32) -> (i32, i32) {
    %c0_i32 = arith.constant 0 : i32
    %c0_i32_0 = arith.constant 0 : i32
    %c0_i32_1 = arith.constant 0 : i32
    return %c0_i32, %c0_i32_0 : i32, i32
  }
  func.func @transform_6(%arg0: i32) -> (i32, i32) {
    %c0_i32 = arith.constant 0 : i32
    %c0_i32_0 = arith.constant 0 : i32
    %c0_i32_1 = arith.constant 0 : i32
    return %c0_i32, %c0_i32_0 : i32, i32
  }
  func.func @transform_7(%arg0: i32) -> (i32, i32) {
    %c0_i32 = arith.constant 0 : i32
    %c0_i32_0 = arith.constant 0 : i32
    %c0_i32_1 = arith.constant 0 : i32
    return %c0_i32, %c0_i32_0 : i32, i32
  }
}

</mosaic_0001>

<llo_original>
// kernel: tpu_custom_call.1
$region0: #{tpu_custom_call.1}
  #allocation0 [shape = 'u32[]', space=smem, size = 0x4, offset = 0x4, fixed_abs, tag = 'smem constant byte address 0x4 - core index']
  #allocation1 [shape = 'u32[72,128]{1,0:T(1,128)}', space=vmem, size = 0x9000, scoped, tag = 'internal scratch']
  %s0 = inlined_call_operand.hbm [shape: f32[16,32], index: 0, kind: input, shape index: {}]
  %s1 = inlined_call_operand.hbm [shape: f32[32,128], index: 1, kind: input, shape index: {}]
  %s2 = inlined_call_operand.hbm [shape: f32[32,128], index: 2, kind: input, shape index: {}]
  %s3 = inlined_call_operand.vmem [shape: f32[1,128], index: 3, kind: input, shape index: {}]
  %s4 = inlined_call_operand.hbm [shape: f32[64,128], index: 4, kind: input, shape index: {}]
  %s5 = inlined_call_operand.vmem [shape: f32[1,128], index: 5, kind: input, shape index: {}]
  %s6 = inlined_call_operand.vmem [shape: f32[1,32], index: 6, kind: input, shape index: {}]
  %s7 = inlined_call_operand.hbm [shape: f32[2,32], index: 7, kind: output, shape index: {}]
  %s8 = sld [smem:[#allocation0]]
  $region54: #{tpu_custom_call.1} parent=0
    _
  %s10 = ssub.s32 1, %s8
  %s11 = scalar_select 0, %s10, %s8
  $region1: #{tpu_custom_call.1} parent=0
    #allocation2 [shape = 'u8[8192]{0}', space=vmem, size = 0x2000, scoped, tag = 'input window, operand 0, single buffered']
    #allocation3 [shape = 's32[1]{0}', space=sflag, size = 0x4, scoped, tag = 'scoped memory for tpu_custom_call.1']
    #allocation4 [shape = 's32[1]{0}', space=sflag, size = 0x4, scoped, tag = 'scoped memory for tpu_custom_call.1']
    #allocation5 [shape = 'u8[16384]{0}', space=vmem, size = 0x4000, scoped, tag = 'input window, operand 1, single buffered']
    #allocation6 [shape = 's32[1]{0}', space=sflag, size = 0x4, scoped, tag = 'scoped memory for tpu_custom_call.1']
    #allocation7 [shape = 'u8[16384]{0}', space=vmem, size = 0x4000, scoped, tag = 'input window, operand 2, single buffered']
    #allocation8 [shape = 'u8[32768]{0}', space=vmem, size = 0x8000, scoped, tag = 'input window, operand 4, single buffered']
    #allocation9 [shape = 's32[1]{0}', space=sflag, size = 0x4, scoped, tag = 'scoped memory for tpu_custom_call.1']
    #allocation10 [shape = 'u8[1024]{0}', space=vmem, size = 0x400, scoped, tag = 'output window, operand 0, single buffered']
    %12 = vsyncpa [#allocation3], 0
    %13 = vsyncpa [#allocation6], 0
    %14 = vsyncpa [#allocation9], 0
    %15 = vsyncpa [#allocation4], 0
    // Predicated region
    $region2: #{tpu_custom_call.1} parent=1 // pred_check
      _
    $region3: #{tpu_custom_call.1} parent=1 // pred_check_branch
      %17 = sbr.rel (0) target = $region5
    $region4: #{tpu_custom_call.1} parent=1 // pred_region
      %19 = vsyncadd [#allocation3], 0
      %s20 = sshll.u32 %s0, 4
      %s21 = int_to_ptr.hbm [resolvable:$true] %s20
      %s22 = sshll.u32 [#allocation2], 4
      %s23 = int_to_ptr.vmem [resolvable:$true] %s22
      %28 = dma.hbm_to_vmem [thread:$0]  %s21, 256, %s23, [#allocation3], 128, 128, 8
    $region5: #{tpu_custom_call.1} parent=1 // pred_fallthru
      _
    // Predicated region
    $region6: #{tpu_custom_call.1} parent=1 // pred_check
      _
    $region7: #{tpu_custom_call.1} parent=1 // pred_check_branch
      %30 = sbr.rel (0) target = $region9
    $region8: #{tpu_custom_call.1} parent=1 // pred_region
      %32 = vsyncadd [#allocation6], 0
      %s33 = sshll.u32 %s1, 4
      %s34 = int_to_ptr.hbm [resolvable:$true] %s33
      %s35 = sshll.u32 [#allocation5], 4
      %s36 = int_to_ptr.vmem [resolvable:$true] %s35
      %41 = dma.hbm_to_vmem [thread:$0]  %s34, 512, %s36, [#allocation6], 128, 128, 8
    $region9: #{tpu_custom_call.1} parent=1 // pred_fallthru
      _
    // Predicated region
    $region10: #{tpu_custom_call.1} parent=1 // pred_check
      _
    $region11: #{tpu_custom_call.1} parent=1 // pred_check_branch
      %43 = sbr.rel (0) target = $region13
    $region12: #{tpu_custom_call.1} parent=1 // pred_region
      %45 = vsyncadd [#allocation6], 0
      %s46 = sshll.u32 %s2, 4
      %s47 = int_to_ptr.hbm [resolvable:$true] %s46
      %s48 = sshll.u32 [#allocation7], 4
      %s49 = int_to_ptr.vmem [resolvable:$true] %s48
      %54 = dma.hbm_to_vmem [thread:$0]  %s47, 512, %s49, [#allocation6], 128, 128, 8
    $region13: #{tpu_custom_call.1} parent=1 // pred_fallthru
      _
    // Predicated region
    $region14: #{tpu_custom_call.1} parent=1 // pred_check
      _
    $region15: #{tpu_custom_call.1} parent=1 // pred_check_branch
      %56 = sbr.rel (0) target = $region17
    $region16: #{tpu_custom_call.1} parent=1 // pred_region
      _
    $region17: #{tpu_custom_call.1} parent=1 // pred_fallthru
      _
    // Predicated region
    $region18: #{tpu_custom_call.1} parent=1 // pred_check
      _
    $region19: #{tpu_custom_call.1} parent=1 // pred_check_branch
      %58 = sbr.rel (0) target = $region21
    $region20: #{tpu_custom_call.1} parent=1 // pred_region
      %60 = vsyncadd [#allocation9], 0
      %s61 = sshll.u32 %s4, 4
      %s62 = int_to_ptr.hbm [resolvable:$true] %s61
      %s63 = sshll.u32 [#allocation8], 4
      %s64 = int_to_ptr.vmem [resolvable:$true] %s63
      %69 = dma.hbm_to_vmem [thread:$0]  %s62, 1024, %s64, [#allocation9], 128, 128, 8
    $region21: #{tpu_custom_call.1} parent=1 // pred_fallthru
      _
    // Predicated region
    $region22: #{tpu_custom_call.1} parent=1 // pred_check
      _
    $region23: #{tpu_custom_call.1} parent=1 // pred_check_branch
      %71 = sbr.rel (0) target = $region25
    $region24: #{tpu_custom_call.1} parent=1 // pred_region
      _
    $region25: #{tpu_custom_call.1} parent=1 // pred_fallthru
      _
    // Predicated region
    $region26: #{tpu_custom_call.1} parent=1 // pred_check
      _
    $region27: #{tpu_custom_call.1} parent=1 // pred_check_branch
      %73 = sbr.rel (0) target = $region29
    $region28: #{tpu_custom_call.1} parent=1 // pred_region
      _
    $region29: #{tpu_custom_call.1} parent=1 // pred_fallthru
      _
    // Predicated region
    $region30: #{tpu_custom_call.1} parent=1 // pred_check
      _
    $region31: #{tpu_custom_call.1} parent=1 // pred_check_branch
      %75 = sbr.rel (0) target = $region33
    $region32: #{tpu_custom_call.1} parent=1 // pred_region
      %77 = dma.done [#allocation3], 256
    $region33: #{tpu_custom_call.1} parent=1 // pred_fallthru
      _
    // Predicated region
    $region34: #{tpu_custom_call.1} parent=1 // pred_check
      _
    $region35: #{tpu_custom_call.1} parent=1 // pred_check_branch
      %79 = sbr.rel (0) target = $region37
    $region36: #{tpu_custom_call.1} parent=1 // pred_region
      %81 = dma.done [#allocation6], 512
    $region37: #{tpu_custom_call.1} parent=1 // pred_fallthru
      _
    // Predicated region
    $region38: #{tpu_custom_call.1} parent=1 // pred_check
      _
    $region39: #{tpu_custom_call.1} parent=1 // pred_check_branch
      %83 = sbr.rel (0) target = $region41
    $region40: #{tpu_custom_call.1} parent=1 // pred_region
      %85 = dma.done [#allocation6], 512
    $region41: #{tpu_custom_call.1} parent=1 // pred_fallthru
      _
    // Predicated region
    $region42: #{tpu_custom_call.1} parent=1 // pred_check
      _
    $region43: #{tpu_custom_call.1} parent=1 // pred_check_branch
      %87 = sbr.rel (0) target = $region45
    $region44: #{tpu_custom_call.1} parent=1 // pred_region
      %89 = dma.done [#allocation9], 1024
    $region45: #{tpu_custom_call.1} parent=1 // pred_fallthru
      _
    %v90 = vld [vmem:[#allocation2] sm:$0xff]
    %v91 = vld [vmem:[#allocation2 + $0x8] sm:$0xff]
    %v92 = vld [vmem:[#allocation5] sm:$0xff]
    %v93 = vld [vmem:[#allocation5 + $0x8] sm:$0xff]
    %v94 = vld [vmem:[#allocation5 + $0x10] sm:$0xff]
    %v95 = vld [vmem:[#allocation5 + $0x18] sm:$0xff]
    %v96 = vld [vmem:[%s3] sm:$0x1]
    %v98 = vperm.slane %v96, 0
    %vm100 = vcmask 261120
    %v102 = vsel %vm100, %v90, 0
    %v105 = vsel %vm100, %v91, 0
    %107 = vmatpush.msra.mxu0 0.0
    %108 = vmatpush.msra.mxu0 0.0
    %109 = vmatpush.msra.mxu0 0.0
    %110 = vmatpush.msra.mxu0 0.0
    %111 = vmatpush.msra.mxu0 0.0
    %112 = vmatpush.msra.mxu0 0.0
    %113 = vmatpush.msra.mxu0 0.0
    %114 = vmatpush.msra.mxu0 0.0
    %115 = vmatpush.msra.mxu0 0.0
    %116 = vmatpush.msra.mxu0 0.0
    %117 = vmatpush.msra.mxu0 0.0
    %118 = vmatpush.msra.mxu0 0.0
    %v119 = vand.u32 %v95, 4294901760
    %120 = vmatpush.msra.mxu0 %v119
    %v121 = vand.u32 %v94, 4294901760
    %122 = vmatpush.msra.mxu0 %v121
    %v123 = vand.u32 %v93, 4294901760
    %124 = vmatpush.msra.mxu0 %v123
    %v125 = vand.u32 %v92, 4294901760
    %126 = vmatpush.msra.mxu0 %v125
    %v127 = vand.u32 %v102, 4294901760
    %v128 = vsub.f32 %v102, %v127
    %v129 = vand.u32 %v128, 4294901760
    %v130 = vsub.f32 %v128, %v129
    %v131 = vand.u32 %v130, 4294901760
    %132 = vmatmul.f32.gmra.mxu0 %v131
    %v133 = vpop.f32.mrf.mxu0
    %v134 = vadd.f32 %v98, %v133
    %v135 = vand.u32 %v105, 4294901760
    %v136 = vsub.f32 %v105, %v135
    %v137 = vand.u32 %v136, 4294901760
    %v138 = vsub.f32 %v136, %v137
    %v139 = vand.u32 %v138, 4294901760
    %140 = vmatmul.f32.gmra.mxu0 %v139
    %v141 = vpop.f32.mrf.mxu0
    %v142 = vadd.f32 %v98, %v141
    %143 = vdwg.mxu0
    %144 = vmatpush.msra.mxu0 0.0
    %145 = vmatpush.msra.mxu0 0.0
    %146 = vmatpush.msra.mxu0 0.0
    %147 = vmatpush.msra.mxu0 0.0
    %148 = vmatpush.msra.mxu0 0.0
    %149 = vmatpush.msra.mxu0 0.0
    %150 = vmatpush.msra.mxu0 0.0
    %151 = vmatpush.msra.mxu0 0.0
    %152 = vmatpush.msra.mxu0 0.0
    %153 = vmatpush.msra.mxu0 0.0
    %154 = vmatpush.msra.mxu0 0.0
    %155 = vmatpush.msra.mxu0 0.0
    %v156 = vand.u32 %v95, 4294901760
    %v157 = vsub.f32 %v95, %v156
    %v158 = vand.u32 %v157, 4294901760
    %v159 = vsub.f32 %v157, %v158
    %v160 = vand.u32 %v159, 4294901760
    %161 = vmatpush.msra.mxu0 %v160
    %v162 = vand.u32 %v94, 4294901760
    %v163 = vsub.f32 %v94, %v162
    %v164 = vand.u32 %v163, 4294901760
    %v165 = vsub.f32 %v163, %v164
    %v166 = vand.u32 %v165, 4294901760
    %167 = vmatpush.msra.mxu0 %v166
    %v168 = vand.u32 %v93, 4294901760
    %v169 = vsub.f32 %v93, %v168
    %v170 = vand.u32 %v169, 4294901760
    %v171 = vsub.f32 %v169, %v170
    %v172 = vand.u32 %v171, 4294901760
    %173 = vmatpush.msra.mxu0 %v172
    %v174 = vand.u32 %v92, 4294901760
    %v175 = vsub.f32 %v92, %v174
    %v176 = vand.u32 %v175, 4294901760
    %v177 = vsub.f32 %v175, %v176
    %v178 = vand.u32 %v177, 4294901760
    %179 = vmatpush.msra.mxu0 %v178
    %v180 = vand.u32 %v102, 4294901760
    %181 = vmatmul.f32.gmra.mxu0 %v180
    %v182 = vpop.f32.mrf.mxu0
    %v183 = vadd.f32 %v134, %v182
    %v184 = vand.u32 %v105, 4294901760
    %185 = vmatmul.f32.gmra.mxu0 %v184
    %v186 = vpop.f32.mrf.mxu0
    %v187 = vadd.f32 %v142, %v186
    %188 = vdwg.mxu0
    %189 = vmatpush.msra.mxu0 0.0
    %190 = vmatpush.msra.mxu0 0.0
    %191 = vmatpush.msra.mxu0 0.0
    %192 = vmatpush.msra.mxu0 0.0
    %193 = vmatpush.msra.mxu0 0.0
    %194 = vmatpush.msra.mxu0 0.0
    %195 = vmatpush.msra.mxu0 0.0
    %196 = vmatpush.msra.mxu0 0.0
    %197 = vmatpush.msra.mxu0 0.0
    %198 = vmatpush.msra.mxu0 0.0
    %199 = vmatpush.msra.mxu0 0.0
    %200 = vmatpush.msra.mxu0 0.0
    %v201 = vand.u32 %v95, 4294901760
    %v202 = vsub.f32 %v95, %v201
    %203 = vmatpush.msra.mxu0 %v202
    %v204 = vand.u32 %v94, 4294901760
    %v205 = vsub.f32 %v94, %v204
    %206 = vmatpush.msra.mxu0 %v205
    %v207 = vand.u32 %v93, 4294901760
    %v208 = vsub.f32 %v93, %v207
    %209 = vmatpush.msra.mxu0 %v208
    %v210 = vand.u32 %v92, 4294901760
    %v211 = vsub.f32 %v92, %v210
    %212 = vmatpush.msra.mxu0 %v211
    %v213 = vand.u32 %v102, 4294901760
    %v214 = vsub.f32 %v102, %v213
    %215 = vmatmul.f32.gmra.mxu0 %v214
    %v216 = vpop.f32.mrf.mxu0
    %v217 = vadd.f32 %v183, %v216
    %v218 = vand.u32 %v105, 4294901760
    %v219 = vsub.f32 %v105, %v218
    %220 = vmatmul.f32.gmra.mxu0 %v219
    %v221 = vpop.f32.mrf.mxu0
    %v222 = vadd.f32 %v187, %v221
    %223 = vdwg.mxu0
    %224 = vmatpush.msra.mxu0 0.0
    %225 = vmatpush.msra.mxu0 0.0
    %226 = vmatpush.msra.mxu0 0.0
    %227 = vmatpush.msra.mxu0 0.0
    %228 = vmatpush.msra.mxu0 0.0
    %229 = vmatpush.msra.mxu0 0.0
    %230 = vmatpush.msra.mxu0 0.0
    %231 = vmatpush.msra.mxu0 0.0
    %232 = vmatpush.msra.mxu0 0.0
    %233 = vmatpush.msra.mxu0 0.0
    %234 = vmatpush.msra.mxu0 0.0
    %235 = vmatpush.msra.mxu0 0.0
    %v236 = vand.u32 %v95, 4294901760
    %237 = vmatpush.msra.mxu0 %v236
    %v238 = vand.u32 %v94, 4294901760
    %239 = vmatpush.msra.mxu0 %v238
    %v240 = vand.u32 %v93, 4294901760
    %241 = vmatpush.msra.mxu0 %v240
    %v242 = vand.u32 %v92, 4294901760
    %243 = vmatpush.msra.mxu0 %v242
    %v244 = vand.u32 %v102, 4294901760
    %v245 = vsub.f32 %v102, %v244
    %v246 = vand.u32 %v245, 4294901760
    %247 = vmatmul.f32.gmra.mxu0 %v246
    %v248 = vpop.f32.mrf.mxu0
    %v249 = vadd.f32 %v217, %v248
    %v250 = vand.u32 %v105, 4294901760
    %v251 = vsub.f32 %v105, %v250
    %v252 = vand.u32 %v251, 4294901760
    %253 = vmatmul.f32.gmra.mxu0 %v252
    %v254 = vpop.f32.mrf.mxu0
    %v255 = vadd.f32 %v222, %v254
    %256 = vdwg.mxu0
    %257 = vmatpush.msra.mxu0 0.0
    %258 = vmatpush.msra.mxu0 0.0
    %259 = vmatpush.msra.mxu0 0.0
    %260 = vmatpush.msra.mxu0 0.0
    %261 = vmatpush.msra.mxu0 0.0
    %262 = vmatpush.msra.mxu0 0.0
    %263 = vmatpush.msra.mxu0 0.0
    %264 = vmatpush.msra.mxu0 0.0
    %265 = vmatpush.msra.mxu0 0.0
    %266 = vmatpush.msra.mxu0 0.0
    %267 = vmatpush.msra.mxu0 0.0
    %268 = vmatpush.msra.mxu0 0.0
    %v269 = vand.u32 %v95, 4294901760
    %v270 = vsub.f32 %v95, %v269
    %v271 = vand.u32 %v270, 4294901760
    %272 = vmatpush.msra.mxu0 %v271
    %v273 = vand.u32 %v94, 4294901760
    %v274 = vsub.f32 %v94, %v273
    %v275 = vand.u32 %v274, 4294901760
    %276 = vmatpush.msra.mxu0 %v275
    %v277 = vand.u32 %v93, 4294901760
    %v278 = vsub.f32 %v93, %v277
    %v279 = vand.u32 %v278, 4294901760
    %280 = vmatpush.msra.mxu0 %v279
    %v281 = vand.u32 %v92, 4294901760
    %v282 = vsub.f32 %v92, %v281
    %v283 = vand.u32 %v282, 4294901760
    %284 = vmatpush.msra.mxu0 %v283
    %v285 = vand.u32 %v102, 4294901760
    %286 = vmatmul.f32.gmra.mxu0 %v285
    %v287 = vpop.f32.mrf.mxu0
    %v288 = vadd.f32 %v249, %v287
    %v289 = vand.u32 %v105, 4294901760
    %290 = vmatmul.f32.gmra.mxu0 %v289
    %v291 = vpop.f32.mrf.mxu0
    %v292 = vadd.f32 %v255, %v291
    %293 = vdwg.mxu0
    %294 = vmatpush.msra.mxu0 0.0
    %295 = vmatpush.msra.mxu0 0.0
    %296 = vmatpush.msra.mxu0 0.0
    %297 = vmatpush.msra.mxu0 0.0
    %298 = vmatpush.msra.mxu0 0.0
    %299 = vmatpush.msra.mxu0 0.0
    %300 = vmatpush.msra.mxu0 0.0
    %301 = vmatpush.msra.mxu0 0.0
    %302 = vmatpush.msra.mxu0 0.0
    %303 = vmatpush.msra.mxu0 0.0
    %304 = vmatpush.msra.mxu0 0.0
    %305 = vmatpush.msra.mxu0 0.0
    %v306 = vand.u32 %v95, 4294901760
    %307 = vmatpush.msra.mxu0 %v306
    %v308 = vand.u32 %v94, 4294901760
    %309 = vmatpush.msra.mxu0 %v308
    %v310 = vand.u32 %v93, 4294901760
    %311 = vmatpush.msra.mxu0 %v310
    %v312 = vand.u32 %v92, 4294901760
    %313 = vmatpush.msra.mxu0 %v312
    %v314 = vand.u32 %v102, 4294901760
    %315 = vmatmul.f32.gmra.mxu0 %v314
    %v316 = vpop.f32.mrf.mxu0
    %v317 = vadd.f32 %v288, %v316
    %v318 = vand.u32 %v105, 4294901760
    %319 = vmatmul.f32.gmra.mxu0 %v318
    %v320 = vpop.f32.mrf.mxu0
    %v321 = vadd.f32 %v292, %v320
    %322 = vdwg.mxu0
    %v323 = vld [vmem:[#allocation7] sm:$0xff]
    %v324 = vld [vmem:[#allocation7 + $0x8] sm:$0xff]
    %v325 = vld [vmem:[#allocation7 + $0x10] sm:$0xff]
    %v326 = vld [vmem:[#allocation7 + $0x18] sm:$0xff]
    %v327 = vld [vmem:[#allocation8] sm:$0xff]
    %v328 = vld [vmem:[#allocation8 + $0x8] sm:$0xff]
    %v329 = vld [vmem:[#allocation8 + $0x10] sm:$0xff]
    %v330 = vld [vmem:[#allocation8 + $0x18] sm:$0xff]
    %v331 = vld [vmem:[#allocation8 + $0x20] sm:$0xff]
    %v332 = vld [vmem:[#allocation8 + $0x28] sm:$0xff]
    %v333 = vld [vmem:[#allocation8 + $0x30] sm:$0xff]
    %v334 = vld [vmem:[#allocation8 + $0x38] sm:$0xff]
    %v335 = vld [vmem:[%s5] sm:$0x1]
    %v336 = vld [vmem:[%s6] sm:$0x1]
    %v338 = vsel %vm100, 0.0, 0
    %340 = vmatpush.msra.mxu0 0.0
    %341 = vmatpush.msra.mxu0 0.0
    %342 = vmatpush.msra.mxu0 0.0
    %343 = vmatpush.msra.mxu0 0.0
    %344 = vmatpush.msra.mxu0 0.0
    %345 = vmatpush.msra.mxu0 0.0
    %346 = vmatpush.msra.mxu0 0.0
    %347 = vmatpush.msra.mxu0 0.0
    %348 = vmatpush.msra.mxu0 0.0
    %349 = vmatpush.msra.mxu0 0.0
    %350 = vmatpush.msra.mxu0 0.0
    %351 = vmatpush.msra.mxu0 0.0
    %v352 = vand.u32 %v326, 4294901760
    %353 = vmatpush.msra.mxu0 %v352
    %v354 = vand.u32 %v325, 4294901760
    %355 = vmatpush.msra.mxu0 %v354
    %v356 = vand.u32 %v324, 4294901760
    %357 = vmatpush.msra.mxu0 %v356
    %v358 = vand.u32 %v323, 4294901760
    %359 = vmatpush.msra.mxu0 %v358
    %v360 = vand.u32 %v338, 4294901760
    %v361 = vsub.f32 %v338, %v360
    %v362 = vand.u32 %v361, 4294901760
    %v363 = vsub.f32 %v361, %v362
    %v364 = vand.u32 %v363, 4294901760
    %365 = vmatmul.f32.gmra.mxu0 %v364
    %v366 = vpop.f32.mrf.mxu0
    %v367 = vadd.f32 0.0, %v366
    %368 = vdwg.mxu0
    %369 = vmatpush.msra.mxu0 0.0
    %370 = vmatpush.msra.mxu0 0.0
    %371 = vmatpush.msra.mxu0 0.0
    %372 = vmatpush.msra.mxu0 0.0
    %373 = vmatpush.msra.mxu0 0.0
    %374 = vmatpush.msra.mxu0 0.0
    %375 = vmatpush.msra.mxu0 0.0
    %376 = vmatpush.msra.mxu0 0.0
    %377 = vmatpush.msra.mxu0 0.0
    %378 = vmatpush.msra.mxu0 0.0
    %379 = vmatpush.msra.mxu0 0.0
    %380 = vmatpush.msra.mxu0 0.0
    %v381 = vand.u32 %v326, 4294901760
    %v382 = vsub.f32 %v326, %v381
    %v383 = vand.u32 %v382, 4294901760
    %v384 = vsub.f32 %v382, %v383
    %v385 = vand.u32 %v384, 4294901760
    %386 = vmatpush.msra.mxu0 %v385
    %v387 = vand.u32 %v325, 4294901760
    %v388 = vsub.f32 %v325, %v387
    %v389 = vand.u32 %v388, 4294901760
    %v390 = vsub.f32 %v388, %v389
    %v391 = vand.u32 %v390, 4294901760
    %392 = vmatpush.msra.mxu0 %v391
    %v393 = vand.u32 %v324, 4294901760
    %v394 = vsub.f32 %v324, %v393
    %v395 = vand.u32 %v394, 4294901760
    %v396 = vsub.f32 %v394, %v395
    %v397 = vand.u32 %v396, 4294901760
    %398 = vmatpush.msra.mxu0 %v397
    %v399 = vand.u32 %v323, 4294901760
    %v400 = vsub.f32 %v323, %v399
    %v401 = vand.u32 %v400, 4294901760
    %v402 = vsub.f32 %v400, %v401
    %v403 = vand.u32 %v402, 4294901760
    %404 = vmatpush.msra.mxu0 %v403
    %v405 = vand.u32 %v338, 4294901760
    %406 = vmatmul.f32.gmra.mxu0 %v405
    %v407 = vpop.f32.mrf.mxu0
    %v408 = vadd.f32 %v367, %v407
    %409 = vdwg.mxu0
    %410 = vmatpush.msra.mxu0 0.0
    %411 = vmatpush.msra.mxu0 0.0
    %412 = vmatpush.msra.mxu0 0.0
    %413 = vmatpush.msra.mxu0 0.0
    %414 = vmatpush.msra.mxu0 0.0
    %415 = vmatpush.msra.mxu0 0.0
    %416 = vmatpush.msra.mxu0 0.0
    %417 = vmatpush.msra.mxu0 0.0
    %418 = vmatpush.msra.mxu0 0.0
    %419 = vmatpush.msra.mxu0 0.0
    %420 = vmatpush.msra.mxu0 0.0
    %421 = vmatpush.msra.mxu0 0.0
    %v422 = vand.u32 %v326, 4294901760
    %v423 = vsub.f32 %v326, %v422
    %424 = vmatpush.msra.mxu0 %v423
    %v425 = vand.u32 %v325, 4294901760
    %v426 = vsub.f32 %v325, %v425
    %427 = vmatpush.msra.mxu0 %v426
    %v428 = vand.u32 %v324, 4294901760
    %v429 = vsub.f32 %v324, %v428
    %430 = vmatpush.msra.mxu0 %v429
    %v431 = vand.u32 %v323, 4294901760
    %v432 = vsub.f32 %v323, %v431
    %433 = vmatpush.msra.mxu0 %v432
    %v434 = vand.u32 %v338, 4294901760
    %v435 = vsub.f32 %v338, %v434
    %436 = vmatmul.f32.gmra.mxu0 %v435
    %v437 = vpop.f32.mrf.mxu0
    %v438 = vadd.f32 %v408, %v437
    %439 = vdwg.mxu0
    %440 = vmatpush.msra.mxu0 0.0
    %441 = vmatpush.msra.mxu0 0.0
    %442 = vmatpush.msra.mxu0 0.0
    %443 = vmatpush.msra.mxu0 0.0
    %444 = vmatpush.msra.mxu0 0.0
    %445 = vmatpush.msra.mxu0 0.0
    %446 = vmatpush.msra.mxu0 0.0
    %447 = vmatpush.msra.mxu0 0.0
    %448 = vmatpush.msra.mxu0 0.0
    %449 = vmatpush.msra.mxu0 0.0
    %450 = vmatpush.msra.mxu0 0.0
    %451 = vmatpush.msra.mxu0 0.0
    %v452 = vand.u32 %v326, 4294901760
    %453 = vmatpush.msra.mxu0 %v452
    %v454 = vand.u32 %v325, 4294901760
    %455 = vmatpush.msra.mxu0 %v454
    %v456 = vand.u32 %v324, 4294901760
    %457 = vmatpush.msra.mxu0 %v456
    %v458 = vand.u32 %v323, 4294901760
    %459 = vmatpush.msra.mxu0 %v458
    %v460 = vand.u32 %v338, 4294901760
    %v461 = vsub.f32 %v338, %v460
    %v462 = vand.u32 %v461, 4294901760
    %463 = vmatmul.f32.gmra.mxu0 %v462
    %v464 = vpop.f32.mrf.mxu0
    %v465 = vadd.f32 %v438, %v464
    %466 = vdwg.mxu0
    %467 = vmatpush.msra.mxu0 0.0
    %468 = vmatpush.msra.mxu0 0.0
    %469 = vmatpush.msra.mxu0 0.0
    %470 = vmatpush.msra.mxu0 0.0
    %471 = vmatpush.msra.mxu0 0.0
    %472 = vmatpush.msra.mxu0 0.0
    %473 = vmatpush.msra.mxu0 0.0
    %474 = vmatpush.msra.mxu0 0.0
    %475 = vmatpush.msra.mxu0 0.0
    %476 = vmatpush.msra.mxu0 0.0
    %477 = vmatpush.msra.mxu0 0.0
    %478 = vmatpush.msra.mxu0 0.0
    %v479 = vand.u32 %v326, 4294901760
    %v480 = vsub.f32 %v326, %v479
    %v481 = vand.u32 %v480, 4294901760
    %482 = vmatpush.msra.mxu0 %v481
    %v483 = vand.u32 %v325, 4294901760
    %v484 = vsub.f32 %v325, %v483
    %v485 = vand.u32 %v484, 4294901760
    %486 = vmatpush.msra.mxu0 %v485
    %v487 = vand.u32 %v324, 4294901760
    %v488 = vsub.f32 %v324, %v487
    %v489 = vand.u32 %v488, 4294901760
    %490 = vmatpush.msra.mxu0 %v489
    %v491 = vand.u32 %v323, 4294901760
    %v492 = vsub.f32 %v323, %v491
    %v493 = vand.u32 %v492, 4294901760
    %494 = vmatpush.msra.mxu0 %v493
    %v495 = vand.u32 %v338, 4294901760
    %496 = vmatmul.f32.gmra.mxu0 %v495
    %v497 = vpop.f32.mrf.mxu0
    %v498 = vadd.f32 %v465, %v497
    %499 = vdwg.mxu0
    %500 = vmatpush.msra.mxu0 0.0
    %501 = vmatpush.msra.mxu0 0.0
    %502 = vmatpush.msra.mxu0 0.0
    %503 = vmatpush.msra.mxu0 0.0
    %504 = vmatpush.msra.mxu0 0.0
    %505 = vmatpush.msra.mxu0 0.0
    %506 = vmatpush.msra.mxu0 0.0
    %507 = vmatpush.msra.mxu0 0.0
    %508 = vmatpush.msra.mxu0 0.0
    %509 = vmatpush.msra.mxu0 0.0
    %510 = vmatpush.msra.mxu0 0.0
    %511 = vmatpush.msra.mxu0 0.0
    %v512 = vand.u32 %v326, 4294901760
    %513 = vmatpush.msra.mxu0 %v512
    %v514 = vand.u32 %v325, 4294901760
    %515 = vmatpush.msra.mxu0 %v514
    %v516 = vand.u32 %v324, 4294901760
    %517 = vmatpush.msra.mxu0 %v516
    %v518 = vand.u32 %v323, 4294901760
    %519 = vmatpush.msra.mxu0 %v518
    %v520 = vand.u32 %v338, 4294901760
    %521 = vmatmul.f32.gmra.mxu0 %v520
    %v522 = vpop.f32.mrf.mxu0
    %v523 = vadd.f32 %v498, %v522
    %524 = vdwg.mxu0
    %v525 = vadd.f32 %v317, %v523
    %v526 = vsub.f32 0.0, %v525
    %v527 = vmul.f32 %v526, 1.442695
    %v528 = vpow.pop %v527
    %v529 = vadd.f32 %v528, 1.0
    %v530 = vrcp.pop %v529
    %v531 = vmul.f32 %v529, %v530
    %v532 = vsub.f32 1.0, %v531
    %v533 = vmul.f32 %v530, %v532
    %v534 = vadd.f32 %v530, %v533
    %vm535 = vweird.f32 %v529
    %vm536 = vweird.f32 %v530
    %vm537 = vmor %vm535, %vm536
    %v538 = vsel %vm537, %v530, %v534
    %v539 = vand.u32 2147483647, %v529
    %vm540 = vcmp.eq.f32.partialorder %v539, 8.507059e+37
    %v541 = vand.u32 %v529, 2147483648
    %v542 = vor.u32 1.1754944e-38, %v541
    %v543 = vsel %vm540, %v542, %v538
    %v544 = vmul.f32 1.0, %v543
    %v545 = vtanh.pop %v525
    %v546 = vmul.f32 %v544, 0.0
    %548 = vrot.lane.b32.xlu0 %v545, 64
    %v549 = vpop.permute.xlu0 %548
    %v551 = vmul.f32 %v544, %v549
    %553 = vrot.lane.b32.xlu0 %v551, 32
    %v554 = vpop.permute.xlu0 %553
    %v556 = vadd.f32 %v546, %v554
    %v557 = vtanh.pop %v556
    %559 = vrot.lane.b32.xlu0 %v557, 64
    %v560 = vpop.permute.xlu0 %559
    %v562 = vmul.f32 %v544, %v560
    %564 = vrot.lane.b32.xlu0 %v562, 32
    %v565 = vpop.permute.xlu0 %564
    %v567 = vsel %vm100, %v565, 0.0
    %v569 = vperm.slane %v335, 0
    %vm571 = vcmask 523264
    %v573 = vsel %vm571, %v567, 0
    %575 = vmatpush.msra.mxu0 0.0
    %576 = vmatpush.msra.mxu0 0.0
    %577 = vmatpush.msra.mxu0 0.0
    %578 = vmatpush.msra.mxu0 0.0
    %579 = vmatpush.msra.mxu0 0.0
    %580 = vmatpush.msra.mxu0 0.0
    %581 = vmatpush.msra.mxu0 0.0
    %582 = vmatpush.msra.mxu0 0.0
    %v583 = vand.u32 %v334, 4294901760
    %584 = vmatpush.msra.mxu0 %v583
    %v585 = vand.u32 %v333, 4294901760
    %586 = vmatpush.msra.mxu0 %v585
    %v587 = vand.u32 %v332, 4294901760
    %588 = vmatpush.msra.mxu0 %v587
    %v589 = vand.u32 %v331, 4294901760
    %590 = vmatpush.msra.mxu0 %v589
    %v591 = vand.u32 %v330, 4294901760
    %592 = vmatpush.msra.mxu0 %v591
    %v593 = vand.u32 %v329, 4294901760
    %594 = vmatpush.msra.mxu0 %v593
    %v595 = vand.u32 %v328, 4294901760
    %596 = vmatpush.msra.mxu0 %v595
    %v597 = vand.u32 %v327, 4294901760
    %598 = vmatpush.msra.mxu0 %v597
    %v599 = vand.u32 %v573, 4294901760
    %v600 = vsub.f32 %v573, %v599
    %v601 = vand.u32 %v600, 4294901760
    %v602 = vsub.f32 %v600, %v601
    %v603 = vand.u32 %v602, 4294901760
    %604 = vmatmul.f32.gmra.mxu0 %v603
    %v605 = vpop.f32.mrf.mxu0
    %v606 = vadd.f32 %v569, %v605
    %607 = vdwg.mxu0
    %608 = vmatpush.msra.mxu0 0.0
    %609 = vmatpush.msra.mxu0 0.0
    %610 = vmatpush.msra.mxu0 0.0
    %611 = vmatpush.msra.mxu0 0.0
    %612 = vmatpush.msra.mxu0 0.0
    %613 = vmatpush.msra.mxu0 0.0
    %614 = vmatpush.msra.mxu0 0.0
    %615 = vmatpush.msra.mxu0 0.0
    %v616 = vand.u32 %v334, 4294901760
    %v617 = vsub.f32 %v334, %v616
    %v618 = vand.u32 %v617, 4294901760
    %v619 = vsub.f32 %v617, %v618
    %v620 = vand.u32 %v619, 4294901760
    %621 = vmatpush.msra.mxu0 %v620
    %v622 = vand.u32 %v333, 4294901760
    %v623 = vsub.f32 %v333, %v622
    %v624 = vand.u32 %v623, 4294901760
    %v625 = vsub.f32 %v623, %v624
    %v626 = vand.u32 %v625, 4294901760
    %627 = vmatpush.msra.mxu0 %v626
    %v628 = vand.u32 %v332, 4294901760
    %v629 = vsub.f32 %v332, %v628
    %v630 = vand.u32 %v629, 4294901760
    %v631 = vsub.f32 %v629, %v630
    %v632 = vand.u32 %v631, 4294901760
    %633 = vmatpush.msra.mxu0 %v632
    %v634 = vand.u32 %v331, 4294901760
    %v635 = vsub.f32 %v331, %v634
    %v636 = vand.u32 %v635, 4294901760
    %v637 = vsub.f32 %v635, %v636
    %v638 = vand.u32 %v637, 4294901760
    %639 = vmatpush.msra.mxu0 %v638
    %v640 = vand.u32 %v330, 4294901760
    %v641 = vsub.f32 %v330, %v640
    %v642 = vand.u32 %v641, 4294901760
    %v643 = vsub.f32 %v641, %v642
    %v644 = vand.u32 %v643, 4294901760
    %645 = vmatpush.msra.mxu0 %v644
    %v646 = vand.u32 %v329, 4294901760
    %v647 = vsub.f32 %v329, %v646
    %v648 = vand.u32 %v647, 4294901760
    %v649 = vsub.f32 %v647, %v648
    %v650 = vand.u32 %v649, 4294901760
    %651 = vmatpush.msra.mxu0 %v650
    %v652 = vand.u32 %v328, 4294901760
    %v653 = vsub.f32 %v328, %v652
    %v654 = vand.u32 %v653, 4294901760
    %v655 = vsub.f32 %v653, %v654
    %v656 = vand.u32 %v655, 4294901760
    %657 = vmatpush.msra.mxu0 %v656
    %v658 = vand.u32 %v327, 4294901760
    %v659 = vsub.f32 %v327, %v658
    %v660 = vand.u32 %v659, 4294901760
    %v661 = vsub.f32 %v659, %v660
    %v662 = vand.u32 %v661, 4294901760
    %663 = vmatpush.msra.mxu0 %v662
    %v664 = vand.u32 %v573, 4294901760
    %665 = vmatmul.f32.gmra.mxu0 %v664
    %v666 = vpop.f32.mrf.mxu0
    %v667 = vadd.f32 %v606, %v666
    %668 = vdwg.mxu0
    %669 = vmatpush.msra.mxu0 0.0
    %670 = vmatpush.msra.mxu0 0.0
    %671 = vmatpush.msra.mxu0 0.0
    %672 = vmatpush.msra.mxu0 0.0
    %673 = vmatpush.msra.mxu0 0.0
    %674 = vmatpush.msra.mxu0 0.0
    %675 = vmatpush.msra.mxu0 0.0
    %676 = vmatpush.msra.mxu0 0.0
    %v677 = vand.u32 %v334, 4294901760
    %v678 = vsub.f32 %v334, %v677
    %679 = vmatpush.msra.mxu0 %v678
    %v680 = vand.u32 %v333, 4294901760
    %v681 = vsub.f32 %v333, %v680
    %682 = vmatpush.msra.mxu0 %v681
    %v683 = vand.u32 %v332, 4294901760
    %v684 = vsub.f32 %v332, %v683
    %685 = vmatpush.msra.mxu0 %v684
    %v686 = vand.u32 %v331, 4294901760
    %v687 = vsub.f32 %v331, %v686
    %688 = vmatpush.msra.mxu0 %v687
    %v689 = vand.u32 %v330, 4294901760
    %v690 = vsub.f32 %v330, %v689
    %691 = vmatpush.msra.mxu0 %v690
    %v692 = vand.u32 %v329, 4294901760
    %v693 = vsub.f32 %v329, %v692
    %694 = vmatpush.msra.mxu0 %v693
    %v695 = vand.u32 %v328, 4294901760
    %v696 = vsub.f32 %v328, %v695
    %697 = vmatpush.msra.mxu0 %v696
    %v698 = vand.u32 %v327, 4294901760
    %v699 = vsub.f32 %v327, %v698
    %700 = vmatpush.msra.mxu0 %v699
    %v701 = vand.u32 %v573, 4294901760
    %v702 = vsub.f32 %v573, %v701
    %703 = vmatmul.f32.gmra.mxu0 %v702
    %v704 = vpop.f32.mrf.mxu0
    %v705 = vadd.f32 %v667, %v704
    %706 = vdwg.mxu0
    %707 = vmatpush.msra.mxu0 0.0
    %708 = vmatpush.msra.mxu0 0.0
    %709 = vmatpush.msra.mxu0 0.0
    %710 = vmatpush.msra.mxu0 0.0
    %711 = vmatpush.msra.mxu0 0.0
    %712 = vmatpush.msra.mxu0 0.0
    %713 = vmatpush.msra.mxu0 0.0
    %714 = vmatpush.msra.mxu0 0.0
    %v715 = vand.u32 %v334, 4294901760
    %716 = vmatpush.msra.mxu0 %v715
    %v717 = vand.u32 %v333, 4294901760
    %718 = vmatpush.msra.mxu0 %v717
    %v719 = vand.u32 %v332, 4294901760
    %720 = vmatpush.msra.mxu0 %v719
    %v721 = vand.u32 %v331, 4294901760
    %722 = vmatpush.msra.mxu0 %v721
    %v723 = vand.u32 %v330, 4294901760
    %724 = vmatpush.msra.mxu0 %v723
    %v725 = vand.u32 %v329, 4294901760
    %726 = vmatpush.msra.mxu0 %v725
    %v727 = vand.u32 %v328, 4294901760
    %728 = vmatpush.msra.mxu0 %v727
    %v729 = vand.u32 %v327, 4294901760
    %730 = vmatpush.msra.mxu0 %v729
    %v731 = vand.u32 %v573, 4294901760
    %v732 = vsub.f32 %v573, %v731
    %v733 = vand.u32 %v732, 4294901760
    %734 = vmatmul.f32.gmra.mxu0 %v733
    %v735 = vpop.f32.mrf.mxu0
    %v736 = vadd.f32 %v705, %v735
    %737 = vdwg.mxu0
    %738 = vmatpush.msra.mxu0 0.0
    %739 = vmatpush.msra.mxu0 0.0
    %740 = vmatpush.msra.mxu0 0.0
    %741 = vmatpush.msra.mxu0 0.0
    %742 = vmatpush.msra.mxu0 0.0
    %743 = vmatpush.msra.mxu0 0.0
    %744 = vmatpush.msra.mxu0 0.0
    %745 = vmatpush.msra.mxu0 0.0
    %v746 = vand.u32 %v334, 4294901760
    %v747 = vsub.f32 %v334, %v746
    %v748 = vand.u32 %v747, 4294901760
    %749 = vmatpush.msra.mxu0 %v748
    %v750 = vand.u32 %v333, 4294901760
    %v751 = vsub.f32 %v333, %v750
    %v752 = vand.u32 %v751, 4294901760
    %753 = vmatpush.msra.mxu0 %v752
    %v754 = vand.u32 %v332, 4294901760
    %v755 = vsub.f32 %v332, %v754
    %v756 = vand.u32 %v755, 4294901760
    %757 = vmatpush.msra.mxu0 %v756
    %v758 = vand.u32 %v331, 4294901760
    %v759 = vsub.f32 %v331, %v758
    %v760 = vand.u32 %v759, 4294901760
    %761 = vmatpush.msra.mxu0 %v760
    %v762 = vand.u32 %v330, 4294901760
    %v763 = vsub.f32 %v330, %v762
    %v764 = vand.u32 %v763, 4294901760
    %765 = vmatpush.msra.mxu0 %v764
    %v766 = vand.u32 %v329, 4294901760
    %v767 = vsub.f32 %v329, %v766
    %v768 = vand.u32 %v767, 4294901760
    %769 = vmatpush.msra.mxu0 %v768
    %v770 = vand.u32 %v328, 4294901760
    %v771 = vsub.f32 %v328, %v770
    %v772 = vand.u32 %v771, 4294901760
    %773 = vmatpush.msra.mxu0 %v772
    %v774 = vand.u32 %v327, 4294901760
    %v775 = vsub.f32 %v327, %v774
    %v776 = vand.u32 %v775, 4294901760
    %777 = vmatpush.msra.mxu0 %v776
    %v778 = vand.u32 %v573, 4294901760
    %779 = vmatmul.f32.gmra.mxu0 %v778
    %v780 = vpop.f32.mrf.mxu0
    %v781 = vadd.f32 %v736, %v780
    %782 = vdwg.mxu0
    %783 = vmatpush.msra.mxu0 0.0
    %784 = vmatpush.msra.mxu0 0.0
    %785 = vmatpush.msra.mxu0 0.0
    %786 = vmatpush.msra.mxu0 0.0
    %787 = vmatpush.msra.mxu0 0.0
    %788 = vmatpush.msra.mxu0 0.0
    %789 = vmatpush.msra.mxu0 0.0
    %790 = vmatpush.msra.mxu0 0.0
    %v791 = vand.u32 %v334, 4294901760
    %792 = vmatpush.msra.mxu0 %v791
    %v793 = vand.u32 %v333, 4294901760
    %794 = vmatpush.msra.mxu0 %v793
    %v795 = vand.u32 %v332, 4294901760
    %796 = vmatpush.msra.mxu0 %v795
    %v797 = vand.u32 %v331, 4294901760
    %798 = vmatpush.msra.mxu0 %v797
    %v799 = vand.u32 %v330, 4294901760
    %800 = vmatpush.msra.mxu0 %v799
    %v801 = vand.u32 %v329, 4294901760
    %802 = vmatpush.msra.mxu0 %v801
    %v803 = vand.u32 %v328, 4294901760
    %804 = vmatpush.msra.mxu0 %v803
    %v805 = vand.u32 %v327, 4294901760
    %806 = vmatpush.msra.mxu0 %v805
    %v807 = vand.u32 %v573, 4294901760
    %808 = vmatmul.f32.gmra.mxu0 %v807
    %v809 = vpop.f32.mrf.mxu0
    %v810 = vadd.f32 %v781, %v809
    %811 = vdwg.mxu0
    %v812 = vsub.f32 0.0, %v810
    %v813 = vmul.f32 %v812, 1.442695
    %v814 = vpow.pop %v813
    %v815 = vadd.f32 %v814, 1.0
    %v816 = vrcp.pop %v815
    %v817 = vmul.f32 %v815, %v816
    %v818 = vsub.f32 1.0, %v817
    %v819 = vmul.f32 %v816, %v818
    %v820 = vadd.f32 %v816, %v819
    %vm821 = vweird.f32 %v815
    %vm822 = vweird.f32 %v816
    %vm823 = vmor %vm821, %vm822
    %v824 = vsel %vm823, %v816, %v820
    %v825 = vand.u32 2147483647, %v815
    %vm826 = vcmp.eq.f32.partialorder %v825, 8.507059e+37
    %v827 = vand.u32 %v815, 2147483648
    %v828 = vor.u32 1.1754944e-38, %v827
    %v829 = vsel %vm826, %v828, %v824
    %v830 = vmul.f32 1.0, %v829
    %v831 = vtanh.pop %v810
    %v832 = vmul.f32 %v830, 0.0
    %834 = vrot.lane.b32.xlu0 %v831, 64
    %v835 = vpop.permute.xlu0 %834
    %v837 = vmul.f32 %v830, %v835
    %839 = vrot.lane.b32.xlu0 %v837, 32
    %v840 = vpop.permute.xlu0 %839
    %v842 = vadd.f32 %v832, %v840
    %v843 = vtanh.pop %v842
    %845 = vrot.lane.b32.xlu0 %v843, 64
    %v846 = vpop.permute.xlu0 %845
    %v848 = vmul.f32 %v830, %v846
    %v850 = vperm.slane %v336, 0
    %851 = vrot.lane.b32.xlu0 %v850, 96
    %v852 = vpop.permute.xlu0 %851
    %v854 = vmul.f32 %v848, %v852
    %856 = vrot.lane.b32.xlu0 %v854, 32
    %v857 = vpop.permute.xlu0 %856
    %vm859 = vcmask 254976
    %v860 = vsel %vm859, %v857, 0.0
    %861 = vadd.xlane.f32.xlu0 %v860
    %v862 = vpop.xlane.xlu0 %861
    %vm863 = vcmask 1041408
    %v864 = vsel %vm863, %v862, -inf
    %v865 = vrot.slane %v864, 4
    %v866 = vmax.f32 %v864, %v865
    %v867 = vrot.slane %v866, 2
    %v868 = vmax.f32 %v866, %v867
    %v869 = vrot.slane %v868, 1
    %v870 = vmax.f32 %v868, %v869
    %v871 = vsub.f32 %v862, %v870
    %v872 = vmul.f32 %v871, 1.442695
    %v873 = vpow.pop %v872
    %v874 = vsel %vm863, %v873, 0.0
    %v875 = vrot.slane %v874, 4
    %v876 = vadd.f32 %v874, %v875
    %v877 = vrot.slane %v876, 2
    %v878 = vadd.f32 %v876, %v877
    %v879 = vrot.slane %v878, 1
    %v880 = vadd.f32 %v878, %v879
    %v881 = vrcp.pop %v880
    %v882 = vmul.f32 %v880, %v881
    %v883 = vsub.f32 1.0, %v882
    %v884 = vmul.f32 %v881, %v883
    %v885 = vadd.f32 %v881, %v884
    %vm886 = vweird.f32 %v880
    %vm887 = vweird.f32 %v881
    %vm888 = vmor %vm886, %vm887
    %v889 = vsel %vm888, %v881, %v885
    %v890 = vand.u32 2147483647, %v880
    %vm891 = vcmp.eq.f32.partialorder %v890, 8.507059e+37
    %v892 = vand.u32 %v880, 2147483648
    %v893 = vor.u32 1.1754944e-38, %v892
    %v894 = vsel %vm891, %v893, %v889
    %v895 = vmul.f32 %v873, %v894
    %v896 = vmul.f32 %v848, %v895
    %v897 = vadd.f32 %v896, 0.0
    %v898 = vsel %vm100, %v565, 0
    %900 = vmatpush.msra.mxu0 0.0
    %901 = vmatpush.msra.mxu0 0.0
    %902 = vmatpush.msra.mxu0 0.0
    %903 = vmatpush.msra.mxu0 0.0
    %904 = vmatpush.msra.mxu0 0.0
    %905 = vmatpush.msra.mxu0 0.0
    %906 = vmatpush.msra.mxu0 0.0
    %907 = vmatpush.msra.mxu0 0.0
    %908 = vmatpush.msra.mxu0 0.0
    %909 = vmatpush.msra.mxu0 0.0
    %910 = vmatpush.msra.mxu0 0.0
    %911 = vmatpush.msra.mxu0 0.0
    %v912 = vand.u32 %v326, 4294901760
    %913 = vmatpush.msra.mxu0 %v912
    %v914 = vand.u32 %v325, 4294901760
    %915 = vmatpush.msra.mxu0 %v914
    %v916 = vand.u32 %v324, 4294901760
    %917 = vmatpush.msra.mxu0 %v916
    %v918 = vand.u32 %v323, 4294901760
    %919 = vmatpush.msra.mxu0 %v918
    %v920 = vand.u32 %v898, 4294901760
    %v921 = vsub.f32 %v898, %v920
    %v922 = vand.u32 %v921, 4294901760
    %v923 = vsub.f32 %v921, %v922
    %v924 = vand.u32 %v923, 4294901760
    %925 = vmatmul.f32.gmra.mxu0 %v924
    %v926 = vpop.f32.mrf.mxu0
    %v927 = vadd.f32 0.0, %v926
    %928 = vdwg.mxu0
    %929 = vmatpush.msra.mxu0 0.0
    %930 = vmatpush.msra.mxu0 0.0
    %931 = vmatpush.msra.mxu0 0.0
    %932 = vmatpush.msra.mxu0 0.0
    %933 = vmatpush.msra.mxu0 0.0
    %934 = vmatpush.msra.mxu0 0.0
    %935 = vmatpush.msra.mxu0 0.0
    %936 = vmatpush.msra.mxu0 0.0
    %937 = vmatpush.msra.mxu0 0.0
    %938 = vmatpush.msra.mxu0 0.0
    %939 = vmatpush.msra.mxu0 0.0
    %940 = vmatpush.msra.mxu0 0.0
    %v941 = vand.u32 %v326, 4294901760
    %v942 = vsub.f32 %v326, %v941
    %v943 = vand.u32 %v942, 4294901760
    %v944 = vsub.f32 %v942, %v943
    %v945 = vand.u32 %v944, 4294901760
    %946 = vmatpush.msra.mxu0 %v945
    %v947 = vand.u32 %v325, 4294901760
    %v948 = vsub.f32 %v325, %v947
    %v949 = vand.u32 %v948, 4294901760
    %v950 = vsub.f32 %v948, %v949
    %v951 = vand.u32 %v950, 4294901760
    %952 = vmatpush.msra.mxu0 %v951
    %v953 = vand.u32 %v324, 4294901760
    %v954 = vsub.f32 %v324, %v953
    %v955 = vand.u32 %v954, 4294901760
    %v956 = vsub.f32 %v954, %v955
    %v957 = vand.u32 %v956, 4294901760
    %958 = vmatpush.msra.mxu0 %v957
    %v959 = vand.u32 %v323, 4294901760
    %v960 = vsub.f32 %v323, %v959
    %v961 = vand.u32 %v960, 4294901760
    %v962 = vsub.f32 %v960, %v961
    %v963 = vand.u32 %v962, 4294901760
    %964 = vmatpush.msra.mxu0 %v963
    %v965 = vand.u32 %v898, 4294901760
    %966 = vmatmul.f32.gmra.mxu0 %v965
    %v967 = vpop.f32.mrf.mxu0
    %v968 = vadd.f32 %v927, %v967
    %969 = vdwg.mxu0
    %970 = vmatpush.msra.mxu0 0.0
    %971 = vmatpush.msra.mxu0 0.0
    %972 = vmatpush.msra.mxu0 0.0
    %973 = vmatpush.msra.mxu0 0.0
    %974 = vmatpush.msra.mxu0 0.0
    %975 = vmatpush.msra.mxu0 0.0
    %976 = vmatpush.msra.mxu0 0.0
    %977 = vmatpush.msra.mxu0 0.0
    %978 = vmatpush.msra.mxu0 0.0
    %979 = vmatpush.msra.mxu0 0.0
    %980 = vmatpush.msra.mxu0 0.0
    %981 = vmatpush.msra.mxu0 0.0
    %v982 = vand.u32 %v326, 4294901760
    %v983 = vsub.f32 %v326, %v982
    %984 = vmatpush.msra.mxu0 %v983
    %v985 = vand.u32 %v325, 4294901760
    %v986 = vsub.f32 %v325, %v985
    %987 = vmatpush.msra.mxu0 %v986
    %v988 = vand.u32 %v324, 4294901760
    %v989 = vsub.f32 %v324, %v988
    %990 = vmatpush.msra.mxu0 %v989
    %v991 = vand.u32 %v323, 4294901760
    %v992 = vsub.f32 %v323, %v991
    %993 = vmatpush.msra.mxu0 %v992
    %v994 = vand.u32 %v898, 4294901760
    %v995 = vsub.f32 %v898, %v994
    %996 = vmatmul.f32.gmra.mxu0 %v995
    %v997 = vpop.f32.mrf.mxu0
    %v998 = vadd.f32 %v968, %v997
    %999 = vdwg.mxu0
    %1000 = vmatpush.msra.mxu0 0.0
    %1001 = vmatpush.msra.mxu0 0.0
    %1002 = vmatpush.msra.mxu0 0.0
    %1003 = vmatpush.msra.mxu0 0.0
    %1004 = vmatpush.msra.mxu0 0.0
    %1005 = vmatpush.msra.mxu0 0.0
    %1006 = vmatpush.msra.mxu0 0.0
    %1007 = vmatpush.msra.mxu0 0.0
    %1008 = vmatpush.msra.mxu0 0.0
    %1009 = vmatpush.msra.mxu0 0.0
    %1010 = vmatpush.msra.mxu0 0.0
    %1011 = vmatpush.msra.mxu0 0.0
    %v1012 = vand.u32 %v326, 4294901760
    %1013 = vmatpush.msra.mxu0 %v1012
    %v1014 = vand.u32 %v325, 4294901760
    %1015 = vmatpush.msra.mxu0 %v1014
    %v1016 = vand.u32 %v324, 4294901760
    %1017 = vmatpush.msra.mxu0 %v1016
    %v1018 = vand.u32 %v323, 4294901760
    %1019 = vmatpush.msra.mxu0 %v1018
    %v1020 = vand.u32 %v898, 4294901760
    %v1021 = vsub.f32 %v898, %v1020
    %v1022 = vand.u32 %v1021, 4294901760
    %1023 = vmatmul.f32.gmra.mxu0 %v1022
    %v1024 = vpop.f32.mrf.mxu0
    %v1025 = vadd.f32 %v998, %v1024
    %1026 = vdwg.mxu0
    %1027 = vmatpush.msra.mxu0 0.0
    %1028 = vmatpush.msra.mxu0 0.0
    %1029 = vmatpush.msra.mxu0 0.0
    %1030 = vmatpush.msra.mxu0 0.0
    %1031 = vmatpush.msra.mxu0 0.0
    %1032 = vmatpush.msra.mxu0 0.0
    %1033 = vmatpush.msra.mxu0 0.0
    %1034 = vmatpush.msra.mxu0 0.0
    %1035 = vmatpush.msra.mxu0 0.0
    %1036 = vmatpush.msra.mxu0 0.0
    %1037 = vmatpush.msra.mxu0 0.0
    %1038 = vmatpush.msra.mxu0 0.0
    %v1039 = vand.u32 %v326, 4294901760
    %v1040 = vsub.f32 %v326, %v1039
    %v1041 = vand.u32 %v1040, 4294901760
    %1042 = vmatpush.msra.mxu0 %v1041
    %v1043 = vand.u32 %v325, 4294901760
    %v1044 = vsub.f32 %v325, %v1043
    %v1045 = vand.u32 %v1044, 4294901760
    %1046 = vmatpush.msra.mxu0 %v1045
    %v1047 = vand.u32 %v324, 4294901760
    %v1048 = vsub.f32 %v324, %v1047
    %v1049 = vand.u32 %v1048, 4294901760
    %1050 = vmatpush.msra.mxu0 %v1049
    %v1051 = vand.u32 %v323, 4294901760
    %v1052 = vsub.f32 %v323, %v1051
    %v1053 = vand.u32 %v1052, 4294901760
    %1054 = vmatpush.msra.mxu0 %v1053
    %v1055 = vand.u32 %v898, 4294901760
    %1056 = vmatmul.f32.gmra.mxu0 %v1055
    %v1057 = vpop.f32.mrf.mxu0
    %v1058 = vadd.f32 %v1025, %v1057
    %1059 = vdwg.mxu0
    %1060 = vmatpush.msra.mxu0 0.0
    %1061 = vmatpush.msra.mxu0 0.0
    %1062 = vmatpush.msra.mxu0 0.0
    %1063 = vmatpush.msra.mxu0 0.0
    %1064 = vmatpush.msra.mxu0 0.0
    %1065 = vmatpush.msra.mxu0 0.0
    %1066 = vmatpush.msra.mxu0 0.0
    %1067 = vmatpush.msra.mxu0 0.0
    %1068 = vmatpush.msra.mxu0 0.0
    %1069 = vmatpush.msra.mxu0 0.0
    %1070 = vmatpush.msra.mxu0 0.0
    %1071 = vmatpush.msra.mxu0 0.0
    %v1072 = vand.u32 %v326, 4294901760
    %1073 = vmatpush.msra.mxu0 %v1072
    %v1074 = vand.u32 %v325, 4294901760
    %1075 = vmatpush.msra.mxu0 %v1074
    %v1076 = vand.u32 %v324, 4294901760
    %1077 = vmatpush.msra.mxu0 %v1076
    %v1078 = vand.u32 %v323, 4294901760
    %1079 = vmatpush.msra.mxu0 %v1078
    %v1080 = vand.u32 %v898, 4294901760
    %1081 = vmatmul.f32.gmra.mxu0 %v1080
    %v1082 = vpop.f32.mrf.mxu0
    %v1083 = vadd.f32 %v1058, %v1082
    %1084 = vdwg.mxu0
    %v1086 = vrot.slane %v1083, 6
    %v1088 = vadd.f32 %v317, %v1086
    %v1089 = vsub.f32 0.0, %v1088
    %v1090 = vmul.f32 %v1089, 1.442695
    %v1091 = vpow.pop %v1090
    %v1092 = vadd.f32 %v1091, 1.0
    %v1093 = vrcp.pop %v1092
    %v1094 = vmul.f32 %v1092, %v1093
    %v1095 = vsub.f32 1.0, %v1094
    %v1096 = vmul.f32 %v1093, %v1095
    %v1097 = vadd.f32 %v1093, %v1096
    %vm1098 = vweird.f32 %v1092
    %vm1099 = vweird.f32 %v1093
    %vm1100 = vmor %vm1098, %vm1099
    %v1101 = vsel %vm1100, %v1093, %v1097
    %v1102 = vand.u32 2147483647, %v1092
    %vm1103 = vcmp.eq.f32.partialorder %v1102, 8.507059e+37
    %v1104 = vand.u32 %v1092, 2147483648
    %v1105 = vor.u32 1.1754944e-38, %v1104
    %v1106 = vsel %vm1103, %v1105, %v1101
    %v1107 = vmul.f32 1.0, %v1106
    %v1108 = vtanh.pop %v1088
    %v1110 = vrot.slane %v556, 6
    %v1112 = vmul.f32 %v1107, %v1110
    %1114 = vrot.lane.b32.xlu0 %v1108, 64
    %v1115 = vpop.permute.xlu0 %1114
    %v1117 = vmul.f32 %v1107, %v1115
    %1119 = vrot.lane.b32.xlu0 %v1117, 32
    %v1120 = vpop.permute.xlu0 %1119
    %v1122 = vadd.f32 %v1112, %v1120
    %v1123 = vtanh.pop %v1122
    %1125 = vrot.lane.b32.xlu0 %v1123, 64
    %v1126 = vpop.permute.xlu0 %1125
    %v1128 = vmul.f32 %v1107, %v1126
    %1130 = vrot.lane.b32.xlu0 %v1128, 32
    %v1131 = vpop.permute.xlu0 %1130
    %v1134 = vrot.slane %v848, 6
    %1135 = vrot.lane.b32.xlu0 %v1134, 64
    %v1136 = vpop.permute.xlu0 %1135
    %v1138 = vsel %vm100, %v1131, %v1136
    %v1140 = vrot.slane %v1138, 2
    %v1141 = vsel %vm571, %v1140, 0
    %1143 = vmatpush.msra.mxu0 0.0
    %1144 = vmatpush.msra.mxu0 0.0
    %1145 = vmatpush.msra.mxu0 0.0
    %1146 = vmatpush.msra.mxu0 0.0
    %1147 = vmatpush.msra.mxu0 0.0
    %1148 = vmatpush.msra.mxu0 0.0
    %1149 = vmatpush.msra.mxu0 0.0
    %1150 = vmatpush.msra.mxu0 0.0
    %v1151 = vand.u32 %v334, 4294901760
    %1152 = vmatpush.msra.mxu0 %v1151
    %v1153 = vand.u32 %v333, 4294901760
    %1154 = vmatpush.msra.mxu0 %v1153
    %v1155 = vand.u32 %v332, 4294901760
    %1156 = vmatpush.msra.mxu0 %v1155
    %v1157 = vand.u32 %v331, 4294901760
    %1158 = vmatpush.msra.mxu0 %v1157
    %v1159 = vand.u32 %v330, 4294901760
    %1160 = vmatpush.msra.mxu0 %v1159
    %v1161 = vand.u32 %v329, 4294901760
    %1162 = vmatpush.msra.mxu0 %v1161
    %v1163 = vand.u32 %v328, 4294901760
    %1164 = vmatpush.msra.mxu0 %v1163
    %v1165 = vand.u32 %v327, 4294901760
    %1166 = vmatpush.msra.mxu0 %v1165
    %v1167 = vand.u32 %v1141, 4294901760
    %v1168 = vsub.f32 %v1141, %v1167
    %v1169 = vand.u32 %v1168, 4294901760
    %v1170 = vsub.f32 %v1168, %v1169
    %v1171 = vand.u32 %v1170, 4294901760
    %1172 = vmatmul.f32.gmra.mxu0 %v1171
    %v1173 = vpop.f32.mrf.mxu0
    %v1174 = vadd.f32 %v569, %v1173
    %1175 = vdwg.mxu0
    %1176 = vmatpush.msra.mxu0 0.0
    %1177 = vmatpush.msra.mxu0 0.0
    %1178 = vmatpush.msra.mxu0 0.0
    %1179 = vmatpush.msra.mxu0 0.0
    %1180 = vmatpush.msra.mxu0 0.0
    %1181 = vmatpush.msra.mxu0 0.0
    %1182 = vmatpush.msra.mxu0 0.0
    %1183 = vmatpush.msra.mxu0 0.0
    %v1184 = vand.u32 %v334, 4294901760
    %v1185 = vsub.f32 %v334, %v1184
    %v1186 = vand.u32 %v1185, 4294901760
    %v1187 = vsub.f32 %v1185, %v1186
    %v1188 = vand.u32 %v1187, 4294901760
    %1189 = vmatpush.msra.mxu0 %v1188
    %v1190 = vand.u32 %v333, 4294901760
    %v1191 = vsub.f32 %v333, %v1190
    %v1192 = vand.u32 %v1191, 4294901760
    %v1193 = vsub.f32 %v1191, %v1192
    %v1194 = vand.u32 %v1193, 4294901760
    %1195 = vmatpush.msra.mxu0 %v1194
    %v1196 = vand.u32 %v332, 4294901760
    %v1197 = vsub.f32 %v332, %v1196
    %v1198 = vand.u32 %v1197, 4294901760
    %v1199 = vsub.f32 %v1197, %v1198
    %v1200 = vand.u32 %v1199, 4294901760
    %1201 = vmatpush.msra.mxu0 %v1200
    %v1202 = vand.u32 %v331, 4294901760
    %v1203 = vsub.f32 %v331, %v1202
    %v1204 = vand.u32 %v1203, 4294901760
    %v1205 = vsub.f32 %v1203, %v1204
    %v1206 = vand.u32 %v1205, 4294901760
    %1207 = vmatpush.msra.mxu0 %v1206
    %v1208 = vand.u32 %v330, 4294901760
    %v1209 = vsub.f32 %v330, %v1208
    %v1210 = vand.u32 %v1209, 4294901760
    %v1211 = vsub.f32 %v1209, %v1210
    %v1212 = vand.u32 %v1211, 4294901760
    %1213 = vmatpush.msra.mxu0 %v1212
    %v1214 = vand.u32 %v329, 4294901760
    %v1215 = vsub.f32 %v329, %v1214
    %v1216 = vand.u32 %v1215, 4294901760
    %v1217 = vsub.f32 %v1215, %v1216
    %v1218 = vand.u32 %v1217, 4294901760
    %1219 = vmatpush.msra.mxu0 %v1218
    %v1220 = vand.u32 %v328, 4294901760
    %v1221 = vsub.f32 %v328, %v1220
    %v1222 = vand.u32 %v1221, 4294901760
    %v1223 = vsub.f32 %v1221, %v1222
    %v1224 = vand.u32 %v1223, 4294901760
    %1225 = vmatpush.msra.mxu0 %v1224
    %v1226 = vand.u32 %v327, 4294901760
    %v1227 = vsub.f32 %v327, %v1226
    %v1228 = vand.u32 %v1227, 4294901760
    %v1229 = vsub.f32 %v1227, %v1228
    %v1230 = vand.u32 %v1229, 4294901760
    %1231 = vmatpush.msra.mxu0 %v1230
    %v1232 = vand.u32 %v1141, 4294901760
    %1233 = vmatmul.f32.gmra.mxu0 %v1232
    %v1234 = vpop.f32.mrf.mxu0
    %v1235 = vadd.f32 %v1174, %v1234
    %1236 = vdwg.mxu0
    %1237 = vmatpush.msra.mxu0 0.0
    %1238 = vmatpush.msra.mxu0 0.0
    %1239 = vmatpush.msra.mxu0 0.0
    %1240 = vmatpush.msra.mxu0 0.0
    %1241 = vmatpush.msra.mxu0 0.0
    %1242 = vmatpush.msra.mxu0 0.0
    %1243 = vmatpush.msra.mxu0 0.0
    %1244 = vmatpush.msra.mxu0 0.0
    %v1245 = vand.u32 %v334, 4294901760
    %v1246 = vsub.f32 %v334, %v1245
    %1247 = vmatpush.msra.mxu0 %v1246
    %v1248 = vand.u32 %v333, 4294901760
    %v1249 = vsub.f32 %v333, %v1248
    %1250 = vmatpush.msra.mxu0 %v1249
    %v1251 = vand.u32 %v332, 4294901760
    %v1252 = vsub.f32 %v332, %v1251
    %1253 = vmatpush.msra.mxu0 %v1252
    %v1254 = vand.u32 %v331, 4294901760
    %v1255 = vsub.f32 %v331, %v1254
    %1256 = vmatpush.msra.mxu0 %v1255
    %v1257 = vand.u32 %v330, 4294901760
    %v1258 = vsub.f32 %v330, %v1257
    %1259 = vmatpush.msra.mxu0 %v1258
    %v1260 = vand.u32 %v329, 4294901760
    %v1261 = vsub.f32 %v329, %v1260
    %1262 = vmatpush.msra.mxu0 %v1261
    %v1263 = vand.u32 %v328, 4294901760
    %v1264 = vsub.f32 %v328, %v1263
    %1265 = vmatpush.msra.mxu0 %v1264
    %v1266 = vand.u32 %v327, 4294901760
    %v1267 = vsub.f32 %v327, %v1266
    %1268 = vmatpush.msra.mxu0 %v1267
    %v1269 = vand.u32 %v1141, 4294901760
    %v1270 = vsub.f32 %v1141, %v1269
    %1271 = vmatmul.f32.gmra.mxu0 %v1270
    %v1272 = vpop.f32.mrf.mxu0
    %v1273 = vadd.f32 %v1235, %v1272
    %1274 = vdwg.mxu0
    %1275 = vmatpush.msra.mxu0 0.0
    %1276 = vmatpush.msra.mxu0 0.0
    %1277 = vmatpush.msra.mxu0 0.0
    %1278 = vmatpush.msra.mxu0 0.0
    %1279 = vmatpush.msra.mxu0 0.0
    %1280 = vmatpush.msra.mxu0 0.0
    %1281 = vmatpush.msra.mxu0 0.0
    %1282 = vmatpush.msra.mxu0 0.0
    %v1283 = vand.u32 %v334, 4294901760
    %1284 = vmatpush.msra.mxu0 %v1283
    %v1285 = vand.u32 %v333, 4294901760
    %1286 = vmatpush.msra.mxu0 %v1285
    %v1287 = vand.u32 %v332, 4294901760
    %1288 = vmatpush.msra.mxu0 %v1287
    %v1289 = vand.u32 %v331, 4294901760
    %1290 = vmatpush.msra.mxu0 %v1289
    %v1291 = vand.u32 %v330, 4294901760
    %1292 = vmatpush.msra.mxu0 %v1291
    %v1293 = vand.u32 %v329, 4294901760
    %1294 = vmatpush.msra.mxu0 %v1293
    %v1295 = vand.u32 %v328, 4294901760
    %1296 = vmatpush.msra.mxu0 %v1295
    %v1297 = vand.u32 %v327, 4294901760
    %1298 = vmatpush.msra.mxu0 %v1297
    %v1299 = vand.u32 %v1141, 4294901760
    %v1300 = vsub.f32 %v1141, %v1299
    %v1301 = vand.u32 %v1300, 4294901760
    %1302 = vmatmul.f32.gmra.mxu0 %v1301
    %v1303 = vpop.f32.mrf.mxu0
    %v1304 = vadd.f32 %v1273, %v1303
    %1305 = vdwg.mxu0
    %1306 = vmatpush.msra.mxu0 0.0
    %1307 = vmatpush.msra.mxu0 0.0
    %1308 = vmatpush.msra.mxu0 0.0
    %1309 = vmatpush.msra.mxu0 0.0
    %1310 = vmatpush.msra.mxu0 0.0
    %1311 = vmatpush.msra.mxu0 0.0
    %1312 = vmatpush.msra.mxu0 0.0
    %1313 = vmatpush.msra.mxu0 0.0
    %v1314 = vand.u32 %v334, 4294901760
    %v1315 = vsub.f32 %v334, %v1314
    %v1316 = vand.u32 %v1315, 4294901760
    %1317 = vmatpush.msra.mxu0 %v1316
    %v1318 = vand.u32 %v333, 4294901760
    %v1319 = vsub.f32 %v333, %v1318
    %v1320 = vand.u32 %v1319, 4294901760
    %1321 = vmatpush.msra.mxu0 %v1320
    %v1322 = vand.u32 %v332, 4294901760
    %v1323 = vsub.f32 %v332, %v1322
    %v1324 = vand.u32 %v1323, 4294901760
    %1325 = vmatpush.msra.mxu0 %v1324
    %v1326 = vand.u32 %v331, 4294901760
    %v1327 = vsub.f32 %v331, %v1326
    %v1328 = vand.u32 %v1327, 4294901760
    %1329 = vmatpush.msra.mxu0 %v1328
    %v1330 = vand.u32 %v330, 4294901760
    %v1331 = vsub.f32 %v330, %v1330
    %v1332 = vand.u32 %v1331, 4294901760
    %1333 = vmatpush.msra.mxu0 %v1332
    %v1334 = vand.u32 %v329, 4294901760
    %v1335 = vsub.f32 %v329, %v1334
    %v1336 = vand.u32 %v1335, 4294901760
    %1337 = vmatpush.msra.mxu0 %v1336
    %v1338 = vand.u32 %v328, 4294901760
    %v1339 = vsub.f32 %v328, %v1338
    %v1340 = vand.u32 %v1339, 4294901760
    %1341 = vmatpush.msra.mxu0 %v1340
    %v1342 = vand.u32 %v327, 4294901760
    %v1343 = vsub.f32 %v327, %v1342
    %v1344 = vand.u32 %v1343, 4294901760
    %1345 = vmatpush.msra.mxu0 %v1344
    %v1346 = vand.u32 %v1141, 4294901760
    %1347 = vmatmul.f32.gmra.mxu0 %v1346
    %v1348 = vpop.f32.mrf.mxu0
    %v1349 = vadd.f32 %v1304, %v1348
    %1350 = vdwg.mxu0
    %1351 = vmatpush.msra.mxu0 0.0
    %1352 = vmatpush.msra.mxu0 0.0
    %1353 = vmatpush.msra.mxu0 0.0
    %1354 = vmatpush.msra.mxu0 0.0
    %1355 = vmatpush.msra.mxu0 0.0
    %1356 = vmatpush.msra.mxu0 0.0
    %1357 = vmatpush.msra.mxu0 0.0
    %1358 = vmatpush.msra.mxu0 0.0
    %v1359 = vand.u32 %v334, 4294901760
    %1360 = vmatpush.msra.mxu0 %v1359
    %v1361 = vand.u32 %v333, 4294901760
    %1362 = vmatpush.msra.mxu0 %v1361
    %v1363 = vand.u32 %v332, 4294901760
    %1364 = vmatpush.msra.mxu0 %v1363
    %v1365 = vand.u32 %v331, 4294901760
    %1366 = vmatpush.msra.mxu0 %v1365
    %v1367 = vand.u32 %v330, 4294901760
    %1368 = vmatpush.msra.mxu0 %v1367
    %v1369 = vand.u32 %v329, 4294901760
    %1370 = vmatpush.msra.mxu0 %v1369
    %v1371 = vand.u32 %v328, 4294901760
    %1372 = vmatpush.msra.mxu0 %v1371
    %v1373 = vand.u32 %v327, 4294901760
    %1374 = vmatpush.msra.mxu0 %v1373
    %v1375 = vand.u32 %v1141, 4294901760
    %1376 = vmatmul.f32.gmra.mxu0 %v1375
    %v1377 = vpop.f32.mrf.mxu0
    %v1378 = vadd.f32 %v1349, %v1377
    %1379 = vdwg.mxu0
    %v1380 = vsub.f32 0.0, %v1378
    %v1381 = vmul.f32 %v1380, 1.442695
    %v1382 = vpow.pop %v1381
    %v1383 = vadd.f32 %v1382, 1.0
    %v1384 = vrcp.pop %v1383
    %v1385 = vmul.f32 %v1383, %v1384
    %v1386 = vsub.f32 1.0, %v1385
    %v1387 = vmul.f32 %v1384, %v1386
    %v1388 = vadd.f32 %v1384, %v1387
    %vm1389 = vweird.f32 %v1383
    %vm1390 = vweird.f32 %v1384
    %vm1391 = vmor %vm1389, %vm1390
    %v1392 = vsel %vm1391, %v1384, %v1388
    %v1393 = vand.u32 2147483647, %v1383
    %vm1394 = vcmp.eq.f32.partialorder %v1393, 8.507059e+37
    %v1395 = vand.u32 %v1383, 2147483648
    %v1396 = vor.u32 1.1754944e-38, %v1395
    %v1397 = vsel %vm1394, %v1396, %v1392
    %v1398 = vmul.f32 1.0, %v1397
    %v1399 = vtanh.pop %v1378
    %v1400 = vmul.f32 %v1398, %v842
    %1402 = vrot.lane.b32.xlu0 %v1399, 64
    %v1403 = vpop.permute.xlu0 %1402
    %v1405 = vmul.f32 %v1398, %v1403
    %1407 = vrot.lane.b32.xlu0 %v1405, 32
    %v1408 = vpop.permute.xlu0 %1407
    %v1410 = vadd.f32 %v1400, %v1408
    %v1411 = vtanh.pop %v1410
    %1413 = vrot.lane.b32.xlu0 %v1411, 64
    %v1414 = vpop.permute.xlu0 %1413
    %v1416 = vmul.f32 %v1398, %v1414
    %v1417 = vmul.f32 %v1416, %v852
    %1419 = vrot.lane.b32.xlu0 %v1417, 32
    %v1420 = vpop.permute.xlu0 %1419
    %v1422 = vsel %vm859, %v1420, 0.0
    %1423 = vadd.xlane.f32.xlu0 %v1422
    %v1424 = vpop.xlane.xlu0 %1423
    %v1425 = vsel %vm863, %v1424, -inf
    %v1426 = vrot.slane %v1425, 4
    %v1427 = vmax.f32 %v1425, %v1426
    %v1428 = vrot.slane %v1427, 2
    %v1429 = vmax.f32 %v1427, %v1428
    %v1430 = vrot.slane %v1429, 1
    %v1431 = vmax.f32 %v1429, %v1430
    %v1432 = vsub.f32 %v1424, %v1431
    %v1433 = vmul.f32 %v1432, 1.442695
    %v1434 = vpow.pop %v1433
    %v1435 = vsel %vm863, %v1434, 0.0
    %v1436 = vrot.slane %v1435, 4
    %v1437 = vadd.f32 %v1435, %v1436
    %v1438 = vrot.slane %v1437, 2
    %v1439 = vadd.f32 %v1437, %v1438
    %v1440 = vrot.slane %v1439, 1
    %v1441 = vadd.f32 %v1439, %v1440
    %v1442 = vrcp.pop %v1441
    %v1443 = vmul.f32 %v1441, %v1442
    %v1444 = vsub.f32 1.0, %v1443
    %v1445 = vmul.f32 %v1442, %v1444
    %v1446 = vadd.f32 %v1442, %v1445
    %vm1447 = vweird.f32 %v1441
    %vm1448 = vweird.f32 %v1442
    %vm1449 = vmor %vm1447, %vm1448
    %v1450 = vsel %vm1449, %v1442, %v1446
    %v1451 = vand.u32 2147483647, %v1441
    %vm1452 = vcmp.eq.f32.partialorder %v1451, 8.507059e+37
    %v1453 = vand.u32 %v1441, 2147483648
    %v1454 = vor.u32 1.1754944e-38, %v1453
    %v1455 = vsel %vm1452, %v1454, %v1450
    %v1456 = vmul.f32 %v1434, %v1455
    %v1457 = vmul.f32 %v1416, %v1456
    %v1458 = vadd.f32 %v897, %v1457
    %v1459 = vrot.slane %v1128, 2
    %1460 = vrot.lane.b32.xlu0 %v1459, 32
    %v1461 = vpop.permute.xlu0 %1460
    %v1462 = vsel %vm100, %v1461, 0
    %1464 = vmatpush.msra.mxu0 0.0
    %1465 = vmatpush.msra.mxu0 0.0
    %1466 = vmatpush.msra.mxu0 0.0
    %1467 = vmatpush.msra.mxu0 0.0
    %1468 = vmatpush.msra.mxu0 0.0
    %1469 = vmatpush.msra.mxu0 0.0
    %1470 = vmatpush.msra.mxu0 0.0
    %1471 = vmatpush.msra.mxu0 0.0
    %1472 = vmatpush.msra.mxu0 0.0
    %1473 = vmatpush.msra.mxu0 0.0
    %1474 = vmatpush.msra.mxu0 0.0
    %1475 = vmatpush.msra.mxu0 0.0
    %v1476 = vand.u32 %v326, 4294901760
    %1477 = vmatpush.msra.mxu0 %v1476
    %v1478 = vand.u32 %v325, 4294901760
    %1479 = vmatpush.msra.mxu0 %v1478
    %v1480 = vand.u32 %v324, 4294901760
    %1481 = vmatpush.msra.mxu0 %v1480
    %v1482 = vand.u32 %v323, 4294901760
    %1483 = vmatpush.msra.mxu0 %v1482
    %v1484 = vand.u32 %v1462, 4294901760
    %v1485 = vsub.f32 %v1462, %v1484
    %v1486 = vand.u32 %v1485, 4294901760
    %v1487 = vsub.f32 %v1485, %v1486
    %v1488 = vand.u32 %v1487, 4294901760
    %1489 = vmatmul.f32.gmra.mxu0 %v1488
    %v1490 = vpop.f32.mrf.mxu0
    %v1491 = vadd.f32 0.0, %v1490
    %1492 = vdwg.mxu0
    %1493 = vmatpush.msra.mxu0 0.0
    %1494 = vmatpush.msra.mxu0 0.0
    %1495 = vmatpush.msra.mxu0 0.0
    %1496 = vmatpush.msra.mxu0 0.0
    %1497 = vmatpush.msra.mxu0 0.0
    %1498 = vmatpush.msra.mxu0 0.0
    %1499 = vmatpush.msra.mxu0 0.0
    %1500 = vmatpush.msra.mxu0 0.0
    %1501 = vmatpush.msra.mxu0 0.0
    %1502 = vmatpush.msra.mxu0 0.0
    %1503 = vmatpush.msra.mxu0 0.0
    %1504 = vmatpush.msra.mxu0 0.0
    %v1505 = vand.u32 %v326, 4294901760
    %v1506 = vsub.f32 %v326, %v1505
    %v1507 = vand.u32 %v1506, 4294901760
    %v1508 = vsub.f32 %v1506, %v1507
    %v1509 = vand.u32 %v1508, 4294901760
    %1510 = vmatpush.msra.mxu0 %v1509
    %v1511 = vand.u32 %v325, 4294901760
    %v1512 = vsub.f32 %v325, %v1511
    %v1513 = vand.u32 %v1512, 4294901760
    %v1514 = vsub.f32 %v1512, %v1513
    %v1515 = vand.u32 %v1514, 4294901760
    %1516 = vmatpush.msra.mxu0 %v1515
    %v1517 = vand.u32 %v324, 4294901760
    %v1518 = vsub.f32 %v324, %v1517
    %v1519 = vand.u32 %v1518, 4294901760
    %v1520 = vsub.f32 %v1518, %v1519
    %v1521 = vand.u32 %v1520, 4294901760
    %1522 = vmatpush.msra.mxu0 %v1521
    %v1523 = vand.u32 %v323, 4294901760
    %v1524 = vsub.f32 %v323, %v1523
    %v1525 = vand.u32 %v1524, 4294901760
    %v1526 = vsub.f32 %v1524, %v1525
    %v1527 = vand.u32 %v1526, 4294901760
    %1528 = vmatpush.msra.mxu0 %v1527
    %v1529 = vand.u32 %v1462, 4294901760
    %1530 = vmatmul.f32.gmra.mxu0 %v1529
    %v1531 = vpop.f32.mrf.mxu0
    %v1532 = vadd.f32 %v1491, %v1531
    %1533 = vdwg.mxu0
    %1534 = vmatpush.msra.mxu0 0.0
    %1535 = vmatpush.msra.mxu0 0.0
    %1536 = vmatpush.msra.mxu0 0.0
    %1537 = vmatpush.msra.mxu0 0.0
    %1538 = vmatpush.msra.mxu0 0.0
    %1539 = vmatpush.msra.mxu0 0.0
    %1540 = vmatpush.msra.mxu0 0.0
    %1541 = vmatpush.msra.mxu0 0.0
    %1542 = vmatpush.msra.mxu0 0.0
    %1543 = vmatpush.msra.mxu0 0.0
    %1544 = vmatpush.msra.mxu0 0.0
    %1545 = vmatpush.msra.mxu0 0.0
    %v1546 = vand.u32 %v326, 4294901760
    %v1547 = vsub.f32 %v326, %v1546
    %1548 = vmatpush.msra.mxu0 %v1547
    %v1549 = vand.u32 %v325, 4294901760
    %v1550 = vsub.f32 %v325, %v1549
    %1551 = vmatpush.msra.mxu0 %v1550
    %v1552 = vand.u32 %v324, 4294901760
    %v1553 = vsub.f32 %v324, %v1552
    %1554 = vmatpush.msra.mxu0 %v1553
    %v1555 = vand.u32 %v323, 4294901760
    %v1556 = vsub.f32 %v323, %v1555
    %1557 = vmatpush.msra.mxu0 %v1556
    %v1558 = vand.u32 %v1462, 4294901760
    %v1559 = vsub.f32 %v1462, %v1558
    %1560 = vmatmul.f32.gmra.mxu0 %v1559
    %v1561 = vpop.f32.mrf.mxu0
    %v1562 = vadd.f32 %v1532, %v1561
    %1563 = vdwg.mxu0
    %1564 = vmatpush.msra.mxu0 0.0
    %1565 = vmatpush.msra.mxu0 0.0
    %1566 = vmatpush.msra.mxu0 0.0
    %1567 = vmatpush.msra.mxu0 0.0
    %1568 = vmatpush.msra.mxu0 0.0
    %1569 = vmatpush.msra.mxu0 0.0
    %1570 = vmatpush.msra.mxu0 0.0
    %1571 = vmatpush.msra.mxu0 0.0
    %1572 = vmatpush.msra.mxu0 0.0
    %1573 = vmatpush.msra.mxu0 0.0
    %1574 = vmatpush.msra.mxu0 0.0
    %1575 = vmatpush.msra.mxu0 0.0
    %v1576 = vand.u32 %v326, 4294901760
    %1577 = vmatpush.msra.mxu0 %v1576
    %v1578 = vand.u32 %v325, 4294901760
    %1579 = vmatpush.msra.mxu0 %v1578
    %v1580 = vand.u32 %v324, 4294901760
    %1581 = vmatpush.msra.mxu0 %v1580
    %v1582 = vand.u32 %v323, 4294901760
    %1583 = vmatpush.msra.mxu0 %v1582
    %v1584 = vand.u32 %v1462, 4294901760
    %v1585 = vsub.f32 %v1462, %v1584
    %v1586 = vand.u32 %v1585, 4294901760
    %1587 = vmatmul.f32.gmra.mxu0 %v1586
    %v1588 = vpop.f32.mrf.mxu0
    %v1589 = vadd.f32 %v1562, %v1588
    %1590 = vdwg.mxu0
    %1591 = vmatpush.msra.mxu0 0.0
    %1592 = vmatpush.msra.mxu0 0.0
    %1593 = vmatpush.msra.mxu0 0.0
    %1594 = vmatpush.msra.mxu0 0.0
    %1595 = vmatpush.msra.mxu0 0.0
    %1596 = vmatpush.msra.mxu0 0.0
    %1597 = vmatpush.msra.mxu0 0.0
    %1598 = vmatpush.msra.mxu0 0.0
    %1599 = vmatpush.msra.mxu0 0.0
    %1600 = vmatpush.msra.mxu0 0.0
    %1601 = vmatpush.msra.mxu0 0.0
    %1602 = vmatpush.msra.mxu0 0.0
    %v1603 = vand.u32 %v326, 4294901760
    %v1604 = vsub.f32 %v326, %v1603
    %v1605 = vand.u32 %v1604, 4294901760
    %1606 = vmatpush.msra.mxu0 %v1605
    %v1607 = vand.u32 %v325, 4294901760
    %v1608 = vsub.f32 %v325, %v1607
    %v1609 = vand.u32 %v1608, 4294901760
    %1610 = vmatpush.msra.mxu0 %v1609
    %v1611 = vand.u32 %v324, 4294901760
    %v1612 = vsub.f32 %v324, %v1611
    %v1613 = vand.u32 %v1612, 4294901760
    %1614 = vmatpush.msra.mxu0 %v1613
    %v1615 = vand.u32 %v323, 4294901760
    %v1616 = vsub.f32 %v323, %v1615
    %v1617 = vand.u32 %v1616, 4294901760
    %1618 = vmatpush.msra.mxu0 %v1617
    %v1619 = vand.u32 %v1462, 4294901760
    %1620 = vmatmul.f32.gmra.mxu0 %v1619
    %v1621 = vpop.f32.mrf.mxu0
    %v1622 = vadd.f32 %v1589, %v1621
    %1623 = vdwg.mxu0
    %1624 = vmatpush.msra.mxu0 0.0
    %1625 = vmatpush.msra.mxu0 0.0
    %1626 = vmatpush.msra.mxu0 0.0
    %1627 = vmatpush.msra.mxu0 0.0
    %1628 = vmatpush.msra.mxu0 0.0
    %1629 = vmatpush.msra.mxu0 0.0
    %1630 = vmatpush.msra.mxu0 0.0
    %1631 = vmatpush.msra.mxu0 0.0
    %1632 = vmatpush.msra.mxu0 0.0
    %1633 = vmatpush.msra.mxu0 0.0
    %1634 = vmatpush.msra.mxu0 0.0
    %1635 = vmatpush.msra.mxu0 0.0
    %v1636 = vand.u32 %v326, 4294901760
    %1637 = vmatpush.msra.mxu0 %v1636
    %v1638 = vand.u32 %v325, 4294901760
    %1639 = vmatpush.msra.mxu0 %v1638
    %v1640 = vand.u32 %v324, 4294901760
    %1641 = vmatpush.msra.mxu0 %v1640
    %v1642 = vand.u32 %v323, 4294901760
    %1643 = vmatpush.msra.mxu0 %v1642
    %v1644 = vand.u32 %v1462, 4294901760
    %1645 = vmatmul.f32.gmra.mxu0 %v1644
    %v1646 = vpop.f32.mrf.mxu0
    %v1647 = vadd.f32 %v1622, %v1646
    %1648 = vdwg.mxu0
    %v1650 = vrot.slane %v1647, 4
    %v1652 = vadd.f32 %v317, %v1650
    %v1653 = vsub.f32 0.0, %v1652
    %v1654 = vmul.f32 %v1653, 1.442695
    %v1655 = vpow.pop %v1654
    %v1656 = vadd.f32 %v1655, 1.0
    %v1657 = vrcp.pop %v1656
    %v1658 = vmul.f32 %v1656, %v1657
    %v1659 = vsub.f32 1.0, %v1658
    %v1660 = vmul.f32 %v1657, %v1659
    %v1661 = vadd.f32 %v1657, %v1660
    %vm1662 = vweird.f32 %v1656
    %vm1663 = vweird.f32 %v1657
    %vm1664 = vmor %vm1662, %vm1663
    %v1665 = vsel %vm1664, %v1657, %v1661
    %v1666 = vand.u32 2147483647, %v1656
    %vm1667 = vcmp.eq.f32.partialorder %v1666, 8.507059e+37
    %v1668 = vand.u32 %v1656, 2147483648
    %v1669 = vor.u32 1.1754944e-38, %v1668
    %v1670 = vsel %vm1667, %v1669, %v1665
    %v1671 = vmul.f32 1.0, %v1670
    %v1672 = vtanh.pop %v1652
    %v1674 = vrot.slane %v1122, 6
    %v1676 = vmul.f32 %v1671, %v1674
    %1678 = vrot.lane.b32.xlu0 %v1672, 64
    %v1679 = vpop.permute.xlu0 %1678
    %v1681 = vmul.f32 %v1671, %v1679
    %1683 = vrot.lane.b32.xlu0 %v1681, 32
    %v1684 = vpop.permute.xlu0 %1683
    %v1686 = vadd.f32 %v1676, %v1684
    %v1687 = vtanh.pop %v1686
    %1689 = vrot.lane.b32.xlu0 %v1687, 64
    %v1690 = vpop.permute.xlu0 %1689
    %v1692 = vmul.f32 %v1671, %v1690
    %1694 = vrot.lane.b32.xlu0 %v1692, 32
    %v1695 = vpop.permute.xlu0 %1694
    %v1698 = vrot.slane %v1416, 4
    %1699 = vrot.lane.b32.xlu0 %v1698, 64
    %v1700 = vpop.permute.xlu0 %1699
    %v1702 = vsel %vm100, %v1695, %v1700
    %v1704 = vrot.slane %v1702, 4
    %v1705 = vsel %vm571, %v1704, 0
    %1707 = vmatpush.msra.mxu0 0.0
    %1708 = vmatpush.msra.mxu0 0.0
    %1709 = vmatpush.msra.mxu0 0.0
    %1710 = vmatpush.msra.mxu0 0.0
    %1711 = vmatpush.msra.mxu0 0.0
    %1712 = vmatpush.msra.mxu0 0.0
    %1713 = vmatpush.msra.mxu0 0.0
    %1714 = vmatpush.msra.mxu0 0.0
    %v1715 = vand.u32 %v334, 4294901760
    %1716 = vmatpush.msra.mxu0 %v1715
    %v1717 = vand.u32 %v333, 4294901760
    %1718 = vmatpush.msra.mxu0 %v1717
    %v1719 = vand.u32 %v332, 4294901760
    %1720 = vmatpush.msra.mxu0 %v1719
    %v1721 = vand.u32 %v331, 4294901760
    %1722 = vmatpush.msra.mxu0 %v1721
    %v1723 = vand.u32 %v330, 4294901760
    %1724 = vmatpush.msra.mxu0 %v1723
    %v1725 = vand.u32 %v329, 4294901760
    %1726 = vmatpush.msra.mxu0 %v1725
    %v1727 = vand.u32 %v328, 4294901760
    %1728 = vmatpush.msra.mxu0 %v1727
    %v1729 = vand.u32 %v327, 4294901760
    %1730 = vmatpush.msra.mxu0 %v1729
    %v1731 = vand.u32 %v1705, 4294901760
    %v1732 = vsub.f32 %v1705, %v1731
    %v1733 = vand.u32 %v1732, 4294901760
    %v1734 = vsub.f32 %v1732, %v1733
    %v1735 = vand.u32 %v1734, 4294901760
    %1736 = vmatmul.f32.gmra.mxu0 %v1735
    %v1737 = vpop.f32.mrf.mxu0
    %v1738 = vadd.f32 %v569, %v1737
    %1739 = vdwg.mxu0
    %1740 = vmatpush.msra.mxu0 0.0
    %1741 = vmatpush.msra.mxu0 0.0
    %1742 = vmatpush.msra.mxu0 0.0
    %1743 = vmatpush.msra.mxu0 0.0
    %1744 = vmatpush.msra.mxu0 0.0
    %1745 = vmatpush.msra.mxu0 0.0
    %1746 = vmatpush.msra.mxu0 0.0
    %1747 = vmatpush.msra.mxu0 0.0
    %v1748 = vand.u32 %v334, 4294901760
    %v1749 = vsub.f32 %v334, %v1748
    %v1750 = vand.u32 %v1749, 4294901760
    %v1751 = vsub.f32 %v1749, %v1750
    %v1752 = vand.u32 %v1751, 4294901760
    %1753 = vmatpush.msra.mxu0 %v1752
    %v1754 = vand.u32 %v333, 4294901760
    %v1755 = vsub.f32 %v333, %v1754
    %v1756 = vand.u32 %v1755, 4294901760
    %v1757 = vsub.f32 %v1755, %v1756
    %v1758 = vand.u32 %v1757, 4294901760
    %1759 = vmatpush.msra.mxu0 %v1758
    %v1760 = vand.u32 %v332, 4294901760
    %v1761 = vsub.f32 %v332, %v1760
    %v1762 = vand.u32 %v1761, 4294901760
    %v1763 = vsub.f32 %v1761, %v1762
    %v1764 = vand.u32 %v1763, 4294901760
    %1765 = vmatpush.msra.mxu0 %v1764
    %v1766 = vand.u32 %v331, 4294901760
    %v1767 = vsub.f32 %v331, %v1766
    %v1768 = vand.u32 %v1767, 4294901760
    %v1769 = vsub.f32 %v1767, %v1768
    %v1770 = vand.u32 %v1769, 4294901760
    %1771 = vmatpush.msra.mxu0 %v1770
    %v1772 = vand.u32 %v330, 4294901760
    %v1773 = vsub.f32 %v330, %v1772
    %v1774 = vand.u32 %v1773, 4294901760
    %v1775 = vsub.f32 %v1773, %v1774
    %v1776 = vand.u32 %v1775, 4294901760
    %1777 = vmatpush.msra.mxu0 %v1776
    %v1778 = vand.u32 %v329, 4294901760
    %v1779 = vsub.f32 %v329, %v1778
    %v1780 = vand.u32 %v1779, 4294901760
    %v1781 = vsub.f32 %v1779, %v1780
    %v1782 = vand.u32 %v1781, 4294901760
    %1783 = vmatpush.msra.mxu0 %v1782
    %v1784 = vand.u32 %v328, 4294901760
    %v1785 = vsub.f32 %v328, %v1784
    %v1786 = vand.u32 %v1785, 4294901760
    %v1787 = vsub.f32 %v1785, %v1786
    %v1788 = vand.u32 %v1787, 4294901760
    %1789 = vmatpush.msra.mxu0 %v1788
    %v1790 = vand.u32 %v327, 4294901760
    %v1791 = vsub.f32 %v327, %v1790
    %v1792 = vand.u32 %v1791, 4294901760
    %v1793 = vsub.f32 %v1791, %v1792
    %v1794 = vand.u32 %v1793, 4294901760
    %1795 = vmatpush.msra.mxu0 %v1794
    %v1796 = vand.u32 %v1705, 4294901760
    %1797 = vmatmul.f32.gmra.mxu0 %v1796
    %v1798 = vpop.f32.mrf.mxu0
    %v1799 = vadd.f32 %v1738, %v1798
    %1800 = vdwg.mxu0
    %1801 = vmatpush.msra.mxu0 0.0
    %1802 = vmatpush.msra.mxu0 0.0
    %1803 = vmatpush.msra.mxu0 0.0
    %1804 = vmatpush.msra.mxu0 0.0
    %1805 = vmatpush.msra.mxu0 0.0
    %1806 = vmatpush.msra.mxu0 0.0
    %1807 = vmatpush.msra.mxu0 0.0
    %1808 = vmatpush.msra.mxu0 0.0
    %v1809 = vand.u32 %v334, 4294901760
    %v1810 = vsub.f32 %v334, %v1809
    %1811 = vmatpush.msra.mxu0 %v1810
    %v1812 = vand.u32 %v333, 4294901760
    %v1813 = vsub.f32 %v333, %v1812
    %1814 = vmatpush.msra.mxu0 %v1813
    %v1815 = vand.u32 %v332, 4294901760
    %v1816 = vsub.f32 %v332, %v1815
    %1817 = vmatpush.msra.mxu0 %v1816
    %v1818 = vand.u32 %v331, 4294901760
    %v1819 = vsub.f32 %v331, %v1818
    %1820 = vmatpush.msra.mxu0 %v1819
    %v1821 = vand.u32 %v330, 4294901760
    %v1822 = vsub.f32 %v330, %v1821
    %1823 = vmatpush.msra.mxu0 %v1822
    %v1824 = vand.u32 %v329, 4294901760
    %v1825 = vsub.f32 %v329, %v1824
    %1826 = vmatpush.msra.mxu0 %v1825
    %v1827 = vand.u32 %v328, 4294901760
    %v1828 = vsub.f32 %v328, %v1827
    %1829 = vmatpush.msra.mxu0 %v1828
    %v1830 = vand.u32 %v327, 4294901760
    %v1831 = vsub.f32 %v327, %v1830
    %1832 = vmatpush.msra.mxu0 %v1831
    %v1833 = vand.u32 %v1705, 4294901760
    %v1834 = vsub.f32 %v1705, %v1833
    %1835 = vmatmul.f32.gmra.mxu0 %v1834
    %v1836 = vpop.f32.mrf.mxu0
    %v1837 = vadd.f32 %v1799, %v1836
    %1838 = vdwg.mxu0
    %1839 = vmatpush.msra.mxu0 0.0
    %1840 = vmatpush.msra.mxu0 0.0
    %1841 = vmatpush.msra.mxu0 0.0
    %1842 = vmatpush.msra.mxu0 0.0
    %1843 = vmatpush.msra.mxu0 0.0
    %1844 = vmatpush.msra.mxu0 0.0
    %1845 = vmatpush.msra.mxu0 0.0
    %1846 = vmatpush.msra.mxu0 0.0
    %v1847 = vand.u32 %v334, 4294901760
    %1848 = vmatpush.msra.mxu0 %v1847
    %v1849 = vand.u32 %v333, 4294901760
    %1850 = vmatpush.msra.mxu0 %v1849
    %v1851 = vand.u32 %v332, 4294901760
    %1852 = vmatpush.msra.mxu0 %v1851
    %v1853 = vand.u32 %v331, 4294901760
    %1854 = vmatpush.msra.mxu0 %v1853
    %v1855 = vand.u32 %v330, 4294901760
    %1856 = vmatpush.msra.mxu0 %v1855
    %v1857 = vand.u32 %v329, 4294901760
    %1858 = vmatpush.msra.mxu0 %v1857
    %v1859 = vand.u32 %v328, 4294901760
    %1860 = vmatpush.msra.mxu0 %v1859
    %v1861 = vand.u32 %v327, 4294901760
    %1862 = vmatpush.msra.mxu0 %v1861
    %v1863 = vand.u32 %v1705, 4294901760
    %v1864 = vsub.f32 %v1705, %v1863
    %v1865 = vand.u32 %v1864, 4294901760
    %1866 = vmatmul.f32.gmra.mxu0 %v1865
    %v1867 = vpop.f32.mrf.mxu0
    %v1868 = vadd.f32 %v1837, %v1867
    %1869 = vdwg.mxu0
    %1870 = vmatpush.msra.mxu0 0.0
    %1871 = vmatpush.msra.mxu0 0.0
    %1872 = vmatpush.msra.mxu0 0.0
    %1873 = vmatpush.msra.mxu0 0.0
    %1874 = vmatpush.msra.mxu0 0.0
    %1875 = vmatpush.msra.mxu0 0.0
    %1876 = vmatpush.msra.mxu0 0.0
    %1877 = vmatpush.msra.mxu0 0.0
    %v1878 = vand.u32 %v334, 4294901760
    %v1879 = vsub.f32 %v334, %v1878
    %v1880 = vand.u32 %v1879, 4294901760
    %1881 = vmatpush.msra.mxu0 %v1880
    %v1882 = vand.u32 %v333, 4294901760
    %v1883 = vsub.f32 %v333, %v1882
    %v1884 = vand.u32 %v1883, 4294901760
    %1885 = vmatpush.msra.mxu0 %v1884
    %v1886 = vand.u32 %v332, 4294901760
    %v1887 = vsub.f32 %v332, %v1886
    %v1888 = vand.u32 %v1887, 4294901760
    %1889 = vmatpush.msra.mxu0 %v1888
    %v1890 = vand.u32 %v331, 4294901760
    %v1891 = vsub.f32 %v331, %v1890
    %v1892 = vand.u32 %v1891, 4294901760
    %1893 = vmatpush.msra.mxu0 %v1892
    %v1894 = vand.u32 %v330, 4294901760
    %v1895 = vsub.f32 %v330, %v1894
    %v1896 = vand.u32 %v1895, 4294901760
    %1897 = vmatpush.msra.mxu0 %v1896
    %v1898 = vand.u32 %v329, 4294901760
    %v1899 = vsub.f32 %v329, %v1898
    %v1900 = vand.u32 %v1899, 4294901760
    %1901 = vmatpush.msra.mxu0 %v1900
    %v1902 = vand.u32 %v328, 4294901760
    %v1903 = vsub.f32 %v328, %v1902
    %v1904 = vand.u32 %v1903, 4294901760
    %1905 = vmatpush.msra.mxu0 %v1904
    %v1906 = vand.u32 %v327, 4294901760
    %v1907 = vsub.f32 %v327, %v1906
    %v1908 = vand.u32 %v1907, 4294901760
    %1909 = vmatpush.msra.mxu0 %v1908
    %v1910 = vand.u32 %v1705, 4294901760
    %1911 = vmatmul.f32.gmra.mxu0 %v1910
    %v1912 = vpop.f32.mrf.mxu0
    %v1913 = vadd.f32 %v1868, %v1912
    %1914 = vdwg.mxu0
    %1915 = vmatpush.msra.mxu0 0.0
    %1916 = vmatpush.msra.mxu0 0.0
    %1917 = vmatpush.msra.mxu0 0.0
    %1918 = vmatpush.msra.mxu0 0.0
    %1919 = vmatpush.msra.mxu0 0.0
    %1920 = vmatpush.msra.mxu0 0.0
    %1921 = vmatpush.msra.mxu0 0.0
    %1922 = vmatpush.msra.mxu0 0.0
    %v1923 = vand.u32 %v334, 4294901760
    %1924 = vmatpush.msra.mxu0 %v1923
    %v1925 = vand.u32 %v333, 4294901760
    %1926 = vmatpush.msra.mxu0 %v1925
    %v1927 = vand.u32 %v332, 4294901760
    %1928 = vmatpush.msra.mxu0 %v1927
    %v1929 = vand.u32 %v331, 4294901760
    %1930 = vmatpush.msra.mxu0 %v1929
    %v1931 = vand.u32 %v330, 4294901760
    %1932 = vmatpush.msra.mxu0 %v1931
    %v1933 = vand.u32 %v329, 4294901760
    %1934 = vmatpush.msra.mxu0 %v1933
    %v1935 = vand.u32 %v328, 4294901760
    %1936 = vmatpush.msra.mxu0 %v1935
    %v1937 = vand.u32 %v327, 4294901760
    %1938 = vmatpush.msra.mxu0 %v1937
    %v1939 = vand.u32 %v1705, 4294901760
    %1940 = vmatmul.f32.gmra.mxu0 %v1939
    %v1941 = vpop.f32.mrf.mxu0
    %v1942 = vadd.f32 %v1913, %v1941
    %1943 = vdwg.mxu0
    %v1944 = vsub.f32 0.0, %v1942
    %v1945 = vmul.f32 %v1944, 1.442695
    %v1946 = vpow.pop %v1945
    %v1947 = vadd.f32 %v1946, 1.0
    %v1948 = vrcp.pop %v1947
    %v1949 = vmul.f32 %v1947, %v1948
    %v1950 = vsub.f32 1.0, %v1949
    %v1951 = vmul.f32 %v1948, %v1950
    %v1952 = vadd.f32 %v1948, %v1951
    %vm1953 = vweird.f32 %v1947
    %vm1954 = vweird.f32 %v1948
    %vm1955 = vmor %vm1953, %vm1954
    %v1956 = vsel %vm1955, %v1948, %v1952
    %v1957 = vand.u32 2147483647, %v1947
    %vm1958 = vcmp.eq.f32.partialorder %v1957, 8.507059e+37
    %v1959 = vand.u32 %v1947, 2147483648
    %v1960 = vor.u32 1.1754944e-38, %v1959
    %v1961 = vsel %vm1958, %v1960, %v1956
    %v1962 = vmul.f32 1.0, %v1961
    %v1963 = vtanh.pop %v1942
    %v1964 = vmul.f32 %v1962, %v1410
    %1966 = vrot.lane.b32.xlu0 %v1963, 64
    %v1967 = vpop.permute.xlu0 %1966
    %v1969 = vmul.f32 %v1962, %v1967
    %1971 = vrot.lane.b32.xlu0 %v1969, 32
    %v1972 = vpop.permute.xlu0 %1971
    %v1974 = vadd.f32 %v1964, %v1972
    %v1975 = vtanh.pop %v1974
    %1977 = vrot.lane.b32.xlu0 %v1975, 64
    %v1978 = vpop.permute.xlu0 %1977
    %v1980 = vmul.f32 %v1962, %v1978
    %v1981 = vmul.f32 %v1980, %v852
    %1983 = vrot.lane.b32.xlu0 %v1981, 32
    %v1984 = vpop.permute.xlu0 %1983
    %v1986 = vsel %vm859, %v1984, 0.0
    %1987 = vadd.xlane.f32.xlu0 %v1986
    %v1988 = vpop.xlane.xlu0 %1987
    %v1989 = vsel %vm863, %v1988, -inf
    %v1990 = vrot.slane %v1989, 4
    %v1991 = vmax.f32 %v1989, %v1990
    %v1992 = vrot.slane %v1991, 2
    %v1993 = vmax.f32 %v1991, %v1992
    %v1994 = vrot.slane %v1993, 1
    %v1995 = vmax.f32 %v1993, %v1994
    %v1996 = vsub.f32 %v1988, %v1995
    %v1997 = vmul.f32 %v1996, 1.442695
    %v1998 = vpow.pop %v1997
    %v1999 = vsel %vm863, %v1998, 0.0
    %v2000 = vrot.slane %v1999, 4
    %v2001 = vadd.f32 %v1999, %v2000
    %v2002 = vrot.slane %v2001, 2
    %v2003 = vadd.f32 %v2001, %v2002
    %v2004 = vrot.slane %v2003, 1
    %v2005 = vadd.f32 %v2003, %v2004
    %v2006 = vrcp.pop %v2005
    %v2007 = vmul.f32 %v2005, %v2006
    %v2008 = vsub.f32 1.0, %v2007
    %v2009 = vmul.f32 %v2006, %v2008
    %v2010 = vadd.f32 %v2006, %v2009
    %vm2011 = vweird.f32 %v2005
    %vm2012 = vweird.f32 %v2006
    %vm2013 = vmor %vm2011, %vm2012
    %v2014 = vsel %vm2013, %v2006, %v2010
    %v2015 = vand.u32 2147483647, %v2005
    %vm2016 = vcmp.eq.f32.partialorder %v2015, 8.507059e+37
    %v2017 = vand.u32 %v2005, 2147483648
    %v2018 = vor.u32 1.1754944e-38, %v2017
    %v2019 = vsel %vm2016, %v2018, %v2014
    %v2020 = vmul.f32 %v1998, %v2019
    %v2021 = vmul.f32 %v1980, %v2020
    %v2022 = vadd.f32 %v1458, %v2021
    %v2023 = vrot.slane %v1692, 4
    %2024 = vrot.lane.b32.xlu0 %v2023, 32
    %v2025 = vpop.permute.xlu0 %2024
    %v2026 = vsel %vm100, %v2025, 0
    %2028 = vmatpush.msra.mxu0 0.0
    %2029 = vmatpush.msra.mxu0 0.0
    %2030 = vmatpush.msra.mxu0 0.0
    %2031 = vmatpush.msra.mxu0 0.0
    %2032 = vmatpush.msra.mxu0 0.0
    %2033 = vmatpush.msra.mxu0 0.0
    %2034 = vmatpush.msra.mxu0 0.0
    %2035 = vmatpush.msra.mxu0 0.0
    %2036 = vmatpush.msra.mxu0 0.0
    %2037 = vmatpush.msra.mxu0 0.0
    %2038 = vmatpush.msra.mxu0 0.0
    %2039 = vmatpush.msra.mxu0 0.0
    %v2040 = vand.u32 %v326, 4294901760
    %2041 = vmatpush.msra.mxu0 %v2040
    %v2042 = vand.u32 %v325, 4294901760
    %2043 = vmatpush.msra.mxu0 %v2042
    %v2044 = vand.u32 %v324, 4294901760
    %2045 = vmatpush.msra.mxu0 %v2044
    %v2046 = vand.u32 %v323, 4294901760
    %2047 = vmatpush.msra.mxu0 %v2046
    %v2048 = vand.u32 %v2026, 4294901760
    %v2049 = vsub.f32 %v2026, %v2048
    %v2050 = vand.u32 %v2049, 4294901760
    %v2051 = vsub.f32 %v2049, %v2050
    %v2052 = vand.u32 %v2051, 4294901760
    %2053 = vmatmul.f32.gmra.mxu0 %v2052
    %v2054 = vpop.f32.mrf.mxu0
    %v2055 = vadd.f32 0.0, %v2054
    %2056 = vdwg.mxu0
    %2057 = vmatpush.msra.mxu0 0.0
    %2058 = vmatpush.msra.mxu0 0.0
    %2059 = vmatpush.msra.mxu0 0.0
    %2060 = vmatpush.msra.mxu0 0.0
    %2061 = vmatpush.msra.mxu0 0.0
    %2062 = vmatpush.msra.mxu0 0.0
    %2063 = vmatpush.msra.mxu0 0.0
    %2064 = vmatpush.msra.mxu0 0.0
    %2065 = vmatpush.msra.mxu0 0.0
    %2066 = vmatpush.msra.mxu0 0.0
    %2067 = vmatpush.msra.mxu0 0.0
    %2068 = vmatpush.msra.mxu0 0.0
    %v2069 = vand.u32 %v326, 4294901760
    %v2070 = vsub.f32 %v326, %v2069
    %v2071 = vand.u32 %v2070, 4294901760
    %v2072 = vsub.f32 %v2070, %v2071
    %v2073 = vand.u32 %v2072, 4294901760
    %2074 = vmatpush.msra.mxu0 %v2073
    %v2075 = vand.u32 %v325, 4294901760
    %v2076 = vsub.f32 %v325, %v2075
    %v2077 = vand.u32 %v2076, 4294901760
    %v2078 = vsub.f32 %v2076, %v2077
    %v2079 = vand.u32 %v2078, 4294901760
    %2080 = vmatpush.msra.mxu0 %v2079
    %v2081 = vand.u32 %v324, 4294901760
    %v2082 = vsub.f32 %v324, %v2081
    %v2083 = vand.u32 %v2082, 4294901760
    %v2084 = vsub.f32 %v2082, %v2083
    %v2085 = vand.u32 %v2084, 4294901760
    %2086 = vmatpush.msra.mxu0 %v2085
    %v2087 = vand.u32 %v323, 4294901760
    %v2088 = vsub.f32 %v323, %v2087
    %v2089 = vand.u32 %v2088, 4294901760
    %v2090 = vsub.f32 %v2088, %v2089
    %v2091 = vand.u32 %v2090, 4294901760
    %2092 = vmatpush.msra.mxu0 %v2091
    %v2093 = vand.u32 %v2026, 4294901760
    %2094 = vmatmul.f32.gmra.mxu0 %v2093
    %v2095 = vpop.f32.mrf.mxu0
    %v2096 = vadd.f32 %v2055, %v2095
    %2097 = vdwg.mxu0
    %2098 = vmatpush.msra.mxu0 0.0
    %2099 = vmatpush.msra.mxu0 0.0
    %2100 = vmatpush.msra.mxu0 0.0
    %2101 = vmatpush.msra.mxu0 0.0
    %2102 = vmatpush.msra.mxu0 0.0
    %2103 = vmatpush.msra.mxu0 0.0
    %2104 = vmatpush.msra.mxu0 0.0
    %2105 = vmatpush.msra.mxu0 0.0
    %2106 = vmatpush.msra.mxu0 0.0
    %2107 = vmatpush.msra.mxu0 0.0
    %2108 = vmatpush.msra.mxu0 0.0
    %2109 = vmatpush.msra.mxu0 0.0
    %v2110 = vand.u32 %v326, 4294901760
    %v2111 = vsub.f32 %v326, %v2110
    %2112 = vmatpush.msra.mxu0 %v2111
    %v2113 = vand.u32 %v325, 4294901760
    %v2114 = vsub.f32 %v325, %v2113
    %2115 = vmatpush.msra.mxu0 %v2114
    %v2116 = vand.u32 %v324, 4294901760
    %v2117 = vsub.f32 %v324, %v2116
    %2118 = vmatpush.msra.mxu0 %v2117
    %v2119 = vand.u32 %v323, 4294901760
    %v2120 = vsub.f32 %v323, %v2119
    %2121 = vmatpush.msra.mxu0 %v2120
    %v2122 = vand.u32 %v2026, 4294901760
    %v2123 = vsub.f32 %v2026, %v2122
    %2124 = vmatmul.f32.gmra.mxu0 %v2123
    %v2125 = vpop.f32.mrf.mxu0
    %v2126 = vadd.f32 %v2096, %v2125
    %2127 = vdwg.mxu0
    %2128 = vmatpush.msra.mxu0 0.0
    %2129 = vmatpush.msra.mxu0 0.0
    %2130 = vmatpush.msra.mxu0 0.0
    %2131 = vmatpush.msra.mxu0 0.0
    %2132 = vmatpush.msra.mxu0 0.0
    %2133 = vmatpush.msra.mxu0 0.0
    %2134 = vmatpush.msra.mxu0 0.0
    %2135 = vmatpush.msra.mxu0 0.0
    %2136 = vmatpush.msra.mxu0 0.0
    %2137 = vmatpush.msra.mxu0 0.0
    %2138 = vmatpush.msra.mxu0 0.0
    %2139 = vmatpush.msra.mxu0 0.0
    %v2140 = vand.u32 %v326, 4294901760
    %2141 = vmatpush.msra.mxu0 %v2140
    %v2142 = vand.u32 %v325, 4294901760
    %2143 = vmatpush.msra.mxu0 %v2142
    %v2144 = vand.u32 %v324, 4294901760
    %2145 = vmatpush.msra.mxu0 %v2144
    %v2146 = vand.u32 %v323, 4294901760
    %2147 = vmatpush.msra.mxu0 %v2146
    %v2148 = vand.u32 %v2026, 4294901760
    %v2149 = vsub.f32 %v2026, %v2148
    %v2150 = vand.u32 %v2149, 4294901760
    %2151 = vmatmul.f32.gmra.mxu0 %v2150
    %v2152 = vpop.f32.mrf.mxu0
    %v2153 = vadd.f32 %v2126, %v2152
    %2154 = vdwg.mxu0
    %2155 = vmatpush.msra.mxu0 0.0
    %2156 = vmatpush.msra.mxu0 0.0
    %2157 = vmatpush.msra.mxu0 0.0
    %2158 = vmatpush.msra.mxu0 0.0
    %2159 = vmatpush.msra.mxu0 0.0
    %2160 = vmatpush.msra.mxu0 0.0
    %2161 = vmatpush.msra.mxu0 0.0
    %2162 = vmatpush.msra.mxu0 0.0
    %2163 = vmatpush.msra.mxu0 0.0
    %2164 = vmatpush.msra.mxu0 0.0
    %2165 = vmatpush.msra.mxu0 0.0
    %2166 = vmatpush.msra.mxu0 0.0
    %v2167 = vand.u32 %v326, 4294901760
    %v2168 = vsub.f32 %v326, %v2167
    %v2169 = vand.u32 %v2168, 4294901760
    %2170 = vmatpush.msra.mxu0 %v2169
    %v2171 = vand.u32 %v325, 4294901760
    %v2172 = vsub.f32 %v325, %v2171
    %v2173 = vand.u32 %v2172, 4294901760
    %2174 = vmatpush.msra.mxu0 %v2173
    %v2175 = vand.u32 %v324, 4294901760
    %v2176 = vsub.f32 %v324, %v2175
    %v2177 = vand.u32 %v2176, 4294901760
    %2178 = vmatpush.msra.mxu0 %v2177
    %v2179 = vand.u32 %v323, 4294901760
    %v2180 = vsub.f32 %v323, %v2179
    %v2181 = vand.u32 %v2180, 4294901760
    %2182 = vmatpush.msra.mxu0 %v2181
    %v2183 = vand.u32 %v2026, 4294901760
    %2184 = vmatmul.f32.gmra.mxu0 %v2183
    %v2185 = vpop.f32.mrf.mxu0
    %v2186 = vadd.f32 %v2153, %v2185
    %2187 = vdwg.mxu0
    %2188 = vmatpush.msra.mxu0 0.0
    %2189 = vmatpush.msra.mxu0 0.0
    %2190 = vmatpush.msra.mxu0 0.0
    %2191 = vmatpush.msra.mxu0 0.0
    %2192 = vmatpush.msra.mxu0 0.0
    %2193 = vmatpush.msra.mxu0 0.0
    %2194 = vmatpush.msra.mxu0 0.0
    %2195 = vmatpush.msra.mxu0 0.0
    %2196 = vmatpush.msra.mxu0 0.0
    %2197 = vmatpush.msra.mxu0 0.0
    %2198 = vmatpush.msra.mxu0 0.0
    %2199 = vmatpush.msra.mxu0 0.0
    %v2200 = vand.u32 %v326, 4294901760
    %2201 = vmatpush.msra.mxu0 %v2200
    %v2202 = vand.u32 %v325, 4294901760
    %2203 = vmatpush.msra.mxu0 %v2202
    %v2204 = vand.u32 %v324, 4294901760
    %2205 = vmatpush.msra.mxu0 %v2204
    %v2206 = vand.u32 %v323, 4294901760
    %2207 = vmatpush.msra.mxu0 %v2206
    %v2208 = vand.u32 %v2026, 4294901760
    %2209 = vmatmul.f32.gmra.mxu0 %v2208
    %v2210 = vpop.f32.mrf.mxu0
    %v2211 = vadd.f32 %v2186, %v2210
    %2212 = vdwg.mxu0
    %v2214 = vrot.slane %v2211, 2
    %v2216 = vadd.f32 %v317, %v2214
    %v2217 = vsub.f32 0.0, %v2216
    %v2218 = vmul.f32 %v2217, 1.442695
    %v2219 = vpow.pop %v2218
    %v2220 = vadd.f32 %v2219, 1.0
    %v2221 = vrcp.pop %v2220
    %v2222 = vmul.f32 %v2220, %v2221
    %v2223 = vsub.f32 1.0, %v2222
    %v2224 = vmul.f32 %v2221, %v2223
    %v2225 = vadd.f32 %v2221, %v2224
    %vm2226 = vweird.f32 %v2220
    %vm2227 = vweird.f32 %v2221
    %vm2228 = vmor %vm2226, %vm2227
    %v2229 = vsel %vm2228, %v2221, %v2225
    %v2230 = vand.u32 2147483647, %v2220
    %vm2231 = vcmp.eq.f32.partialorder %v2230, 8.507059e+37
    %v2232 = vand.u32 %v2220, 2147483648
    %v2233 = vor.u32 1.1754944e-38, %v2232
    %v2234 = vsel %vm2231, %v2233, %v2229
    %v2235 = vmul.f32 1.0, %v2234
    %v2236 = vtanh.pop %v2216
    %v2238 = vrot.slane %v1686, 6
    %v2240 = vmul.f32 %v2235, %v2238
    %2242 = vrot.lane.b32.xlu0 %v2236, 64
    %v2243 = vpop.permute.xlu0 %2242
    %v2245 = vmul.f32 %v2235, %v2243
    %2247 = vrot.lane.b32.xlu0 %v2245, 32
    %v2248 = vpop.permute.xlu0 %2247
    %v2250 = vadd.f32 %v2240, %v2248
    %v2251 = vtanh.pop %v2250
    %2253 = vrot.lane.b32.xlu0 %v2251, 64
    %v2254 = vpop.permute.xlu0 %2253
    %v2256 = vmul.f32 %v2235, %v2254
    %2258 = vrot.lane.b32.xlu0 %v2256, 32
    %v2259 = vpop.permute.xlu0 %2258
    %v2262 = vrot.slane %v1980, 2
    %2263 = vrot.lane.b32.xlu0 %v2262, 64
    %v2264 = vpop.permute.xlu0 %2263
    %v2266 = vsel %vm100, %v2259, %v2264
    %v2268 = vrot.slane %v2266, 6
    %v2269 = vsel %vm571, %v2268, 0
    %2271 = vmatpush.msra.mxu0 0.0
    %2272 = vmatpush.msra.mxu0 0.0
    %2273 = vmatpush.msra.mxu0 0.0
    %2274 = vmatpush.msra.mxu0 0.0
    %2275 = vmatpush.msra.mxu0 0.0
    %2276 = vmatpush.msra.mxu0 0.0
    %2277 = vmatpush.msra.mxu0 0.0
    %2278 = vmatpush.msra.mxu0 0.0
    %v2279 = vand.u32 %v334, 4294901760
    %2280 = vmatpush.msra.mxu0 %v2279
    %v2281 = vand.u32 %v333, 4294901760
    %2282 = vmatpush.msra.mxu0 %v2281
    %v2283 = vand.u32 %v332, 4294901760
    %2284 = vmatpush.msra.mxu0 %v2283
    %v2285 = vand.u32 %v331, 4294901760
    %2286 = vmatpush.msra.mxu0 %v2285
    %v2287 = vand.u32 %v330, 4294901760
    %2288 = vmatpush.msra.mxu0 %v2287
    %v2289 = vand.u32 %v329, 4294901760
    %2290 = vmatpush.msra.mxu0 %v2289
    %v2291 = vand.u32 %v328, 4294901760
    %2292 = vmatpush.msra.mxu0 %v2291
    %v2293 = vand.u32 %v327, 4294901760
    %2294 = vmatpush.msra.mxu0 %v2293
    %v2295 = vand.u32 %v2269, 4294901760
    %v2296 = vsub.f32 %v2269, %v2295
    %v2297 = vand.u32 %v2296, 4294901760
    %v2298 = vsub.f32 %v2296, %v2297
    %v2299 = vand.u32 %v2298, 4294901760
    %2300 = vmatmul.f32.gmra.mxu0 %v2299
    %v2301 = vpop.f32.mrf.mxu0
    %v2302 = vadd.f32 %v569, %v2301
    %2303 = vdwg.mxu0
    %2304 = vmatpush.msra.mxu0 0.0
    %2305 = vmatpush.msra.mxu0 0.0
    %2306 = vmatpush.msra.mxu0 0.0
    %2307 = vmatpush.msra.mxu0 0.0
    %2308 = vmatpush.msra.mxu0 0.0
    %2309 = vmatpush.msra.mxu0 0.0
    %2310 = vmatpush.msra.mxu0 0.0
    %2311 = vmatpush.msra.mxu0 0.0
    %v2312 = vand.u32 %v334, 4294901760
    %v2313 = vsub.f32 %v334, %v2312
    %v2314 = vand.u32 %v2313, 4294901760
    %v2315 = vsub.f32 %v2313, %v2314
    %v2316 = vand.u32 %v2315, 4294901760
    %2317 = vmatpush.msra.mxu0 %v2316
    %v2318 = vand.u32 %v333, 4294901760
    %v2319 = vsub.f32 %v333, %v2318
    %v2320 = vand.u32 %v2319, 4294901760
    %v2321 = vsub.f32 %v2319, %v2320
    %v2322 = vand.u32 %v2321, 4294901760
    %2323 = vmatpush.msra.mxu0 %v2322
    %v2324 = vand.u32 %v332, 4294901760
    %v2325 = vsub.f32 %v332, %v2324
    %v2326 = vand.u32 %v2325, 4294901760
    %v2327 = vsub.f32 %v2325, %v2326
    %v2328 = vand.u32 %v2327, 4294901760
    %2329 = vmatpush.msra.mxu0 %v2328
    %v2330 = vand.u32 %v331, 4294901760
    %v2331 = vsub.f32 %v331, %v2330
    %v2332 = vand.u32 %v2331, 4294901760
    %v2333 = vsub.f32 %v2331, %v2332
    %v2334 = vand.u32 %v2333, 4294901760
    %2335 = vmatpush.msra.mxu0 %v2334
    %v2336 = vand.u32 %v330, 4294901760
    %v2337 = vsub.f32 %v330, %v2336
    %v2338 = vand.u32 %v2337, 4294901760
    %v2339 = vsub.f32 %v2337, %v2338
    %v2340 = vand.u32 %v2339, 4294901760
    %2341 = vmatpush.msra.mxu0 %v2340
    %v2342 = vand.u32 %v329, 4294901760
    %v2343 = vsub.f32 %v329, %v2342
    %v2344 = vand.u32 %v2343, 4294901760
    %v2345 = vsub.f32 %v2343, %v2344
    %v2346 = vand.u32 %v2345, 4294901760
    %2347 = vmatpush.msra.mxu0 %v2346
    %v2348 = vand.u32 %v328, 4294901760
    %v2349 = vsub.f32 %v328, %v2348
    %v2350 = vand.u32 %v2349, 4294901760
    %v2351 = vsub.f32 %v2349, %v2350
    %v2352 = vand.u32 %v2351, 4294901760
    %2353 = vmatpush.msra.mxu0 %v2352
    %v2354 = vand.u32 %v327, 4294901760
    %v2355 = vsub.f32 %v327, %v2354
    %v2356 = vand.u32 %v2355, 4294901760
    %v2357 = vsub.f32 %v2355, %v2356
    %v2358 = vand.u32 %v2357, 4294901760
    %2359 = vmatpush.msra.mxu0 %v2358
    %v2360 = vand.u32 %v2269, 4294901760
    %2361 = vmatmul.f32.gmra.mxu0 %v2360
    %v2362 = vpop.f32.mrf.mxu0
    %v2363 = vadd.f32 %v2302, %v2362
    %2364 = vdwg.mxu0
    %2365 = vmatpush.msra.mxu0 0.0
    %2366 = vmatpush.msra.mxu0 0.0
    %2367 = vmatpush.msra.mxu0 0.0
    %2368 = vmatpush.msra.mxu0 0.0
    %2369 = vmatpush.msra.mxu0 0.0
    %2370 = vmatpush.msra.mxu0 0.0
    %2371 = vmatpush.msra.mxu0 0.0
    %2372 = vmatpush.msra.mxu0 0.0
    %v2373 = vand.u32 %v334, 4294901760
    %v2374 = vsub.f32 %v334, %v2373
    %2375 = vmatpush.msra.mxu0 %v2374
    %v2376 = vand.u32 %v333, 4294901760
    %v2377 = vsub.f32 %v333, %v2376
    %2378 = vmatpush.msra.mxu0 %v2377
    %v2379 = vand.u32 %v332, 4294901760
    %v2380 = vsub.f32 %v332, %v2379
    %2381 = vmatpush.msra.mxu0 %v2380
    %v2382 = vand.u32 %v331, 4294901760
    %v2383 = vsub.f32 %v331, %v2382
    %2384 = vmatpush.msra.mxu0 %v2383
    %v2385 = vand.u32 %v330, 4294901760
    %v2386 = vsub.f32 %v330, %v2385
    %2387 = vmatpush.msra.mxu0 %v2386
    %v2388 = vand.u32 %v329, 4294901760
    %v2389 = vsub.f32 %v329, %v2388
    %2390 = vmatpush.msra.mxu0 %v2389
    %v2391 = vand.u32 %v328, 4294901760
    %v2392 = vsub.f32 %v328, %v2391
    %2393 = vmatpush.msra.mxu0 %v2392
    %v2394 = vand.u32 %v327, 4294901760
    %v2395 = vsub.f32 %v327, %v2394
    %2396 = vmatpush.msra.mxu0 %v2395
    %v2397 = vand.u32 %v2269, 4294901760
    %v2398 = vsub.f32 %v2269, %v2397
    %2399 = vmatmul.f32.gmra.mxu0 %v2398
    %v2400 = vpop.f32.mrf.mxu0
    %v2401 = vadd.f32 %v2363, %v2400
    %2402 = vdwg.mxu0
    %2403 = vmatpush.msra.mxu0 0.0
    %2404 = vmatpush.msra.mxu0 0.0
    %2405 = vmatpush.msra.mxu0 0.0
    %2406 = vmatpush.msra.mxu0 0.0
    %2407 = vmatpush.msra.mxu0 0.0
    %2408 = vmatpush.msra.mxu0 0.0
    %2409 = vmatpush.msra.mxu0 0.0
    %2410 = vmatpush.msra.mxu0 0.0
    %v2411 = vand.u32 %v334, 4294901760
    %2412 = vmatpush.msra.mxu0 %v2411
    %v2413 = vand.u32 %v333, 4294901760
    %2414 = vmatpush.msra.mxu0 %v2413
    %v2415 = vand.u32 %v332, 4294901760
    %2416 = vmatpush.msra.mxu0 %v2415
    %v2417 = vand.u32 %v331, 4294901760
    %2418 = vmatpush.msra.mxu0 %v2417
    %v2419 = vand.u32 %v330, 4294901760
    %2420 = vmatpush.msra.mxu0 %v2419
    %v2421 = vand.u32 %v329, 4294901760
    %2422 = vmatpush.msra.mxu0 %v2421
    %v2423 = vand.u32 %v328, 4294901760
    %2424 = vmatpush.msra.mxu0 %v2423
    %v2425 = vand.u32 %v327, 4294901760
    %2426 = vmatpush.msra.mxu0 %v2425
    %v2427 = vand.u32 %v2269, 4294901760
    %v2428 = vsub.f32 %v2269, %v2427
    %v2429 = vand.u32 %v2428, 4294901760
    %2430 = vmatmul.f32.gmra.mxu0 %v2429
    %v2431 = vpop.f32.mrf.mxu0
    %v2432 = vadd.f32 %v2401, %v2431
    %2433 = vdwg.mxu0
    %2434 = vmatpush.msra.mxu0 0.0
    %2435 = vmatpush.msra.mxu0 0.0
    %2436 = vmatpush.msra.mxu0 0.0
    %2437 = vmatpush.msra.mxu0 0.0
    %2438 = vmatpush.msra.mxu0 0.0
    %2439 = vmatpush.msra.mxu0 0.0
    %2440 = vmatpush.msra.mxu0 0.0
    %2441 = vmatpush.msra.mxu0 0.0
    %v2442 = vand.u32 %v334, 4294901760
    %v2443 = vsub.f32 %v334, %v2442
    %v2444 = vand.u32 %v2443, 4294901760
    %2445 = vmatpush.msra.mxu0 %v2444
    %v2446 = vand.u32 %v333, 4294901760
    %v2447 = vsub.f32 %v333, %v2446
    %v2448 = vand.u32 %v2447, 4294901760
    %2449 = vmatpush.msra.mxu0 %v2448
    %v2450 = vand.u32 %v332, 4294901760
    %v2451 = vsub.f32 %v332, %v2450
    %v2452 = vand.u32 %v2451, 4294901760
    %2453 = vmatpush.msra.mxu0 %v2452
    %v2454 = vand.u32 %v331, 4294901760
    %v2455 = vsub.f32 %v331, %v2454
    %v2456 = vand.u32 %v2455, 4294901760
    %2457 = vmatpush.msra.mxu0 %v2456
    %v2458 = vand.u32 %v330, 4294901760
    %v2459 = vsub.f32 %v330, %v2458
    %v2460 = vand.u32 %v2459, 4294901760
    %2461 = vmatpush.msra.mxu0 %v2460
    %v2462 = vand.u32 %v329, 4294901760
    %v2463 = vsub.f32 %v329, %v2462
    %v2464 = vand.u32 %v2463, 4294901760
    %2465 = vmatpush.msra.mxu0 %v2464
    %v2466 = vand.u32 %v328, 4294901760
    %v2467 = vsub.f32 %v328, %v2466
    %v2468 = vand.u32 %v2467, 4294901760
    %2469 = vmatpush.msra.mxu0 %v2468
    %v2470 = vand.u32 %v327, 4294901760
    %v2471 = vsub.f32 %v327, %v2470
    %v2472 = vand.u32 %v2471, 4294901760
    %2473 = vmatpush.msra.mxu0 %v2472
    %v2474 = vand.u32 %v2269, 4294901760
    %2475 = vmatmul.f32.gmra.mxu0 %v2474
    %v2476 = vpop.f32.mrf.mxu0
    %v2477 = vadd.f32 %v2432, %v2476
    %2478 = vdwg.mxu0
    %2479 = vmatpush.msra.mxu0 0.0
    %2480 = vmatpush.msra.mxu0 0.0
    %2481 = vmatpush.msra.mxu0 0.0
    %2482 = vmatpush.msra.mxu0 0.0
    %2483 = vmatpush.msra.mxu0 0.0
    %2484 = vmatpush.msra.mxu0 0.0
    %2485 = vmatpush.msra.mxu0 0.0
    %2486 = vmatpush.msra.mxu0 0.0
    %v2487 = vand.u32 %v334, 4294901760
    %2488 = vmatpush.msra.mxu0 %v2487
    %v2489 = vand.u32 %v333, 4294901760
    %2490 = vmatpush.msra.mxu0 %v2489
    %v2491 = vand.u32 %v332, 4294901760
    %2492 = vmatpush.msra.mxu0 %v2491
    %v2493 = vand.u32 %v331, 4294901760
    %2494 = vmatpush.msra.mxu0 %v2493
    %v2495 = vand.u32 %v330, 4294901760
    %2496 = vmatpush.msra.mxu0 %v2495
    %v2497 = vand.u32 %v329, 4294901760
    %2498 = vmatpush.msra.mxu0 %v2497
    %v2499 = vand.u32 %v328, 4294901760
    %2500 = vmatpush.msra.mxu0 %v2499
    %v2501 = vand.u32 %v327, 4294901760
    %2502 = vmatpush.msra.mxu0 %v2501
    %v2503 = vand.u32 %v2269, 4294901760
    %2504 = vmatmul.f32.gmra.mxu0 %v2503
    %v2505 = vpop.f32.mrf.mxu0
    %v2506 = vadd.f32 %v2477, %v2505
    %2507 = vdwg.mxu0
    %v2508 = vsub.f32 0.0, %v2506
    %v2509 = vmul.f32 %v2508, 1.442695
    %v2510 = vpow.pop %v2509
    %v2511 = vadd.f32 %v2510, 1.0
    %v2512 = vrcp.pop %v2511
    %v2513 = vmul.f32 %v2511, %v2512
    %v2514 = vsub.f32 1.0, %v2513
    %v2515 = vmul.f32 %v2512, %v2514
    %v2516 = vadd.f32 %v2512, %v2515
    %vm2517 = vweird.f32 %v2511
    %vm2518 = vweird.f32 %v2512
    %vm2519 = vmor %vm2517, %vm2518
    %v2520 = vsel %vm2519, %v2512, %v2516
    %v2521 = vand.u32 2147483647, %v2511
    %vm2522 = vcmp.eq.f32.partialorder %v2521, 8.507059e+37
    %v2523 = vand.u32 %v2511, 2147483648
    %v2524 = vor.u32 1.1754944e-38, %v2523
    %v2525 = vsel %vm2522, %v2524, %v2520
    %v2526 = vmul.f32 1.0, %v2525
    %v2527 = vtanh.pop %v2506
    %v2528 = vmul.f32 %v2526, %v1974
    %2530 = vrot.lane.b32.xlu0 %v2527, 64
    %v2531 = vpop.permute.xlu0 %2530
    %v2533 = vmul.f32 %v2526, %v2531
    %2535 = vrot.lane.b32.xlu0 %v2533, 32
    %v2536 = vpop.permute.xlu0 %2535
    %v2538 = vadd.f32 %v2528, %v2536
    %v2539 = vtanh.pop %v2538
    %2541 = vrot.lane.b32.xlu0 %v2539, 64
    %v2542 = vpop.permute.xlu0 %2541
    %v2544 = vmul.f32 %v2526, %v2542
    %v2545 = vmul.f32 %v2544, %v852
    %2547 = vrot.lane.b32.xlu0 %v2545, 32
    %v2548 = vpop.permute.xlu0 %2547
    %v2550 = vsel %vm859, %v2548, 0.0
    %2551 = vadd.xlane.f32.xlu0 %v2550
    %v2552 = vpop.xlane.xlu0 %2551
    %v2553 = vsel %vm863, %v2552, -inf
    %v2554 = vrot.slane %v2553, 4
    %v2555 = vmax.f32 %v2553, %v2554
    %v2556 = vrot.slane %v2555, 2
    %v2557 = vmax.f32 %v2555, %v2556
    %v2558 = vrot.slane %v2557, 1
    %v2559 = vmax.f32 %v2557, %v2558
    %v2560 = vsub.f32 %v2552, %v2559
    %v2561 = vmul.f32 %v2560, 1.442695
    %v2562 = vpow.pop %v2561
    %v2563 = vsel %vm863, %v2562, 0.0
    %v2564 = vrot.slane %v2563, 4
    %v2565 = vadd.f32 %v2563, %v2564
    %v2566 = vrot.slane %v2565, 2
    %v2567 = vadd.f32 %v2565, %v2566
    %v2568 = vrot.slane %v2567, 1
    %v2569 = vadd.f32 %v2567, %v2568
    %v2570 = vrcp.pop %v2569
    %v2571 = vmul.f32 %v2569, %v2570
    %v2572 = vsub.f32 1.0, %v2571
    %v2573 = vmul.f32 %v2570, %v2572
    %v2574 = vadd.f32 %v2570, %v2573
    %vm2575 = vweird.f32 %v2569
    %vm2576 = vweird.f32 %v2570
    %vm2577 = vmor %vm2575, %vm2576
    %v2578 = vsel %vm2577, %v2570, %v2574
    %v2579 = vand.u32 2147483647, %v2569
    %vm2580 = vcmp.eq.f32.partialorder %v2579, 8.507059e+37
    %v2581 = vand.u32 %v2569, 2147483648
    %v2582 = vor.u32 1.1754944e-38, %v2581
    %v2583 = vsel %vm2580, %v2582, %v2578
    %v2584 = vmul.f32 %v2562, %v2583
    %v2585 = vmul.f32 %v2544, %v2584
    %v2586 = vadd.f32 %v2022, %v2585
    %v2587 = vrot.slane %v2256, 6
    %2588 = vrot.lane.b32.xlu0 %v2587, 32
    %v2589 = vpop.permute.xlu0 %2588
    %v2590 = vsel %vm100, %v2589, 0
    %2592 = vmatpush.msra.mxu0 0.0
    %2593 = vmatpush.msra.mxu0 0.0
    %2594 = vmatpush.msra.mxu0 0.0
    %2595 = vmatpush.msra.mxu0 0.0
    %2596 = vmatpush.msra.mxu0 0.0
    %2597 = vmatpush.msra.mxu0 0.0
    %2598 = vmatpush.msra.mxu0 0.0
    %2599 = vmatpush.msra.mxu0 0.0
    %2600 = vmatpush.msra.mxu0 0.0
    %2601 = vmatpush.msra.mxu0 0.0
    %2602 = vmatpush.msra.mxu0 0.0
    %2603 = vmatpush.msra.mxu0 0.0
    %v2604 = vand.u32 %v326, 4294901760
    %2605 = vmatpush.msra.mxu0 %v2604
    %v2606 = vand.u32 %v325, 4294901760
    %2607 = vmatpush.msra.mxu0 %v2606
    %v2608 = vand.u32 %v324, 4294901760
    %2609 = vmatpush.msra.mxu0 %v2608
    %v2610 = vand.u32 %v323, 4294901760
    %2611 = vmatpush.msra.mxu0 %v2610
    %v2612 = vand.u32 %v2590, 4294901760
    %v2613 = vsub.f32 %v2590, %v2612
    %v2614 = vand.u32 %v2613, 4294901760
    %v2615 = vsub.f32 %v2613, %v2614
    %v2616 = vand.u32 %v2615, 4294901760
    %2617 = vmatmul.f32.gmra.mxu0 %v2616
    %v2618 = vpop.f32.mrf.mxu0
    %v2619 = vadd.f32 0.0, %v2618
    %2620 = vdwg.mxu0
    %2621 = vmatpush.msra.mxu0 0.0
    %2622 = vmatpush.msra.mxu0 0.0
    %2623 = vmatpush.msra.mxu0 0.0
    %2624 = vmatpush.msra.mxu0 0.0
    %2625 = vmatpush.msra.mxu0 0.0
    %2626 = vmatpush.msra.mxu0 0.0
    %2627 = vmatpush.msra.mxu0 0.0
    %2628 = vmatpush.msra.mxu0 0.0
    %2629 = vmatpush.msra.mxu0 0.0
    %2630 = vmatpush.msra.mxu0 0.0
    %2631 = vmatpush.msra.mxu0 0.0
    %2632 = vmatpush.msra.mxu0 0.0
    %v2633 = vand.u32 %v326, 4294901760
    %v2634 = vsub.f32 %v326, %v2633
    %v2635 = vand.u32 %v2634, 4294901760
    %v2636 = vsub.f32 %v2634, %v2635
    %v2637 = vand.u32 %v2636, 4294901760
    %2638 = vmatpush.msra.mxu0 %v2637
    %v2639 = vand.u32 %v325, 4294901760
    %v2640 = vsub.f32 %v325, %v2639
    %v2641 = vand.u32 %v2640, 4294901760
    %v2642 = vsub.f32 %v2640, %v2641
    %v2643 = vand.u32 %v2642, 4294901760
    %2644 = vmatpush.msra.mxu0 %v2643
    %v2645 = vand.u32 %v324, 4294901760
    %v2646 = vsub.f32 %v324, %v2645
    %v2647 = vand.u32 %v2646, 4294901760
    %v2648 = vsub.f32 %v2646, %v2647
    %v2649 = vand.u32 %v2648, 4294901760
    %2650 = vmatpush.msra.mxu0 %v2649
    %v2651 = vand.u32 %v323, 4294901760
    %v2652 = vsub.f32 %v323, %v2651
    %v2653 = vand.u32 %v2652, 4294901760
    %v2654 = vsub.f32 %v2652, %v2653
    %v2655 = vand.u32 %v2654, 4294901760
    %2656 = vmatpush.msra.mxu0 %v2655
    %v2657 = vand.u32 %v2590, 4294901760
    %2658 = vmatmul.f32.gmra.mxu0 %v2657
    %v2659 = vpop.f32.mrf.mxu0
    %v2660 = vadd.f32 %v2619, %v2659
    %2661 = vdwg.mxu0
    %2662 = vmatpush.msra.mxu0 0.0
    %2663 = vmatpush.msra.mxu0 0.0
    %2664 = vmatpush.msra.mxu0 0.0
    %2665 = vmatpush.msra.mxu0 0.0
    %2666 = vmatpush.msra.mxu0 0.0
    %2667 = vmatpush.msra.mxu0 0.0
    %2668 = vmatpush.msra.mxu0 0.0
    %2669 = vmatpush.msra.mxu0 0.0
    %2670 = vmatpush.msra.mxu0 0.0
    %2671 = vmatpush.msra.mxu0 0.0
    %2672 = vmatpush.msra.mxu0 0.0
    %2673 = vmatpush.msra.mxu0 0.0
    %v2674 = vand.u32 %v326, 4294901760
    %v2675 = vsub.f32 %v326, %v2674
    %2676 = vmatpush.msra.mxu0 %v2675
    %v2677 = vand.u32 %v325, 4294901760
    %v2678 = vsub.f32 %v325, %v2677
    %2679 = vmatpush.msra.mxu0 %v2678
    %v2680 = vand.u32 %v324, 4294901760
    %v2681 = vsub.f32 %v324, %v2680
    %2682 = vmatpush.msra.mxu0 %v2681
    %v2683 = vand.u32 %v323, 4294901760
    %v2684 = vsub.f32 %v323, %v2683
    %2685 = vmatpush.msra.mxu0 %v2684
    %v2686 = vand.u32 %v2590, 4294901760
    %v2687 = vsub.f32 %v2590, %v2686
    %2688 = vmatmul.f32.gmra.mxu0 %v2687
    %v2689 = vpop.f32.mrf.mxu0
    %v2690 = vadd.f32 %v2660, %v2689
    %2691 = vdwg.mxu0
    %2692 = vmatpush.msra.mxu0 0.0
    %2693 = vmatpush.msra.mxu0 0.0
    %2694 = vmatpush.msra.mxu0 0.0
    %2695 = vmatpush.msra.mxu0 0.0
    %2696 = vmatpush.msra.mxu0 0.0
    %2697 = vmatpush.msra.mxu0 0.0
    %2698 = vmatpush.msra.mxu0 0.0
    %2699 = vmatpush.msra.mxu0 0.0
    %2700 = vmatpush.msra.mxu0 0.0
    %2701 = vmatpush.msra.mxu0 0.0
    %2702 = vmatpush.msra.mxu0 0.0
    %2703 = vmatpush.msra.mxu0 0.0
    %v2704 = vand.u32 %v326, 4294901760
    %2705 = vmatpush.msra.mxu0 %v2704
    %v2706 = vand.u32 %v325, 4294901760
    %2707 = vmatpush.msra.mxu0 %v2706
    %v2708 = vand.u32 %v324, 4294901760
    %2709 = vmatpush.msra.mxu0 %v2708
    %v2710 = vand.u32 %v323, 4294901760
    %2711 = vmatpush.msra.mxu0 %v2710
    %v2712 = vand.u32 %v2590, 4294901760
    %v2713 = vsub.f32 %v2590, %v2712
    %v2714 = vand.u32 %v2713, 4294901760
    %2715 = vmatmul.f32.gmra.mxu0 %v2714
    %v2716 = vpop.f32.mrf.mxu0
    %v2717 = vadd.f32 %v2690, %v2716
    %2718 = vdwg.mxu0
    %2719 = vmatpush.msra.mxu0 0.0
    %2720 = vmatpush.msra.mxu0 0.0
    %2721 = vmatpush.msra.mxu0 0.0
    %2722 = vmatpush.msra.mxu0 0.0
    %2723 = vmatpush.msra.mxu0 0.0
    %2724 = vmatpush.msra.mxu0 0.0
    %2725 = vmatpush.msra.mxu0 0.0
    %2726 = vmatpush.msra.mxu0 0.0
    %2727 = vmatpush.msra.mxu0 0.0
    %2728 = vmatpush.msra.mxu0 0.0
    %2729 = vmatpush.msra.mxu0 0.0
    %2730 = vmatpush.msra.mxu0 0.0
    %v2731 = vand.u32 %v326, 4294901760
    %v2732 = vsub.f32 %v326, %v2731
    %v2733 = vand.u32 %v2732, 4294901760
    %2734 = vmatpush.msra.mxu0 %v2733
    %v2735 = vand.u32 %v325, 4294901760
    %v2736 = vsub.f32 %v325, %v2735
    %v2737 = vand.u32 %v2736, 4294901760
    %2738 = vmatpush.msra.mxu0 %v2737
    %v2739 = vand.u32 %v324, 4294901760
    %v2740 = vsub.f32 %v324, %v2739
    %v2741 = vand.u32 %v2740, 4294901760
    %2742 = vmatpush.msra.mxu0 %v2741
    %v2743 = vand.u32 %v323, 4294901760
    %v2744 = vsub.f32 %v323, %v2743
    %v2745 = vand.u32 %v2744, 4294901760
    %2746 = vmatpush.msra.mxu0 %v2745
    %v2747 = vand.u32 %v2590, 4294901760
    %2748 = vmatmul.f32.gmra.mxu0 %v2747
    %v2749 = vpop.f32.mrf.mxu0
    %v2750 = vadd.f32 %v2717, %v2749
    %2751 = vdwg.mxu0
    %2752 = vmatpush.msra.mxu0 0.0
    %2753 = vmatpush.msra.mxu0 0.0
    %2754 = vmatpush.msra.mxu0 0.0
    %2755 = vmatpush.msra.mxu0 0.0
    %2756 = vmatpush.msra.mxu0 0.0
    %2757 = vmatpush.msra.mxu0 0.0
    %2758 = vmatpush.msra.mxu0 0.0
    %2759 = vmatpush.msra.mxu0 0.0
    %2760 = vmatpush.msra.mxu0 0.0
    %2761 = vmatpush.msra.mxu0 0.0
    %2762 = vmatpush.msra.mxu0 0.0
    %2763 = vmatpush.msra.mxu0 0.0
    %v2764 = vand.u32 %v326, 4294901760
    %2765 = vmatpush.msra.mxu0 %v2764
    %v2766 = vand.u32 %v325, 4294901760
    %2767 = vmatpush.msra.mxu0 %v2766
    %v2768 = vand.u32 %v324, 4294901760
    %2769 = vmatpush.msra.mxu0 %v2768
    %v2770 = vand.u32 %v323, 4294901760
    %2771 = vmatpush.msra.mxu0 %v2770
    %v2772 = vand.u32 %v2590, 4294901760
    %2773 = vmatmul.f32.gmra.mxu0 %v2772
    %v2774 = vpop.f32.mrf.mxu0
    %v2775 = vadd.f32 %v2750, %v2774
    %2776 = vdwg.mxu0
    %v2777 = vadd.f32 %v321, %v2775
    %v2778 = vsub.f32 0.0, %v2777
    %v2779 = vmul.f32 %v2778, 1.442695
    %v2780 = vpow.pop %v2779
    %v2781 = vadd.f32 %v2780, 1.0
    %v2782 = vrcp.pop %v2781
    %v2783 = vmul.f32 %v2781, %v2782
    %v2784 = vsub.f32 1.0, %v2783
    %v2785 = vmul.f32 %v2782, %v2784
    %v2786 = vadd.f32 %v2782, %v2785
    %vm2787 = vweird.f32 %v2781
    %vm2788 = vweird.f32 %v2782
    %vm2789 = vmor %vm2787, %vm2788
    %v2790 = vsel %vm2789, %v2782, %v2786
    %v2791 = vand.u32 2147483647, %v2781
    %vm2792 = vcmp.eq.f32.partialorder %v2791, 8.507059e+37
    %v2793 = vand.u32 %v2781, 2147483648
    %v2794 = vor.u32 1.1754944e-38, %v2793
    %v2795 = vsel %vm2792, %v2794, %v2790
    %v2796 = vmul.f32 1.0, %v2795
    %v2797 = vtanh.pop %v2777
    %v2799 = vrot.slane %v2250, 6
    %v2801 = vmul.f32 %v2796, %v2799
    %2803 = vrot.lane.b32.xlu0 %v2797, 64
    %v2804 = vpop.permute.xlu0 %2803
    %v2806 = vmul.f32 %v2796, %v2804
    %2808 = vrot.lane.b32.xlu0 %v2806, 32
    %v2809 = vpop.permute.xlu0 %2808
    %v2811 = vadd.f32 %v2801, %v2809
    %v2812 = vtanh.pop %v2811
    %2814 = vrot.lane.b32.xlu0 %v2812, 64
    %v2815 = vpop.permute.xlu0 %2814
    %v2817 = vmul.f32 %v2796, %v2815
    %2819 = vrot.lane.b32.xlu0 %v2817, 32
    %v2820 = vpop.permute.xlu0 %2819
    %2823 = vrot.lane.b32.xlu0 %v2544, 64
    %v2824 = vpop.permute.xlu0 %2823
    %v2826 = vsel %vm100, %v2820, %v2824
    %v2828 = vsel %vm571, %v2826, 0
    %2830 = vmatpush.msra.mxu0 0.0
    %2831 = vmatpush.msra.mxu0 0.0
    %2832 = vmatpush.msra.mxu0 0.0
    %2833 = vmatpush.msra.mxu0 0.0
    %2834 = vmatpush.msra.mxu0 0.0
    %2835 = vmatpush.msra.mxu0 0.0
    %2836 = vmatpush.msra.mxu0 0.0
    %2837 = vmatpush.msra.mxu0 0.0
    %v2838 = vand.u32 %v334, 4294901760
    %2839 = vmatpush.msra.mxu0 %v2838
    %v2840 = vand.u32 %v333, 4294901760
    %2841 = vmatpush.msra.mxu0 %v2840
    %v2842 = vand.u32 %v332, 4294901760
    %2843 = vmatpush.msra.mxu0 %v2842
    %v2844 = vand.u32 %v331, 4294901760
    %2845 = vmatpush.msra.mxu0 %v2844
    %v2846 = vand.u32 %v330, 4294901760
    %2847 = vmatpush.msra.mxu0 %v2846
    %v2848 = vand.u32 %v329, 4294901760
    %2849 = vmatpush.msra.mxu0 %v2848
    %v2850 = vand.u32 %v328, 4294901760
    %2851 = vmatpush.msra.mxu0 %v2850
    %v2852 = vand.u32 %v327, 4294901760
    %2853 = vmatpush.msra.mxu0 %v2852
    %v2854 = vand.u32 %v2828, 4294901760
    %v2855 = vsub.f32 %v2828, %v2854
    %v2856 = vand.u32 %v2855, 4294901760
    %v2857 = vsub.f32 %v2855, %v2856
    %v2858 = vand.u32 %v2857, 4294901760
    %2859 = vmatmul.f32.gmra.mxu0 %v2858
    %v2860 = vpop.f32.mrf.mxu0
    %v2861 = vadd.f32 %v569, %v2860
    %2862 = vdwg.mxu0
    %2863 = vmatpush.msra.mxu0 0.0
    %2864 = vmatpush.msra.mxu0 0.0
    %2865 = vmatpush.msra.mxu0 0.0
    %2866 = vmatpush.msra.mxu0 0.0
    %2867 = vmatpush.msra.mxu0 0.0
    %2868 = vmatpush.msra.mxu0 0.0
    %2869 = vmatpush.msra.mxu0 0.0
    %2870 = vmatpush.msra.mxu0 0.0
    %v2871 = vand.u32 %v334, 4294901760
    %v2872 = vsub.f32 %v334, %v2871
    %v2873 = vand.u32 %v2872, 4294901760
    %v2874 = vsub.f32 %v2872, %v2873
    %v2875 = vand.u32 %v2874, 4294901760
    %2876 = vmatpush.msra.mxu0 %v2875
    %v2877 = vand.u32 %v333, 4294901760
    %v2878 = vsub.f32 %v333, %v2877
    %v2879 = vand.u32 %v2878, 4294901760
    %v2880 = vsub.f32 %v2878, %v2879
    %v2881 = vand.u32 %v2880, 4294901760
    %2882 = vmatpush.msra.mxu0 %v2881
    %v2883 = vand.u32 %v332, 4294901760
    %v2884 = vsub.f32 %v332, %v2883
    %v2885 = vand.u32 %v2884, 4294901760
    %v2886 = vsub.f32 %v2884, %v2885
    %v2887 = vand.u32 %v2886, 4294901760
    %2888 = vmatpush.msra.mxu0 %v2887
    %v2889 = vand.u32 %v331, 4294901760
    %v2890 = vsub.f32 %v331, %v2889
    %v2891 = vand.u32 %v2890, 4294901760
    %v2892 = vsub.f32 %v2890, %v2891
    %v2893 = vand.u32 %v2892, 4294901760
    %2894 = vmatpush.msra.mxu0 %v2893
    %v2895 = vand.u32 %v330, 4294901760
    %v2896 = vsub.f32 %v330, %v2895
    %v2897 = vand.u32 %v2896, 4294901760
    %v2898 = vsub.f32 %v2896, %v2897
    %v2899 = vand.u32 %v2898, 4294901760
    %2900 = vmatpush.msra.mxu0 %v2899
    %v2901 = vand.u32 %v329, 4294901760
    %v2902 = vsub.f32 %v329, %v2901
    %v2903 = vand.u32 %v2902, 4294901760
    %v2904 = vsub.f32 %v2902, %v2903
    %v2905 = vand.u32 %v2904, 4294901760
    %2906 = vmatpush.msra.mxu0 %v2905
    %v2907 = vand.u32 %v328, 4294901760
    %v2908 = vsub.f32 %v328, %v2907
    %v2909 = vand.u32 %v2908, 4294901760
    %v2910 = vsub.f32 %v2908, %v2909
    %v2911 = vand.u32 %v2910, 4294901760
    %2912 = vmatpush.msra.mxu0 %v2911
    %v2913 = vand.u32 %v327, 4294901760
    %v2914 = vsub.f32 %v327, %v2913
    %v2915 = vand.u32 %v2914, 4294901760
    %v2916 = vsub.f32 %v2914, %v2915
    %v2917 = vand.u32 %v2916, 4294901760
    %2918 = vmatpush.msra.mxu0 %v2917
    %v2919 = vand.u32 %v2828, 4294901760
    %2920 = vmatmul.f32.gmra.mxu0 %v2919
    %v2921 = vpop.f32.mrf.mxu0
    %v2922 = vadd.f32 %v2861, %v2921
    %2923 = vdwg.mxu0
    %2924 = vmatpush.msra.mxu0 0.0
    %2925 = vmatpush.msra.mxu0 0.0
    %2926 = vmatpush.msra.mxu0 0.0
    %2927 = vmatpush.msra.mxu0 0.0
    %2928 = vmatpush.msra.mxu0 0.0
    %2929 = vmatpush.msra.mxu0 0.0
    %2930 = vmatpush.msra.mxu0 0.0
    %2931 = vmatpush.msra.mxu0 0.0
    %v2932 = vand.u32 %v334, 4294901760
    %v2933 = vsub.f32 %v334, %v2932
    %2934 = vmatpush.msra.mxu0 %v2933
    %v2935 = vand.u32 %v333, 4294901760
    %v2936 = vsub.f32 %v333, %v2935
    %2937 = vmatpush.msra.mxu0 %v2936
    %v2938 = vand.u32 %v332, 4294901760
    %v2939 = vsub.f32 %v332, %v2938
    %2940 = vmatpush.msra.mxu0 %v2939
    %v2941 = vand.u32 %v331, 4294901760
    %v2942 = vsub.f32 %v331, %v2941
    %2943 = vmatpush.msra.mxu0 %v2942
    %v2944 = vand.u32 %v330, 4294901760
    %v2945 = vsub.f32 %v330, %v2944
    %2946 = vmatpush.msra.mxu0 %v2945
    %v2947 = vand.u32 %v329, 4294901760
    %v2948 = vsub.f32 %v329, %v2947
    %2949 = vmatpush.msra.mxu0 %v2948
    %v2950 = vand.u32 %v328, 4294901760
    %v2951 = vsub.f32 %v328, %v2950
    %2952 = vmatpush.msra.mxu0 %v2951
    %v2953 = vand.u32 %v327, 4294901760
    %v2954 = vsub.f32 %v327, %v2953
    %2955 = vmatpush.msra.mxu0 %v2954
    %v2956 = vand.u32 %v2828, 4294901760
    %v2957 = vsub.f32 %v2828, %v2956
    %2958 = vmatmul.f32.gmra.mxu0 %v2957
    %v2959 = vpop.f32.mrf.mxu0
    %v2960 = vadd.f32 %v2922, %v2959
    %2961 = vdwg.mxu0
    %2962 = vmatpush.msra.mxu0 0.0
    %2963 = vmatpush.msra.mxu0 0.0
    %2964 = vmatpush.msra.mxu0 0.0
    %2965 = vmatpush.msra.mxu0 0.0
    %2966 = vmatpush.msra.mxu0 0.0
    %2967 = vmatpush.msra.mxu0 0.0
    %2968 = vmatpush.msra.mxu0 0.0
    %2969 = vmatpush.msra.mxu0 0.0
    %v2970 = vand.u32 %v334, 4294901760
    %2971 = vmatpush.msra.mxu0 %v2970
    %v2972 = vand.u32 %v333, 4294901760
    %2973 = vmatpush.msra.mxu0 %v2972
    %v2974 = vand.u32 %v332, 4294901760
    %2975 = vmatpush.msra.mxu0 %v2974
    %v2976 = vand.u32 %v331, 4294901760
    %2977 = vmatpush.msra.mxu0 %v2976
    %v2978 = vand.u32 %v330, 4294901760
    %2979 = vmatpush.msra.mxu0 %v2978
    %v2980 = vand.u32 %v329, 4294901760
    %2981 = vmatpush.msra.mxu0 %v2980
    %v2982 = vand.u32 %v328, 4294901760
    %2983 = vmatpush.msra.mxu0 %v2982
    %v2984 = vand.u32 %v327, 4294901760
    %2985 = vmatpush.msra.mxu0 %v2984
    %v2986 = vand.u32 %v2828, 4294901760
    %v2987 = vsub.f32 %v2828, %v2986
    %v2988 = vand.u32 %v2987, 4294901760
    %2989 = vmatmul.f32.gmra.mxu0 %v2988
    %v2990 = vpop.f32.mrf.mxu0
    %v2991 = vadd.f32 %v2960, %v2990
    %2992 = vdwg.mxu0
    %2993 = vmatpush.msra.mxu0 0.0
    %2994 = vmatpush.msra.mxu0 0.0
    %2995 = vmatpush.msra.mxu0 0.0
    %2996 = vmatpush.msra.mxu0 0.0
    %2997 = vmatpush.msra.mxu0 0.0
    %2998 = vmatpush.msra.mxu0 0.0
    %2999 = vmatpush.msra.mxu0 0.0
    %3000 = vmatpush.msra.mxu0 0.0
    %v3001 = vand.u32 %v334, 4294901760
    %v3002 = vsub.f32 %v334, %v3001
    %v3003 = vand.u32 %v3002, 4294901760
    %3004 = vmatpush.msra.mxu0 %v3003
    %v3005 = vand.u32 %v333, 4294901760
    %v3006 = vsub.f32 %v333, %v3005
    %v3007 = vand.u32 %v3006, 4294901760
    %3008 = vmatpush.msra.mxu0 %v3007
    %v3009 = vand.u32 %v332, 4294901760
    %v3010 = vsub.f32 %v332, %v3009
    %v3011 = vand.u32 %v3010, 4294901760
    %3012 = vmatpush.msra.mxu0 %v3011
    %v3013 = vand.u32 %v331, 4294901760
    %v3014 = vsub.f32 %v331, %v3013
    %v3015 = vand.u32 %v3014, 4294901760
    %3016 = vmatpush.msra.mxu0 %v3015
    %v3017 = vand.u32 %v330, 4294901760
    %v3018 = vsub.f32 %v330, %v3017
    %v3019 = vand.u32 %v3018, 4294901760
    %3020 = vmatpush.msra.mxu0 %v3019
    %v3021 = vand.u32 %v329, 4294901760
    %v3022 = vsub.f32 %v329, %v3021
    %v3023 = vand.u32 %v3022, 4294901760
    %3024 = vmatpush.msra.mxu0 %v3023
    %v3025 = vand.u32 %v328, 4294901760
    %v3026 = vsub.f32 %v328, %v3025
    %v3027 = vand.u32 %v3026, 4294901760
    %3028 = vmatpush.msra.mxu0 %v3027
    %v3029 = vand.u32 %v327, 4294901760
    %v3030 = vsub.f32 %v327, %v3029
    %v3031 = vand.u32 %v3030, 4294901760
    %3032 = vmatpush.msra.mxu0 %v3031
    %v3033 = vand.u32 %v2828, 4294901760
    %3034 = vmatmul.f32.gmra.mxu0 %v3033
    %v3035 = vpop.f32.mrf.mxu0
    %v3036 = vadd.f32 %v2991, %v3035
    %3037 = vdwg.mxu0
    %3038 = vmatpush.msra.mxu0 0.0
    %3039 = vmatpush.msra.mxu0 0.0
    %3040 = vmatpush.msra.mxu0 0.0
    %3041 = vmatpush.msra.mxu0 0.0
    %3042 = vmatpush.msra.mxu0 0.0
    %3043 = vmatpush.msra.mxu0 0.0
    %3044 = vmatpush.msra.mxu0 0.0
    %3045 = vmatpush.msra.mxu0 0.0
    %v3046 = vand.u32 %v334, 4294901760
    %3047 = vmatpush.msra.mxu0 %v3046
    %v3048 = vand.u32 %v333, 4294901760
    %3049 = vmatpush.msra.mxu0 %v3048
    %v3050 = vand.u32 %v332, 4294901760
    %3051 = vmatpush.msra.mxu0 %v3050
    %v3052 = vand.u32 %v331, 4294901760
    %3053 = vmatpush.msra.mxu0 %v3052
    %v3054 = vand.u32 %v330, 4294901760
    %3055 = vmatpush.msra.mxu0 %v3054
    %v3056 = vand.u32 %v329, 4294901760
    %3057 = vmatpush.msra.mxu0 %v3056
    %v3058 = vand.u32 %v328, 4294901760
    %3059 = vmatpush.msra.mxu0 %v3058
    %v3060 = vand.u32 %v327, 4294901760
    %3061 = vmatpush.msra.mxu0 %v3060
    %v3062 = vand.u32 %v2828, 4294901760
    %3063 = vmatmul.f32.gmra.mxu0 %v3062
    %v3064 = vpop.f32.mrf.mxu0
    %v3065 = vadd.f32 %v3036, %v3064
    %3066 = vdwg.mxu0
    %v3067 = vsub.f32 0.0, %v3065
    %v3068 = vmul.f32 %v3067, 1.442695
    %v3069 = vpow.pop %v3068
    %v3070 = vadd.f32 %v3069, 1.0
    %v3071 = vrcp.pop %v3070
    %v3072 = vmul.f32 %v3070, %v3071
    %v3073 = vsub.f32 1.0, %v3072
    %v3074 = vmul.f32 %v3071, %v3073
    %v3075 = vadd.f32 %v3071, %v3074
    %vm3076 = vweird.f32 %v3070
    %vm3077 = vweird.f32 %v3071
    %vm3078 = vmor %vm3076, %vm3077
    %v3079 = vsel %vm3078, %v3071, %v3075
    %v3080 = vand.u32 2147483647, %v3070
    %vm3081 = vcmp.eq.f32.partialorder %v3080, 8.507059e+37
    %v3082 = vand.u32 %v3070, 2147483648
    %v3083 = vor.u32 1.1754944e-38, %v3082
    %v3084 = vsel %vm3081, %v3083, %v3079
    %v3085 = vmul.f32 1.0, %v3084
    %v3086 = vtanh.pop %v3065
    %v3087 = vmul.f32 %v3085, %v2538
    %3089 = vrot.lane.b32.xlu0 %v3086, 64
    %v3090 = vpop.permute.xlu0 %3089
    %v3092 = vmul.f32 %v3085, %v3090
    %3094 = vrot.lane.b32.xlu0 %v3092, 32
    %v3095 = vpop.permute.xlu0 %3094
    %v3097 = vadd.f32 %v3087, %v3095
    %v3098 = vtanh.pop %v3097
    %3100 = vrot.lane.b32.xlu0 %v3098, 64
    %v3101 = vpop.permute.xlu0 %3100
    %v3103 = vmul.f32 %v3085, %v3101
    %v3104 = vmul.f32 %v3103, %v852
    %3106 = vrot.lane.b32.xlu0 %v3104, 32
    %v3107 = vpop.permute.xlu0 %3106
    %v3109 = vsel %vm859, %v3107, 0.0
    %3110 = vadd.xlane.f32.xlu0 %v3109
    %v3111 = vpop.xlane.xlu0 %3110
    %v3112 = vsel %vm863, %v3111, -inf
    %v3113 = vrot.slane %v3112, 4
    %v3114 = vmax.f32 %v3112, %v3113
    %v3115 = vrot.slane %v3114, 2
    %v3116 = vmax.f32 %v3114, %v3115
    %v3117 = vrot.slane %v3116, 1
    %v3118 = vmax.f32 %v3116, %v3117
    %v3119 = vsub.f32 %v3111, %v3118
    %v3120 = vmul.f32 %v3119, 1.442695
    %v3121 = vpow.pop %v3120
    %v3122 = vsel %vm863, %v3121, 0.0
    %v3123 = vrot.slane %v3122, 4
    %v3124 = vadd.f32 %v3122, %v3123
    %v3125 = vrot.slane %v3124, 2
    %v3126 = vadd.f32 %v3124, %v3125
    %v3127 = vrot.slane %v3126, 1
    %v3128 = vadd.f32 %v3126, %v3127
    %v3129 = vrcp.pop %v3128
    %v3130 = vmul.f32 %v3128, %v3129
    %v3131 = vsub.f32 1.0, %v3130
    %v3132 = vmul.f32 %v3129, %v3131
    %v3133 = vadd.f32 %v3129, %v3132
    %vm3134 = vweird.f32 %v3128
    %vm3135 = vweird.f32 %v3129
    %vm3136 = vmor %vm3134, %vm3135
    %v3137 = vsel %vm3136, %v3129, %v3133
    %v3138 = vand.u32 2147483647, %v3128
    %vm3139 = vcmp.eq.f32.partialorder %v3138, 8.507059e+37
    %v3140 = vand.u32 %v3128, 2147483648
    %v3141 = vor.u32 1.1754944e-38, %v3140
    %v3142 = vsel %vm3139, %v3141, %v3137
    %v3143 = vmul.f32 %v3121, %v3142
    %v3144 = vmul.f32 %v3103, %v3143
    %v3145 = vadd.f32 %v2586, %v3144
    %v3146 = vsel %vm100, %v2820, 0
    %3148 = vmatpush.msra.mxu0 0.0
    %3149 = vmatpush.msra.mxu0 0.0
    %3150 = vmatpush.msra.mxu0 0.0
    %3151 = vmatpush.msra.mxu0 0.0
    %3152 = vmatpush.msra.mxu0 0.0
    %3153 = vmatpush.msra.mxu0 0.0
    %3154 = vmatpush.msra.mxu0 0.0
    %3155 = vmatpush.msra.mxu0 0.0
    %3156 = vmatpush.msra.mxu0 0.0
    %3157 = vmatpush.msra.mxu0 0.0
    %3158 = vmatpush.msra.mxu0 0.0
    %3159 = vmatpush.msra.mxu0 0.0
    %v3160 = vand.u32 %v326, 4294901760
    %3161 = vmatpush.msra.mxu0 %v3160
    %v3162 = vand.u32 %v325, 4294901760
    %3163 = vmatpush.msra.mxu0 %v3162
    %v3164 = vand.u32 %v324, 4294901760
    %3165 = vmatpush.msra.mxu0 %v3164
    %v3166 = vand.u32 %v323, 4294901760
    %3167 = vmatpush.msra.mxu0 %v3166
    %v3168 = vand.u32 %v3146, 4294901760
    %v3169 = vsub.f32 %v3146, %v3168
    %v3170 = vand.u32 %v3169, 4294901760
    %v3171 = vsub.f32 %v3169, %v3170
    %v3172 = vand.u32 %v3171, 4294901760
    %3173 = vmatmul.f32.gmra.mxu0 %v3172
    %v3174 = vpop.f32.mrf.mxu0
    %v3175 = vadd.f32 0.0, %v3174
    %3176 = vdwg.mxu0
    %3177 = vmatpush.msra.mxu0 0.0
    %3178 = vmatpush.msra.mxu0 0.0
    %3179 = vmatpush.msra.mxu0 0.0
    %3180 = vmatpush.msra.mxu0 0.0
    %3181 = vmatpush.msra.mxu0 0.0
    %3182 = vmatpush.msra.mxu0 0.0
    %3183 = vmatpush.msra.mxu0 0.0
    %3184 = vmatpush.msra.mxu0 0.0
    %3185 = vmatpush.msra.mxu0 0.0
    %3186 = vmatpush.msra.mxu0 0.0
    %3187 = vmatpush.msra.mxu0 0.0
    %3188 = vmatpush.msra.mxu0 0.0
    %v3189 = vand.u32 %v326, 4294901760
    %v3190 = vsub.f32 %v326, %v3189
    %v3191 = vand.u32 %v3190, 4294901760
    %v3192 = vsub.f32 %v3190, %v3191
    %v3193 = vand.u32 %v3192, 4294901760
    %3194 = vmatpush.msra.mxu0 %v3193
    %v3195 = vand.u32 %v325, 4294901760
    %v3196 = vsub.f32 %v325, %v3195
    %v3197 = vand.u32 %v3196, 4294901760
    %v3198 = vsub.f32 %v3196, %v3197
    %v3199 = vand.u32 %v3198, 4294901760
    %3200 = vmatpush.msra.mxu0 %v3199
    %v3201 = vand.u32 %v324, 4294901760
    %v3202 = vsub.f32 %v324, %v3201
    %v3203 = vand.u32 %v3202, 4294901760
    %v3204 = vsub.f32 %v3202, %v3203
    %v3205 = vand.u32 %v3204, 4294901760
    %3206 = vmatpush.msra.mxu0 %v3205
    %v3207 = vand.u32 %v323, 4294901760
    %v3208 = vsub.f32 %v323, %v3207
    %v3209 = vand.u32 %v3208, 4294901760
    %v3210 = vsub.f32 %v3208, %v3209
    %v3211 = vand.u32 %v3210, 4294901760
    %3212 = vmatpush.msra.mxu0 %v3211
    %v3213 = vand.u32 %v3146, 4294901760
    %3214 = vmatmul.f32.gmra.mxu0 %v3213
    %v3215 = vpop.f32.mrf.mxu0
    %v3216 = vadd.f32 %v3175, %v3215
    %3217 = vdwg.mxu0
    %3218 = vmatpush.msra.mxu0 0.0
    %3219 = vmatpush.msra.mxu0 0.0
    %3220 = vmatpush.msra.mxu0 0.0
    %3221 = vmatpush.msra.mxu0 0.0
    %3222 = vmatpush.msra.mxu0 0.0
    %3223 = vmatpush.msra.mxu0 0.0
    %3224 = vmatpush.msra.mxu0 0.0
    %3225 = vmatpush.msra.mxu0 0.0
    %3226 = vmatpush.msra.mxu0 0.0
    %3227 = vmatpush.msra.mxu0 0.0
    %3228 = vmatpush.msra.mxu0 0.0
    %3229 = vmatpush.msra.mxu0 0.0
    %v3230 = vand.u32 %v326, 4294901760
    %v3231 = vsub.f32 %v326, %v3230
    %3232 = vmatpush.msra.mxu0 %v3231
    %v3233 = vand.u32 %v325, 4294901760
    %v3234 = vsub.f32 %v325, %v3233
    %3235 = vmatpush.msra.mxu0 %v3234
    %v3236 = vand.u32 %v324, 4294901760
    %v3237 = vsub.f32 %v324, %v3236
    %3238 = vmatpush.msra.mxu0 %v3237
    %v3239 = vand.u32 %v323, 4294901760
    %v3240 = vsub.f32 %v323, %v3239
    %3241 = vmatpush.msra.mxu0 %v3240
    %v3242 = vand.u32 %v3146, 4294901760
    %v3243 = vsub.f32 %v3146, %v3242
    %3244 = vmatmul.f32.gmra.mxu0 %v3243
    %v3245 = vpop.f32.mrf.mxu0
    %v3246 = vadd.f32 %v3216, %v3245
    %3247 = vdwg.mxu0
    %3248 = vmatpush.msra.mxu0 0.0
    %3249 = vmatpush.msra.mxu0 0.0
    %3250 = vmatpush.msra.mxu0 0.0
    %3251 = vmatpush.msra.mxu0 0.0
    %3252 = vmatpush.msra.mxu0 0.0
    %3253 = vmatpush.msra.mxu0 0.0
    %3254 = vmatpush.msra.mxu0 0.0
    %3255 = vmatpush.msra.mxu0 0.0
    %3256 = vmatpush.msra.mxu0 0.0
    %3257 = vmatpush.msra.mxu0 0.0
    %3258 = vmatpush.msra.mxu0 0.0
    %3259 = vmatpush.msra.mxu0 0.0
    %v3260 = vand.u32 %v326, 4294901760
    %3261 = vmatpush.msra.mxu0 %v3260
    %v3262 = vand.u32 %v325, 4294901760
    %3263 = vmatpush.msra.mxu0 %v3262
    %v3264 = vand.u32 %v324, 4294901760
    %3265 = vmatpush.msra.mxu0 %v3264
    %v3266 = vand.u32 %v323, 4294901760
    %3267 = vmatpush.msra.mxu0 %v3266
    %v3268 = vand.u32 %v3146, 4294901760
    %v3269 = vsub.f32 %v3146, %v3268
    %v3270 = vand.u32 %v3269, 4294901760
    %3271 = vmatmul.f32.gmra.mxu0 %v3270
    %v3272 = vpop.f32.mrf.mxu0
    %v3273 = vadd.f32 %v3246, %v3272
    %3274 = vdwg.mxu0
    %3275 = vmatpush.msra.mxu0 0.0
    %3276 = vmatpush.msra.mxu0 0.0
    %3277 = vmatpush.msra.mxu0 0.0
    %3278 = vmatpush.msra.mxu0 0.0
    %3279 = vmatpush.msra.mxu0 0.0
    %3280 = vmatpush.msra.mxu0 0.0
    %3281 = vmatpush.msra.mxu0 0.0
    %3282 = vmatpush.msra.mxu0 0.0
    %3283 = vmatpush.msra.mxu0 0.0
    %3284 = vmatpush.msra.mxu0 0.0
    %3285 = vmatpush.msra.mxu0 0.0
    %3286 = vmatpush.msra.mxu0 0.0
    %v3287 = vand.u32 %v326, 4294901760
    %v3288 = vsub.f32 %v326, %v3287
    %v3289 = vand.u32 %v3288, 4294901760
    %3290 = vmatpush.msra.mxu0 %v3289
    %v3291 = vand.u32 %v325, 4294901760
    %v3292 = vsub.f32 %v325, %v3291
    %v3293 = vand.u32 %v3292, 4294901760
    %3294 = vmatpush.msra.mxu0 %v3293
    %v3295 = vand.u32 %v324, 4294901760
    %v3296 = vsub.f32 %v324, %v3295
    %v3297 = vand.u32 %v3296, 4294901760
    %3298 = vmatpush.msra.mxu0 %v3297
    %v3299 = vand.u32 %v323, 4294901760
    %v3300 = vsub.f32 %v323, %v3299
    %v3301 = vand.u32 %v3300, 4294901760
    %3302 = vmatpush.msra.mxu0 %v3301
    %v3303 = vand.u32 %v3146, 4294901760
    %3304 = vmatmul.f32.gmra.mxu0 %v3303
    %v3305 = vpop.f32.mrf.mxu0
    %v3306 = vadd.f32 %v3273, %v3305
    %3307 = vdwg.mxu0
    %3308 = vmatpush.msra.mxu0 0.0
    %3309 = vmatpush.msra.mxu0 0.0
    %3310 = vmatpush.msra.mxu0 0.0
    %3311 = vmatpush.msra.mxu0 0.0
    %3312 = vmatpush.msra.mxu0 0.0
    %3313 = vmatpush.msra.mxu0 0.0
    %3314 = vmatpush.msra.mxu0 0.0
    %3315 = vmatpush.msra.mxu0 0.0
    %3316 = vmatpush.msra.mxu0 0.0
    %3317 = vmatpush.msra.mxu0 0.0
    %3318 = vmatpush.msra.mxu0 0.0
    %3319 = vmatpush.msra.mxu0 0.0
    %v3320 = vand.u32 %v326, 4294901760
    %3321 = vmatpush.msra.mxu0 %v3320
    %v3322 = vand.u32 %v325, 4294901760
    %3323 = vmatpush.msra.mxu0 %v3322
    %v3324 = vand.u32 %v324, 4294901760
    %3325 = vmatpush.msra.mxu0 %v3324
    %v3326 = vand.u32 %v323, 4294901760
    %3327 = vmatpush.msra.mxu0 %v3326
    %v3328 = vand.u32 %v3146, 4294901760
    %3329 = vmatmul.f32.gmra.mxu0 %v3328
    %v3330 = vpop.f32.mrf.mxu0
    %v3331 = vadd.f32 %v3306, %v3330
    %3332 = vdwg.mxu0
    %v3334 = vrot.slane %v3331, 6
    %v3336 = vadd.f32 %v321, %v3334
    %v3337 = vsub.f32 0.0, %v3336
    %v3338 = vmul.f32 %v3337, 1.442695
    %v3339 = vpow.pop %v3338
    %v3340 = vadd.f32 %v3339, 1.0
    %v3341 = vrcp.pop %v3340
    %v3342 = vmul.f32 %v3340, %v3341
    %v3343 = vsub.f32 1.0, %v3342
    %v3344 = vmul.f32 %v3341, %v3343
    %v3345 = vadd.f32 %v3341, %v3344
    %vm3346 = vweird.f32 %v3340
    %vm3347 = vweird.f32 %v3341
    %vm3348 = vmor %vm3346, %vm3347
    %v3349 = vsel %vm3348, %v3341, %v3345
    %v3350 = vand.u32 2147483647, %v3340
    %vm3351 = vcmp.eq.f32.partialorder %v3350, 8.507059e+37
    %v3352 = vand.u32 %v3340, 2147483648
    %v3353 = vor.u32 1.1754944e-38, %v3352
    %v3354 = vsel %vm3351, %v3353, %v3349
    %v3355 = vmul.f32 1.0, %v3354
    %v3356 = vtanh.pop %v3336
    %v3358 = vrot.slane %v2811, 6
    %v3360 = vmul.f32 %v3355, %v3358
    %3362 = vrot.lane.b32.xlu0 %v3356, 64
    %v3363 = vpop.permute.xlu0 %3362
    %v3365 = vmul.f32 %v3355, %v3363
    %3367 = vrot.lane.b32.xlu0 %v3365, 32
    %v3368 = vpop.permute.xlu0 %3367
    %v3370 = vadd.f32 %v3360, %v3368
    %v3371 = vtanh.pop %v3370
    %3373 = vrot.lane.b32.xlu0 %v3371, 64
    %v3374 = vpop.permute.xlu0 %3373
    %v3376 = vmul.f32 %v3355, %v3374
    %3378 = vrot.lane.b32.xlu0 %v3376, 32
    %v3379 = vpop.permute.xlu0 %3378
    %v3382 = vrot.slane %v3103, 6
    %3383 = vrot.lane.b32.xlu0 %v3382, 64
    %v3384 = vpop.permute.xlu0 %3383
    %v3386 = vsel %vm100, %v3379, %v3384
    %v3388 = vrot.slane %v3386, 2
    %v3389 = vsel %vm571, %v3388, 0
    %3391 = vmatpush.msra.mxu0 0.0
    %3392 = vmatpush.msra.mxu0 0.0
    %3393 = vmatpush.msra.mxu0 0.0
    %3394 = vmatpush.msra.mxu0 0.0
    %3395 = vmatpush.msra.mxu0 0.0
    %3396 = vmatpush.msra.mxu0 0.0
    %3397 = vmatpush.msra.mxu0 0.0
    %3398 = vmatpush.msra.mxu0 0.0
    %v3399 = vand.u32 %v334, 4294901760
    %3400 = vmatpush.msra.mxu0 %v3399
    %v3401 = vand.u32 %v333, 4294901760
    %3402 = vmatpush.msra.mxu0 %v3401
    %v3403 = vand.u32 %v332, 4294901760
    %3404 = vmatpush.msra.mxu0 %v3403
    %v3405 = vand.u32 %v331, 4294901760
    %3406 = vmatpush.msra.mxu0 %v3405
    %v3407 = vand.u32 %v330, 4294901760
    %3408 = vmatpush.msra.mxu0 %v3407
    %v3409 = vand.u32 %v329, 4294901760
    %3410 = vmatpush.msra.mxu0 %v3409
    %v3411 = vand.u32 %v328, 4294901760
    %3412 = vmatpush.msra.mxu0 %v3411
    %v3413 = vand.u32 %v327, 4294901760
    %3414 = vmatpush.msra.mxu0 %v3413
    %v3415 = vand.u32 %v3389, 4294901760
    %v3416 = vsub.f32 %v3389, %v3415
    %v3417 = vand.u32 %v3416, 4294901760
    %v3418 = vsub.f32 %v3416, %v3417
    %v3419 = vand.u32 %v3418, 4294901760
    %3420 = vmatmul.f32.gmra.mxu0 %v3419
    %v3421 = vpop.f32.mrf.mxu0
    %v3422 = vadd.f32 %v569, %v3421
    %3423 = vdwg.mxu0
    %3424 = vmatpush.msra.mxu0 0.0
    %3425 = vmatpush.msra.mxu0 0.0
    %3426 = vmatpush.msra.mxu0 0.0
    %3427 = vmatpush.msra.mxu0 0.0
    %3428 = vmatpush.msra.mxu0 0.0
    %3429 = vmatpush.msra.mxu0 0.0
    %3430 = vmatpush.msra.mxu0 0.0
    %3431 = vmatpush.msra.mxu0 0.0
    %v3432 = vand.u32 %v334, 4294901760
    %v3433 = vsub.f32 %v334, %v3432
    %v3434 = vand.u32 %v3433, 4294901760
    %v3435 = vsub.f32 %v3433, %v3434
    %v3436 = vand.u32 %v3435, 4294901760
    %3437 = vmatpush.msra.mxu0 %v3436
    %v3438 = vand.u32 %v333, 4294901760
    %v3439 = vsub.f32 %v333, %v3438
    %v3440 = vand.u32 %v3439, 4294901760
    %v3441 = vsub.f32 %v3439, %v3440
    %v3442 = vand.u32 %v3441, 4294901760
    %3443 = vmatpush.msra.mxu0 %v3442
    %v3444 = vand.u32 %v332, 4294901760
    %v3445 = vsub.f32 %v332, %v3444
    %v3446 = vand.u32 %v3445, 4294901760
    %v3447 = vsub.f32 %v3445, %v3446
    %v3448 = vand.u32 %v3447, 4294901760
    %3449 = vmatpush.msra.mxu0 %v3448
    %v3450 = vand.u32 %v331, 4294901760
    %v3451 = vsub.f32 %v331, %v3450
    %v3452 = vand.u32 %v3451, 4294901760
    %v3453 = vsub.f32 %v3451, %v3452
    %v3454 = vand.u32 %v3453, 4294901760
    %3455 = vmatpush.msra.mxu0 %v3454
    %v3456 = vand.u32 %v330, 4294901760
    %v3457 = vsub.f32 %v330, %v3456
    %v3458 = vand.u32 %v3457, 4294901760
    %v3459 = vsub.f32 %v3457, %v3458
    %v3460 = vand.u32 %v3459, 4294901760
    %3461 = vmatpush.msra.mxu0 %v3460
    %v3462 = vand.u32 %v329, 4294901760
    %v3463 = vsub.f32 %v329, %v3462
    %v3464 = vand.u32 %v3463, 4294901760
    %v3465 = vsub.f32 %v3463, %v3464
    %v3466 = vand.u32 %v3465, 4294901760
    %3467 = vmatpush.msra.mxu0 %v3466
    %v3468 = vand.u32 %v328, 4294901760
    %v3469 = vsub.f32 %v328, %v3468
    %v3470 = vand.u32 %v3469, 4294901760
    %v3471 = vsub.f32 %v3469, %v3470
    %v3472 = vand.u32 %v3471, 4294901760
    %3473 = vmatpush.msra.mxu0 %v3472
    %v3474 = vand.u32 %v327, 4294901760
    %v3475 = vsub.f32 %v327, %v3474
    %v3476 = vand.u32 %v3475, 4294901760
    %v3477 = vsub.f32 %v3475, %v3476
    %v3478 = vand.u32 %v3477, 4294901760
    %3479 = vmatpush.msra.mxu0 %v3478
    %v3480 = vand.u32 %v3389, 4294901760
    %3481 = vmatmul.f32.gmra.mxu0 %v3480
    %v3482 = vpop.f32.mrf.mxu0
    %v3483 = vadd.f32 %v3422, %v3482
    %3484 = vdwg.mxu0
    %3485 = vmatpush.msra.mxu0 0.0
    %3486 = vmatpush.msra.mxu0 0.0
    %3487 = vmatpush.msra.mxu0 0.0
    %3488 = vmatpush.msra.mxu0 0.0
    %3489 = vmatpush.msra.mxu0 0.0
    %3490 = vmatpush.msra.mxu0 0.0
    %3491 = vmatpush.msra.mxu0 0.0
    %3492 = vmatpush.msra.mxu0 0.0
    %v3493 = vand.u32 %v334, 4294901760
    %v3494 = vsub.f32 %v334, %v3493
    %3495 = vmatpush.msra.mxu0 %v3494
    %v3496 = vand.u32 %v333, 4294901760
    %v3497 = vsub.f32 %v333, %v3496
    %3498 = vmatpush.msra.mxu0 %v3497
    %v3499 = vand.u32 %v332, 4294901760
    %v3500 = vsub.f32 %v332, %v3499
    %3501 = vmatpush.msra.mxu0 %v3500
    %v3502 = vand.u32 %v331, 4294901760
    %v3503 = vsub.f32 %v331, %v3502
    %3504 = vmatpush.msra.mxu0 %v3503
    %v3505 = vand.u32 %v330, 4294901760
    %v3506 = vsub.f32 %v330, %v3505
    %3507 = vmatpush.msra.mxu0 %v3506
    %v3508 = vand.u32 %v329, 4294901760
    %v3509 = vsub.f32 %v329, %v3508
    %3510 = vmatpush.msra.mxu0 %v3509
    %v3511 = vand.u32 %v328, 4294901760
    %v3512 = vsub.f32 %v328, %v3511
    %3513 = vmatpush.msra.mxu0 %v3512
    %v3514 = vand.u32 %v327, 4294901760
    %v3515 = vsub.f32 %v327, %v3514
    %3516 = vmatpush.msra.mxu0 %v3515
    %v3517 = vand.u32 %v3389, 4294901760
    %v3518 = vsub.f32 %v3389, %v3517
    %3519 = vmatmul.f32.gmra.mxu0 %v3518
    %v3520 = vpop.f32.mrf.mxu0
    %v3521 = vadd.f32 %v3483, %v3520
    %3522 = vdwg.mxu0
    %3523 = vmatpush.msra.mxu0 0.0
    %3524 = vmatpush.msra.mxu0 0.0
    %3525 = vmatpush.msra.mxu0 0.0
    %3526 = vmatpush.msra.mxu0 0.0
    %3527 = vmatpush.msra.mxu0 0.0
    %3528 = vmatpush.msra.mxu0 0.0
    %3529 = vmatpush.msra.mxu0 0.0
    %3530 = vmatpush.msra.mxu0 0.0
    %v3531 = vand.u32 %v334, 4294901760
    %3532 = vmatpush.msra.mxu0 %v3531
    %v3533 = vand.u32 %v333, 4294901760
    %3534 = vmatpush.msra.mxu0 %v3533
    %v3535 = vand.u32 %v332, 4294901760
    %3536 = vmatpush.msra.mxu0 %v3535
    %v3537 = vand.u32 %v331, 4294901760
    %3538 = vmatpush.msra.mxu0 %v3537
    %v3539 = vand.u32 %v330, 4294901760
    %3540 = vmatpush.msra.mxu0 %v3539
    %v3541 = vand.u32 %v329, 4294901760
    %3542 = vmatpush.msra.mxu0 %v3541
    %v3543 = vand.u32 %v328, 4294901760
    %3544 = vmatpush.msra.mxu0 %v3543
    %v3545 = vand.u32 %v327, 4294901760
    %3546 = vmatpush.msra.mxu0 %v3545
    %v3547 = vand.u32 %v3389, 4294901760
    %v3548 = vsub.f32 %v3389, %v3547
    %v3549 = vand.u32 %v3548, 4294901760
    %3550 = vmatmul.f32.gmra.mxu0 %v3549
    %v3551 = vpop.f32.mrf.mxu0
    %v3552 = vadd.f32 %v3521, %v3551
    %3553 = vdwg.mxu0
    %3554 = vmatpush.msra.mxu0 0.0
    %3555 = vmatpush.msra.mxu0 0.0
    %3556 = vmatpush.msra.mxu0 0.0
    %3557 = vmatpush.msra.mxu0 0.0
    %3558 = vmatpush.msra.mxu0 0.0
    %3559 = vmatpush.msra.mxu0 0.0
    %3560 = vmatpush.msra.mxu0 0.0
    %3561 = vmatpush.msra.mxu0 0.0
    %v3562 = vand.u32 %v334, 4294901760
    %v3563 = vsub.f32 %v334, %v3562
    %v3564 = vand.u32 %v3563, 4294901760
    %3565 = vmatpush.msra.mxu0 %v3564
    %v3566 = vand.u32 %v333, 4294901760
    %v3567 = vsub.f32 %v333, %v3566
    %v3568 = vand.u32 %v3567, 4294901760
    %3569 = vmatpush.msra.mxu0 %v3568
    %v3570 = vand.u32 %v332, 4294901760
    %v3571 = vsub.f32 %v332, %v3570
    %v3572 = vand.u32 %v3571, 4294901760
    %3573 = vmatpush.msra.mxu0 %v3572
    %v3574 = vand.u32 %v331, 4294901760
    %v3575 = vsub.f32 %v331, %v3574
    %v3576 = vand.u32 %v3575, 4294901760
    %3577 = vmatpush.msra.mxu0 %v3576
    %v3578 = vand.u32 %v330, 4294901760
    %v3579 = vsub.f32 %v330, %v3578
    %v3580 = vand.u32 %v3579, 4294901760
    %3581 = vmatpush.msra.mxu0 %v3580
    %v3582 = vand.u32 %v329, 4294901760
    %v3583 = vsub.f32 %v329, %v3582
    %v3584 = vand.u32 %v3583, 4294901760
    %3585 = vmatpush.msra.mxu0 %v3584
    %v3586 = vand.u32 %v328, 4294901760
    %v3587 = vsub.f32 %v328, %v3586
    %v3588 = vand.u32 %v3587, 4294901760
    %3589 = vmatpush.msra.mxu0 %v3588
    %v3590 = vand.u32 %v327, 4294901760
    %v3591 = vsub.f32 %v327, %v3590
    %v3592 = vand.u32 %v3591, 4294901760
    %3593 = vmatpush.msra.mxu0 %v3592
    %v3594 = vand.u32 %v3389, 4294901760
    %3595 = vmatmul.f32.gmra.mxu0 %v3594
    %v3596 = vpop.f32.mrf.mxu0
    %v3597 = vadd.f32 %v3552, %v3596
    %3598 = vdwg.mxu0
    %3599 = vmatpush.msra.mxu0 0.0
    %3600 = vmatpush.msra.mxu0 0.0
    %3601 = vmatpush.msra.mxu0 0.0
    %3602 = vmatpush.msra.mxu0 0.0
    %3603 = vmatpush.msra.mxu0 0.0
    %3604 = vmatpush.msra.mxu0 0.0
    %3605 = vmatpush.msra.mxu0 0.0
    %3606 = vmatpush.msra.mxu0 0.0
    %v3607 = vand.u32 %v334, 4294901760
    %3608 = vmatpush.msra.mxu0 %v3607
    %v3609 = vand.u32 %v333, 4294901760
    %3610 = vmatpush.msra.mxu0 %v3609
    %v3611 = vand.u32 %v332, 4294901760
    %3612 = vmatpush.msra.mxu0 %v3611
    %v3613 = vand.u32 %v331, 4294901760
    %3614 = vmatpush.msra.mxu0 %v3613
    %v3615 = vand.u32 %v330, 4294901760
    %3616 = vmatpush.msra.mxu0 %v3615
    %v3617 = vand.u32 %v329, 4294901760
    %3618 = vmatpush.msra.mxu0 %v3617
    %v3619 = vand.u32 %v328, 4294901760
    %3620 = vmatpush.msra.mxu0 %v3619
    %v3621 = vand.u32 %v327, 4294901760
    %3622 = vmatpush.msra.mxu0 %v3621
    %v3623 = vand.u32 %v3389, 4294901760
    %3624 = vmatmul.f32.gmra.mxu0 %v3623
    %v3625 = vpop.f32.mrf.mxu0
    %v3626 = vadd.f32 %v3597, %v3625
    %3627 = vdwg.mxu0
    %v3628 = vsub.f32 0.0, %v3626
    %v3629 = vmul.f32 %v3628, 1.442695
    %v3630 = vpow.pop %v3629
    %v3631 = vadd.f32 %v3630, 1.0
    %v3632 = vrcp.pop %v3631
    %v3633 = vmul.f32 %v3631, %v3632
    %v3634 = vsub.f32 1.0, %v3633
    %v3635 = vmul.f32 %v3632, %v3634
    %v3636 = vadd.f32 %v3632, %v3635
    %vm3637 = vweird.f32 %v3631
    %vm3638 = vweird.f32 %v3632
    %vm3639 = vmor %vm3637, %vm3638
    %v3640 = vsel %vm3639, %v3632, %v3636
    %v3641 = vand.u32 2147483647, %v3631
    %vm3642 = vcmp.eq.f32.partialorder %v3641, 8.507059e+37
    %v3643 = vand.u32 %v3631, 2147483648
    %v3644 = vor.u32 1.1754944e-38, %v3643
    %v3645 = vsel %vm3642, %v3644, %v3640
    %v3646 = vmul.f32 1.0, %v3645
    %v3647 = vtanh.pop %v3626
    %v3648 = vmul.f32 %v3646, %v3097
    %3650 = vrot.lane.b32.xlu0 %v3647, 64
    %v3651 = vpop.permute.xlu0 %3650
    %v3653 = vmul.f32 %v3646, %v3651
    %3655 = vrot.lane.b32.xlu0 %v3653, 32
    %v3656 = vpop.permute.xlu0 %3655
    %v3658 = vadd.f32 %v3648, %v3656
    %v3659 = vtanh.pop %v3658
    %3661 = vrot.lane.b32.xlu0 %v3659, 64
    %v3662 = vpop.permute.xlu0 %3661
    %v3664 = vmul.f32 %v3646, %v3662
    %v3665 = vmul.f32 %v3664, %v852
    %3667 = vrot.lane.b32.xlu0 %v3665, 32
    %v3668 = vpop.permute.xlu0 %3667
    %v3670 = vsel %vm859, %v3668, 0.0
    %3671 = vadd.xlane.f32.xlu0 %v3670
    %v3672 = vpop.xlane.xlu0 %3671
    %v3673 = vsel %vm863, %v3672, -inf
    %v3674 = vrot.slane %v3673, 4
    %v3675 = vmax.f32 %v3673, %v3674
    %v3676 = vrot.slane %v3675, 2
    %v3677 = vmax.f32 %v3675, %v3676
    %v3678 = vrot.slane %v3677, 1
    %v3679 = vmax.f32 %v3677, %v3678
    %v3680 = vsub.f32 %v3672, %v3679
    %v3681 = vmul.f32 %v3680, 1.442695
    %v3682 = vpow.pop %v3681
    %v3683 = vsel %vm863, %v3682, 0.0
    %v3684 = vrot.slane %v3683, 4
    %v3685 = vadd.f32 %v3683, %v3684
    %v3686 = vrot.slane %v3685, 2
    %v3687 = vadd.f32 %v3685, %v3686
    %v3688 = vrot.slane %v3687, 1
    %v3689 = vadd.f32 %v3687, %v3688
    %v3690 = vrcp.pop %v3689
    %v3691 = vmul.f32 %v3689, %v3690
    %v3692 = vsub.f32 1.0, %v3691
    %v3693 = vmul.f32 %v3690, %v3692
    %v3694 = vadd.f32 %v3690, %v3693
    %vm3695 = vweird.f32 %v3689
    %vm3696 = vweird.f32 %v3690
    %vm3697 = vmor %vm3695, %vm3696
    %v3698 = vsel %vm3697, %v3690, %v3694
    %v3699 = vand.u32 2147483647, %v3689
    %vm3700 = vcmp.eq.f32.partialorder %v3699, 8.507059e+37
    %v3701 = vand.u32 %v3689, 2147483648
    %v3702 = vor.u32 1.1754944e-38, %v3701
    %v3703 = vsel %vm3700, %v3702, %v3698
    %v3704 = vmul.f32 %v3682, %v3703
    %v3705 = vmul.f32 %v3664, %v3704
    %v3706 = vadd.f32 %v3145, %v3705
    %v3707 = vrot.slane %v3376, 2
    %3708 = vrot.lane.b32.xlu0 %v3707, 32
    %v3709 = vpop.permute.xlu0 %3708
    %v3710 = vsel %vm100, %v3709, 0
    %3712 = vmatpush.msra.mxu0 0.0
    %3713 = vmatpush.msra.mxu0 0.0
    %3714 = vmatpush.msra.mxu0 0.0
    %3715 = vmatpush.msra.mxu0 0.0
    %3716 = vmatpush.msra.mxu0 0.0
    %3717 = vmatpush.msra.mxu0 0.0
    %3718 = vmatpush.msra.mxu0 0.0
    %3719 = vmatpush.msra.mxu0 0.0
    %3720 = vmatpush.msra.mxu0 0.0
    %3721 = vmatpush.msra.mxu0 0.0
    %3722 = vmatpush.msra.mxu0 0.0
    %3723 = vmatpush.msra.mxu0 0.0
    %v3724 = vand.u32 %v326, 4294901760
    %3725 = vmatpush.msra.mxu0 %v3724
    %v3726 = vand.u32 %v325, 4294901760
    %3727 = vmatpush.msra.mxu0 %v3726
    %v3728 = vand.u32 %v324, 4294901760
    %3729 = vmatpush.msra.mxu0 %v3728
    %v3730 = vand.u32 %v323, 4294901760
    %3731 = vmatpush.msra.mxu0 %v3730
    %v3732 = vand.u32 %v3710, 4294901760
    %v3733 = vsub.f32 %v3710, %v3732
    %v3734 = vand.u32 %v3733, 4294901760
    %v3735 = vsub.f32 %v3733, %v3734
    %v3736 = vand.u32 %v3735, 4294901760
    %3737 = vmatmul.f32.gmra.mxu0 %v3736
    %v3738 = vpop.f32.mrf.mxu0
    %v3739 = vadd.f32 0.0, %v3738
    %3740 = vdwg.mxu0
    %3741 = vmatpush.msra.mxu0 0.0
    %3742 = vmatpush.msra.mxu0 0.0
    %3743 = vmatpush.msra.mxu0 0.0
    %3744 = vmatpush.msra.mxu0 0.0
    %3745 = vmatpush.msra.mxu0 0.0
    %3746 = vmatpush.msra.mxu0 0.0
    %3747 = vmatpush.msra.mxu0 0.0
    %3748 = vmatpush.msra.mxu0 0.0
    %3749 = vmatpush.msra.mxu0 0.0
    %3750 = vmatpush.msra.mxu0 0.0
    %3751 = vmatpush.msra.mxu0 0.0
    %3752 = vmatpush.msra.mxu0 0.0
    %v3753 = vand.u32 %v326, 4294901760
    %v3754 = vsub.f32 %v326, %v3753
    %v3755 = vand.u32 %v3754, 4294901760
    %v3756 = vsub.f32 %v3754, %v3755
    %v3757 = vand.u32 %v3756, 4294901760
    %3758 = vmatpush.msra.mxu0 %v3757
    %v3759 = vand.u32 %v325, 4294901760
    %v3760 = vsub.f32 %v325, %v3759
    %v3761 = vand.u32 %v3760, 4294901760
    %v3762 = vsub.f32 %v3760, %v3761
    %v3763 = vand.u32 %v3762, 4294901760
    %3764 = vmatpush.msra.mxu0 %v3763
    %v3765 = vand.u32 %v324, 4294901760
    %v3766 = vsub.f32 %v324, %v3765
    %v3767 = vand.u32 %v3766, 4294901760
    %v3768 = vsub.f32 %v3766, %v3767
    %v3769 = vand.u32 %v3768, 4294901760
    %3770 = vmatpush.msra.mxu0 %v3769
    %v3771 = vand.u32 %v323, 4294901760
    %v3772 = vsub.f32 %v323, %v3771
    %v3773 = vand.u32 %v3772, 4294901760
    %v3774 = vsub.f32 %v3772, %v3773
    %v3775 = vand.u32 %v3774, 4294901760
    %3776 = vmatpush.msra.mxu0 %v3775
    %v3777 = vand.u32 %v3710, 4294901760
    %3778 = vmatmul.f32.gmra.mxu0 %v3777
    %v3779 = vpop.f32.mrf.mxu0
    %v3780 = vadd.f32 %v3739, %v3779
    %3781 = vdwg.mxu0
    %3782 = vmatpush.msra.mxu0 0.0
    %3783 = vmatpush.msra.mxu0 0.0
    %3784 = vmatpush.msra.mxu0 0.0
    %3785 = vmatpush.msra.mxu0 0.0
    %3786 = vmatpush.msra.mxu0 0.0
    %3787 = vmatpush.msra.mxu0 0.0
    %3788 = vmatpush.msra.mxu0 0.0
    %3789 = vmatpush.msra.mxu0 0.0
    %3790 = vmatpush.msra.mxu0 0.0
    %3791 = vmatpush.msra.mxu0 0.0
    %3792 = vmatpush.msra.mxu0 0.0
    %3793 = vmatpush.msra.mxu0 0.0
    %v3794 = vand.u32 %v326, 4294901760
    %v3795 = vsub.f32 %v326, %v3794
    %3796 = vmatpush.msra.mxu0 %v3795
    %v3797 = vand.u32 %v325, 4294901760
    %v3798 = vsub.f32 %v325, %v3797
    %3799 = vmatpush.msra.mxu0 %v3798
    %v3800 = vand.u32 %v324, 4294901760
    %v3801 = vsub.f32 %v324, %v3800
    %3802 = vmatpush.msra.mxu0 %v3801
    %v3803 = vand.u32 %v323, 4294901760
    %v3804 = vsub.f32 %v323, %v3803
    %3805 = vmatpush.msra.mxu0 %v3804
    %v3806 = vand.u32 %v3710, 4294901760
    %v3807 = vsub.f32 %v3710, %v3806
    %3808 = vmatmul.f32.gmra.mxu0 %v3807
    %v3809 = vpop.f32.mrf.mxu0
    %v3810 = vadd.f32 %v3780, %v3809
    %3811 = vdwg.mxu0
    %3812 = vmatpush.msra.mxu0 0.0
    %3813 = vmatpush.msra.mxu0 0.0
    %3814 = vmatpush.msra.mxu0 0.0
    %3815 = vmatpush.msra.mxu0 0.0
    %3816 = vmatpush.msra.mxu0 0.0
    %3817 = vmatpush.msra.mxu0 0.0
    %3818 = vmatpush.msra.mxu0 0.0
    %3819 = vmatpush.msra.mxu0 0.0
    %3820 = vmatpush.msra.mxu0 0.0
    %3821 = vmatpush.msra.mxu0 0.0
    %3822 = vmatpush.msra.mxu0 0.0
    %3823 = vmatpush.msra.mxu0 0.0
    %v3824 = vand.u32 %v326, 4294901760
    %3825 = vmatpush.msra.mxu0 %v3824
    %v3826 = vand.u32 %v325, 4294901760
    %3827 = vmatpush.msra.mxu0 %v3826
    %v3828 = vand.u32 %v324, 4294901760
    %3829 = vmatpush.msra.mxu0 %v3828
    %v3830 = vand.u32 %v323, 4294901760
    %3831 = vmatpush.msra.mxu0 %v3830
    %v3832 = vand.u32 %v3710, 4294901760
    %v3833 = vsub.f32 %v3710, %v3832
    %v3834 = vand.u32 %v3833, 4294901760
    %3835 = vmatmul.f32.gmra.mxu0 %v3834
    %v3836 = vpop.f32.mrf.mxu0
    %v3837 = vadd.f32 %v3810, %v3836
    %3838 = vdwg.mxu0
    %3839 = vmatpush.msra.mxu0 0.0
    %3840 = vmatpush.msra.mxu0 0.0
    %3841 = vmatpush.msra.mxu0 0.0
    %3842 = vmatpush.msra.mxu0 0.0
    %3843 = vmatpush.msra.mxu0 0.0
    %3844 = vmatpush.msra.mxu0 0.0
    %3845 = vmatpush.msra.mxu0 0.0
    %3846 = vmatpush.msra.mxu0 0.0
    %3847 = vmatpush.msra.mxu0 0.0
    %3848 = vmatpush.msra.mxu0 0.0
    %3849 = vmatpush.msra.mxu0 0.0
    %3850 = vmatpush.msra.mxu0 0.0
    %v3851 = vand.u32 %v326, 4294901760
    %v3852 = vsub.f32 %v326, %v3851
    %v3853 = vand.u32 %v3852, 4294901760
    %3854 = vmatpush.msra.mxu0 %v3853
    %v3855 = vand.u32 %v325, 4294901760
    %v3856 = vsub.f32 %v325, %v3855
    %v3857 = vand.u32 %v3856, 4294901760
    %3858 = vmatpush.msra.mxu0 %v3857
    %v3859 = vand.u32 %v324, 4294901760
    %v3860 = vsub.f32 %v324, %v3859
    %v3861 = vand.u32 %v3860, 4294901760
    %3862 = vmatpush.msra.mxu0 %v3861
    %v3863 = vand.u32 %v323, 4294901760
    %v3864 = vsub.f32 %v323, %v3863
    %v3865 = vand.u32 %v3864, 4294901760
    %3866 = vmatpush.msra.mxu0 %v3865
    %v3867 = vand.u32 %v3710, 4294901760
    %3868 = vmatmul.f32.gmra.mxu0 %v3867
    %v3869 = vpop.f32.mrf.mxu0
    %v3870 = vadd.f32 %v3837, %v3869
    %3871 = vdwg.mxu0
    %3872 = vmatpush.msra.mxu0 0.0
    %3873 = vmatpush.msra.mxu0 0.0
    %3874 = vmatpush.msra.mxu0 0.0
    %3875 = vmatpush.msra.mxu0 0.0
    %3876 = vmatpush.msra.mxu0 0.0
    %3877 = vmatpush.msra.mxu0 0.0
    %3878 = vmatpush.msra.mxu0 0.0
    %3879 = vmatpush.msra.mxu0 0.0
    %3880 = vmatpush.msra.mxu0 0.0
    %3881 = vmatpush.msra.mxu0 0.0
    %3882 = vmatpush.msra.mxu0 0.0
    %3883 = vmatpush.msra.mxu0 0.0
    %v3884 = vand.u32 %v326, 4294901760
    %3885 = vmatpush.msra.mxu0 %v3884
    %v3886 = vand.u32 %v325, 4294901760
    %3887 = vmatpush.msra.mxu0 %v3886
    %v3888 = vand.u32 %v324, 4294901760
    %3889 = vmatpush.msra.mxu0 %v3888
    %v3890 = vand.u32 %v323, 4294901760
    %3891 = vmatpush.msra.mxu0 %v3890
    %v3892 = vand.u32 %v3710, 4294901760
    %3893 = vmatmul.f32.gmra.mxu0 %v3892
    %v3894 = vpop.f32.mrf.mxu0
    %v3895 = vadd.f32 %v3870, %v3894
    %3896 = vdwg.mxu0
    %v3898 = vrot.slane %v3895, 4
    %v3900 = vadd.f32 %v321, %v3898
    %v3901 = vsub.f32 0.0, %v3900
    %v3902 = vmul.f32 %v3901, 1.442695
    %v3903 = vpow.pop %v3902
    %v3904 = vadd.f32 %v3903, 1.0
    %v3905 = vrcp.pop %v3904
    %v3906 = vmul.f32 %v3904, %v3905
    %v3907 = vsub.f32 1.0, %v3906
    %v3908 = vmul.f32 %v3905, %v3907
    %v3909 = vadd.f32 %v3905, %v3908
    %vm3910 = vweird.f32 %v3904
    %vm3911 = vweird.f32 %v3905
    %vm3912 = vmor %vm3910, %vm3911
    %v3913 = vsel %vm3912, %v3905, %v3909
    %v3914 = vand.u32 2147483647, %v3904
    %vm3915 = vcmp.eq.f32.partialorder %v3914, 8.507059e+37
    %v3916 = vand.u32 %v3904, 2147483648
    %v3917 = vor.u32 1.1754944e-38, %v3916
    %v3918 = vsel %vm3915, %v3917, %v3913
    %v3919 = vmul.f32 1.0, %v3918
    %v3920 = vtanh.pop %v3900
    %v3922 = vrot.slane %v3370, 6
    %v3924 = vmul.f32 %v3919, %v3922
    %3926 = vrot.lane.b32.xlu0 %v3920, 64
    %v3927 = vpop.permute.xlu0 %3926
    %v3929 = vmul.f32 %v3919, %v3927
    %3931 = vrot.lane.b32.xlu0 %v3929, 32
    %v3932 = vpop.permute.xlu0 %3931
    %v3934 = vadd.f32 %v3924, %v3932
    %v3935 = vtanh.pop %v3934
    %3937 = vrot.lane.b32.xlu0 %v3935, 64
    %v3938 = vpop.permute.xlu0 %3937
    %v3940 = vmul.f32 %v3919, %v3938
    %3942 = vrot.lane.b32.xlu0 %v3940, 32
    %v3943 = vpop.permute.xlu0 %3942
    %v3946 = vrot.slane %v3664, 4
    %3947 = vrot.lane.b32.xlu0 %v3946, 64
    %v3948 = vpop.permute.xlu0 %3947
    %v3950 = vsel %vm100, %v3943, %v3948
    %v3952 = vrot.slane %v3950, 4
    %v3953 = vsel %vm571, %v3952, 0
    %3955 = vmatpush.msra.mxu0 0.0
    %3956 = vmatpush.msra.mxu0 0.0
    %3957 = vmatpush.msra.mxu0 0.0
    %3958 = vmatpush.msra.mxu0 0.0
    %3959 = vmatpush.msra.mxu0 0.0
    %3960 = vmatpush.msra.mxu0 0.0
    %3961 = vmatpush.msra.mxu0 0.0
    %3962 = vmatpush.msra.mxu0 0.0
    %v3963 = vand.u32 %v334, 4294901760
    %3964 = vmatpush.msra.mxu0 %v3963
    %v3965 = vand.u32 %v333, 4294901760
    %3966 = vmatpush.msra.mxu0 %v3965
    %v3967 = vand.u32 %v332, 4294901760
    %3968 = vmatpush.msra.mxu0 %v3967
    %v3969 = vand.u32 %v331, 4294901760
    %3970 = vmatpush.msra.mxu0 %v3969
    %v3971 = vand.u32 %v330, 4294901760
    %3972 = vmatpush.msra.mxu0 %v3971
    %v3973 = vand.u32 %v329, 4294901760
    %3974 = vmatpush.msra.mxu0 %v3973
    %v3975 = vand.u32 %v328, 4294901760
    %3976 = vmatpush.msra.mxu0 %v3975
    %v3977 = vand.u32 %v327, 4294901760
    %3978 = vmatpush.msra.mxu0 %v3977
    %v3979 = vand.u32 %v3953, 4294901760
    %v3980 = vsub.f32 %v3953, %v3979
    %v3981 = vand.u32 %v3980, 4294901760
    %v3982 = vsub.f32 %v3980, %v3981
    %v3983 = vand.u32 %v3982, 4294901760
    %3984 = vmatmul.f32.gmra.mxu0 %v3983
    %v3985 = vpop.f32.mrf.mxu0
    %v3986 = vadd.f32 %v569, %v3985
    %3987 = vdwg.mxu0
    %3988 = vmatpush.msra.mxu0 0.0
    %3989 = vmatpush.msra.mxu0 0.0
    %3990 = vmatpush.msra.mxu0 0.0
    %3991 = vmatpush.msra.mxu0 0.0
    %3992 = vmatpush.msra.mxu0 0.0
    %3993 = vmatpush.msra.mxu0 0.0
    %3994 = vmatpush.msra.mxu0 0.0
    %3995 = vmatpush.msra.mxu0 0.0
    %v3996 = vand.u32 %v334, 4294901760
    %v3997 = vsub.f32 %v334, %v3996
    %v3998 = vand.u32 %v3997, 4294901760
    %v3999 = vsub.f32 %v3997, %v3998
    %v4000 = vand.u32 %v3999, 4294901760
    %4001 = vmatpush.msra.mxu0 %v4000
    %v4002 = vand.u32 %v333, 4294901760
    %v4003 = vsub.f32 %v333, %v4002
    %v4004 = vand.u32 %v4003, 4294901760
    %v4005 = vsub.f32 %v4003, %v4004
    %v4006 = vand.u32 %v4005, 4294901760
    %4007 = vmatpush.msra.mxu0 %v4006
    %v4008 = vand.u32 %v332, 4294901760
    %v4009 = vsub.f32 %v332, %v4008
    %v4010 = vand.u32 %v4009, 4294901760
    %v4011 = vsub.f32 %v4009, %v4010
    %v4012 = vand.u32 %v4011, 4294901760
    %4013 = vmatpush.msra.mxu0 %v4012
    %v4014 = vand.u32 %v331, 4294901760
    %v4015 = vsub.f32 %v331, %v4014
    %v4016 = vand.u32 %v4015, 4294901760
    %v4017 = vsub.f32 %v4015, %v4016
    %v4018 = vand.u32 %v4017, 4294901760
    %4019 = vmatpush.msra.mxu0 %v4018
    %v4020 = vand.u32 %v330, 4294901760
    %v4021 = vsub.f32 %v330, %v4020
    %v4022 = vand.u32 %v4021, 4294901760
    %v4023 = vsub.f32 %v4021, %v4022
    %v4024 = vand.u32 %v4023, 4294901760
    %4025 = vmatpush.msra.mxu0 %v4024
    %v4026 = vand.u32 %v329, 4294901760
    %v4027 = vsub.f32 %v329, %v4026
    %v4028 = vand.u32 %v4027, 4294901760
    %v4029 = vsub.f32 %v4027, %v4028
    %v4030 = vand.u32 %v4029, 4294901760
    %4031 = vmatpush.msra.mxu0 %v4030
    %v4032 = vand.u32 %v328, 4294901760
    %v4033 = vsub.f32 %v328, %v4032
    %v4034 = vand.u32 %v4033, 4294901760
    %v4035 = vsub.f32 %v4033, %v4034
    %v4036 = vand.u32 %v4035, 4294901760
    %4037 = vmatpush.msra.mxu0 %v4036
    %v4038 = vand.u32 %v327, 4294901760
    %v4039 = vsub.f32 %v327, %v4038
    %v4040 = vand.u32 %v4039, 4294901760
    %v4041 = vsub.f32 %v4039, %v4040
    %v4042 = vand.u32 %v4041, 4294901760
    %4043 = vmatpush.msra.mxu0 %v4042
    %v4044 = vand.u32 %v3953, 4294901760
    %4045 = vmatmul.f32.gmra.mxu0 %v4044
    %v4046 = vpop.f32.mrf.mxu0
    %v4047 = vadd.f32 %v3986, %v4046
    %4048 = vdwg.mxu0
    %4049 = vmatpush.msra.mxu0 0.0
    %4050 = vmatpush.msra.mxu0 0.0
    %4051 = vmatpush.msra.mxu0 0.0
    %4052 = vmatpush.msra.mxu0 0.0
    %4053 = vmatpush.msra.mxu0 0.0
    %4054 = vmatpush.msra.mxu0 0.0
    %4055 = vmatpush.msra.mxu0 0.0
    %4056 = vmatpush.msra.mxu0 0.0
    %v4057 = vand.u32 %v334, 4294901760
    %v4058 = vsub.f32 %v334, %v4057
    %4059 = vmatpush.msra.mxu0 %v4058
    %v4060 = vand.u32 %v333, 4294901760
    %v4061 = vsub.f32 %v333, %v4060
    %4062 = vmatpush.msra.mxu0 %v4061
    %v4063 = vand.u32 %v332, 4294901760
    %v4064 = vsub.f32 %v332, %v4063
    %4065 = vmatpush.msra.mxu0 %v4064
    %v4066 = vand.u32 %v331, 4294901760
    %v4067 = vsub.f32 %v331, %v4066
    %4068 = vmatpush.msra.mxu0 %v4067
    %v4069 = vand.u32 %v330, 4294901760
    %v4070 = vsub.f32 %v330, %v4069
    %4071 = vmatpush.msra.mxu0 %v4070
    %v4072 = vand.u32 %v329, 4294901760
    %v4073 = vsub.f32 %v329, %v4072
    %4074 = vmatpush.msra.mxu0 %v4073
    %v4075 = vand.u32 %v328, 4294901760
    %v4076 = vsub.f32 %v328, %v4075
    %4077 = vmatpush.msra.mxu0 %v4076
    %v4078 = vand.u32 %v327, 4294901760
    %v4079 = vsub.f32 %v327, %v4078
    %4080 = vmatpush.msra.mxu0 %v4079
    %v4081 = vand.u32 %v3953, 4294901760
    %v4082 = vsub.f32 %v3953, %v4081
    %4083 = vmatmul.f32.gmra.mxu0 %v4082
    %v4084 = vpop.f32.mrf.mxu0
    %v4085 = vadd.f32 %v4047, %v4084
    %4086 = vdwg.mxu0
    %4087 = vmatpush.msra.mxu0 0.0
    %4088 = vmatpush.msra.mxu0 0.0
    %4089 = vmatpush.msra.mxu0 0.0
    %4090 = vmatpush.msra.mxu0 0.0
    %4091 = vmatpush.msra.mxu0 0.0
    %4092 = vmatpush.msra.mxu0 0.0
    %4093 = vmatpush.msra.mxu0 0.0
    %4094 = vmatpush.msra.mxu0 0.0
    %v4095 = vand.u32 %v334, 4294901760
    %4096 = vmatpush.msra.mxu0 %v4095
    %v4097 = vand.u32 %v333, 4294901760
    %4098 = vmatpush.msra.mxu0 %v4097
    %v4099 = vand.u32 %v332, 4294901760
    %4100 = vmatpush.msra.mxu0 %v4099
    %v4101 = vand.u32 %v331, 4294901760
    %4102 = vmatpush.msra.mxu0 %v4101
    %v4103 = vand.u32 %v330, 4294901760
    %4104 = vmatpush.msra.mxu0 %v4103
    %v4105 = vand.u32 %v329, 4294901760
    %4106 = vmatpush.msra.mxu0 %v4105
    %v4107 = vand.u32 %v328, 4294901760
    %4108 = vmatpush.msra.mxu0 %v4107
    %v4109 = vand.u32 %v327, 4294901760
    %4110 = vmatpush.msra.mxu0 %v4109
    %v4111 = vand.u32 %v3953, 4294901760
    %v4112 = vsub.f32 %v3953, %v4111
    %v4113 = vand.u32 %v4112, 4294901760
    %4114 = vmatmul.f32.gmra.mxu0 %v4113
    %v4115 = vpop.f32.mrf.mxu0
    %v4116 = vadd.f32 %v4085, %v4115
    %4117 = vdwg.mxu0
    %4118 = vmatpush.msra.mxu0 0.0
    %4119 = vmatpush.msra.mxu0 0.0
    %4120 = vmatpush.msra.mxu0 0.0
    %4121 = vmatpush.msra.mxu0 0.0
    %4122 = vmatpush.msra.mxu0 0.0
    %4123 = vmatpush.msra.mxu0 0.0
    %4124 = vmatpush.msra.mxu0 0.0
    %4125 = vmatpush.msra.mxu0 0.0
    %v4126 = vand.u32 %v334, 4294901760
    %v4127 = vsub.f32 %v334, %v4126
    %v4128 = vand.u32 %v4127, 4294901760
    %4129 = vmatpush.msra.mxu0 %v4128
    %v4130 = vand.u32 %v333, 4294901760
    %v4131 = vsub.f32 %v333, %v4130
    %v4132 = vand.u32 %v4131, 4294901760
    %4133 = vmatpush.msra.mxu0 %v4132
    %v4134 = vand.u32 %v332, 4294901760
    %v4135 = vsub.f32 %v332, %v4134
    %v4136 = vand.u32 %v4135, 4294901760
    %4137 = vmatpush.msra.mxu0 %v4136
    %v4138 = vand.u32 %v331, 4294901760
    %v4139 = vsub.f32 %v331, %v4138
    %v4140 = vand.u32 %v4139, 4294901760
    %4141 = vmatpush.msra.mxu0 %v4140
    %v4142 = vand.u32 %v330, 4294901760
    %v4143 = vsub.f32 %v330, %v4142
    %v4144 = vand.u32 %v4143, 4294901760
    %4145 = vmatpush.msra.mxu0 %v4144
    %v4146 = vand.u32 %v329, 4294901760
    %v4147 = vsub.f32 %v329, %v4146
    %v4148 = vand.u32 %v4147, 4294901760
    %4149 = vmatpush.msra.mxu0 %v4148
    %v4150 = vand.u32 %v328, 4294901760
    %v4151 = vsub.f32 %v328, %v4150
    %v4152 = vand.u32 %v4151, 4294901760
    %4153 = vmatpush.msra.mxu0 %v4152
    %v4154 = vand.u32 %v327, 4294901760
    %v4155 = vsub.f32 %v327, %v4154
    %v4156 = vand.u32 %v4155, 4294901760
    %4157 = vmatpush.msra.mxu0 %v4156
    %v4158 = vand.u32 %v3953, 4294901760
    %4159 = vmatmul.f32.gmra.mxu0 %v4158
    %v4160 = vpop.f32.mrf.mxu0
    %v4161 = vadd.f32 %v4116, %v4160
    %4162 = vdwg.mxu0
    %4163 = vmatpush.msra.mxu0 0.0
    %4164 = vmatpush.msra.mxu0 0.0
    %4165 = vmatpush.msra.mxu0 0.0
    %4166 = vmatpush.msra.mxu0 0.0
    %4167 = vmatpush.msra.mxu0 0.0
    %4168 = vmatpush.msra.mxu0 0.0
    %4169 = vmatpush.msra.mxu0 0.0
    %4170 = vmatpush.msra.mxu0 0.0
    %v4171 = vand.u32 %v334, 4294901760
    %4172 = vmatpush.msra.mxu0 %v4171
    %v4173 = vand.u32 %v333, 4294901760
    %4174 = vmatpush.msra.mxu0 %v4173
    %v4175 = vand.u32 %v332, 4294901760
    %4176 = vmatpush.msra.mxu0 %v4175
    %v4177 = vand.u32 %v331, 4294901760
    %4178 = vmatpush.msra.mxu0 %v4177
    %v4179 = vand.u32 %v330, 4294901760
    %4180 = vmatpush.msra.mxu0 %v4179
    %v4181 = vand.u32 %v329, 4294901760
    %4182 = vmatpush.msra.mxu0 %v4181
    %v4183 = vand.u32 %v328, 4294901760
    %4184 = vmatpush.msra.mxu0 %v4183
    %v4185 = vand.u32 %v327, 4294901760
    %4186 = vmatpush.msra.mxu0 %v4185
    %v4187 = vand.u32 %v3953, 4294901760
    %4188 = vmatmul.f32.gmra.mxu0 %v4187
    %v4189 = vpop.f32.mrf.mxu0
    %v4190 = vadd.f32 %v4161, %v4189
    %4191 = vdwg.mxu0
    %v4192 = vsub.f32 0.0, %v4190
    %v4193 = vmul.f32 %v4192, 1.442695
    %v4194 = vpow.pop %v4193
    %v4195 = vadd.f32 %v4194, 1.0
    %v4196 = vrcp.pop %v4195
    %v4197 = vmul.f32 %v4195, %v4196
    %v4198 = vsub.f32 1.0, %v4197
    %v4199 = vmul.f32 %v4196, %v4198
    %v4200 = vadd.f32 %v4196, %v4199
    %vm4201 = vweird.f32 %v4195
    %vm4202 = vweird.f32 %v4196
    %vm4203 = vmor %vm4201, %vm4202
    %v4204 = vsel %vm4203, %v4196, %v4200
    %v4205 = vand.u32 2147483647, %v4195
    %vm4206 = vcmp.eq.f32.partialorder %v4205, 8.507059e+37
    %v4207 = vand.u32 %v4195, 2147483648
    %v4208 = vor.u32 1.1754944e-38, %v4207
    %v4209 = vsel %vm4206, %v4208, %v4204
    %v4210 = vmul.f32 1.0, %v4209
    %v4211 = vtanh.pop %v4190
    %v4212 = vmul.f32 %v4210, %v3658
    %4214 = vrot.lane.b32.xlu0 %v4211, 64
    %v4215 = vpop.permute.xlu0 %4214
    %v4217 = vmul.f32 %v4210, %v4215
    %4219 = vrot.lane.b32.xlu0 %v4217, 32
    %v4220 = vpop.permute.xlu0 %4219
    %v4222 = vadd.f32 %v4212, %v4220
    %v4223 = vtanh.pop %v4222
    %4225 = vrot.lane.b32.xlu0 %v4223, 64
    %v4226 = vpop.permute.xlu0 %4225
    %v4228 = vmul.f32 %v4210, %v4226
    %v4229 = vmul.f32 %v4228, %v852
    %4231 = vrot.lane.b32.xlu0 %v4229, 32
    %v4232 = vpop.permute.xlu0 %4231
    %v4234 = vsel %vm859, %v4232, 0.0
    %4235 = vadd.xlane.f32.xlu0 %v4234
    %v4236 = vpop.xlane.xlu0 %4235
    %v4237 = vsel %vm863, %v4236, -inf
    %v4238 = vrot.slane %v4237, 4
    %v4239 = vmax.f32 %v4237, %v4238
    %v4240 = vrot.slane %v4239, 2
    %v4241 = vmax.f32 %v4239, %v4240
    %v4242 = vrot.slane %v4241, 1
    %v4243 = vmax.f32 %v4241, %v4242
    %v4244 = vsub.f32 %v4236, %v4243
    %v4245 = vmul.f32 %v4244, 1.442695
    %v4246 = vpow.pop %v4245
    %v4247 = vsel %vm863, %v4246, 0.0
    %v4248 = vrot.slane %v4247, 4
    %v4249 = vadd.f32 %v4247, %v4248
    %v4250 = vrot.slane %v4249, 2
    %v4251 = vadd.f32 %v4249, %v4250
    %v4252 = vrot.slane %v4251, 1
    %v4253 = vadd.f32 %v4251, %v4252
    %v4254 = vrcp.pop %v4253
    %v4255 = vmul.f32 %v4253, %v4254
    %v4256 = vsub.f32 1.0, %v4255
    %v4257 = vmul.f32 %v4254, %v4256
    %v4258 = vadd.f32 %v4254, %v4257
    %vm4259 = vweird.f32 %v4253
    %vm4260 = vweird.f32 %v4254
    %vm4261 = vmor %vm4259, %vm4260
    %v4262 = vsel %vm4261, %v4254, %v4258
    %v4263 = vand.u32 2147483647, %v4253
    %vm4264 = vcmp.eq.f32.partialorder %v4263, 8.507059e+37
    %v4265 = vand.u32 %v4253, 2147483648
    %v4266 = vor.u32 1.1754944e-38, %v4265
    %v4267 = vsel %vm4264, %v4266, %v4262
    %v4268 = vmul.f32 %v4246, %v4267
    %v4269 = vmul.f32 %v4228, %v4268
    %v4270 = vadd.f32 %v3706, %v4269
    %v4271 = vrot.slane %v3940, 4
    %4272 = vrot.lane.b32.xlu0 %v4271, 32
    %v4273 = vpop.permute.xlu0 %4272
    %v4274 = vsel %vm100, %v4273, 0
    %4276 = vmatpush.msra.mxu0 0.0
    %4277 = vmatpush.msra.mxu0 0.0
    %4278 = vmatpush.msra.mxu0 0.0
    %4279 = vmatpush.msra.mxu0 0.0
    %4280 = vmatpush.msra.mxu0 0.0
    %4281 = vmatpush.msra.mxu0 0.0
    %4282 = vmatpush.msra.mxu0 0.0
    %4283 = vmatpush.msra.mxu0 0.0
    %4284 = vmatpush.msra.mxu0 0.0
    %4285 = vmatpush.msra.mxu0 0.0
    %4286 = vmatpush.msra.mxu0 0.0
    %4287 = vmatpush.msra.mxu0 0.0
    %v4288 = vand.u32 %v326, 4294901760
    %4289 = vmatpush.msra.mxu0 %v4288
    %v4290 = vand.u32 %v325, 4294901760
    %4291 = vmatpush.msra.mxu0 %v4290
    %v4292 = vand.u32 %v324, 4294901760
    %4293 = vmatpush.msra.mxu0 %v4292
    %v4294 = vand.u32 %v323, 4294901760
    %4295 = vmatpush.msra.mxu0 %v4294
    %v4296 = vand.u32 %v4274, 4294901760
    %v4297 = vsub.f32 %v4274, %v4296
    %v4298 = vand.u32 %v4297, 4294901760
    %v4299 = vsub.f32 %v4297, %v4298
    %v4300 = vand.u32 %v4299, 4294901760
    %4301 = vmatmul.f32.gmra.mxu0 %v4300
    %v4302 = vpop.f32.mrf.mxu0
    %v4303 = vadd.f32 0.0, %v4302
    %4304 = vdwg.mxu0
    %4305 = vmatpush.msra.mxu0 0.0
    %4306 = vmatpush.msra.mxu0 0.0
    %4307 = vmatpush.msra.mxu0 0.0
    %4308 = vmatpush.msra.mxu0 0.0
    %4309 = vmatpush.msra.mxu0 0.0
    %4310 = vmatpush.msra.mxu0 0.0
    %4311 = vmatpush.msra.mxu0 0.0
    %4312 = vmatpush.msra.mxu0 0.0
    %4313 = vmatpush.msra.mxu0 0.0
    %4314 = vmatpush.msra.mxu0 0.0
    %4315 = vmatpush.msra.mxu0 0.0
    %4316 = vmatpush.msra.mxu0 0.0
    %v4317 = vand.u32 %v326, 4294901760
    %v4318 = vsub.f32 %v326, %v4317
    %v4319 = vand.u32 %v4318, 4294901760
    %v4320 = vsub.f32 %v4318, %v4319
    %v4321 = vand.u32 %v4320, 4294901760
    %4322 = vmatpush.msra.mxu0 %v4321
    %v4323 = vand.u32 %v325, 4294901760
    %v4324 = vsub.f32 %v325, %v4323
    %v4325 = vand.u32 %v4324, 4294901760
    %v4326 = vsub.f32 %v4324, %v4325
    %v4327 = vand.u32 %v4326, 4294901760
    %4328 = vmatpush.msra.mxu0 %v4327
    %v4329 = vand.u32 %v324, 4294901760
    %v4330 = vsub.f32 %v324, %v4329
    %v4331 = vand.u32 %v4330, 4294901760
    %v4332 = vsub.f32 %v4330, %v4331
    %v4333 = vand.u32 %v4332, 4294901760
    %4334 = vmatpush.msra.mxu0 %v4333
    %v4335 = vand.u32 %v323, 4294901760
    %v4336 = vsub.f32 %v323, %v4335
    %v4337 = vand.u32 %v4336, 4294901760
    %v4338 = vsub.f32 %v4336, %v4337
    %v4339 = vand.u32 %v4338, 4294901760
    %4340 = vmatpush.msra.mxu0 %v4339
    %v4341 = vand.u32 %v4274, 4294901760
    %4342 = vmatmul.f32.gmra.mxu0 %v4341
    %v4343 = vpop.f32.mrf.mxu0
    %v4344 = vadd.f32 %v4303, %v4343
    %4345 = vdwg.mxu0
    %4346 = vmatpush.msra.mxu0 0.0
    %4347 = vmatpush.msra.mxu0 0.0
    %4348 = vmatpush.msra.mxu0 0.0
    %4349 = vmatpush.msra.mxu0 0.0
    %4350 = vmatpush.msra.mxu0 0.0
    %4351 = vmatpush.msra.mxu0 0.0
    %4352 = vmatpush.msra.mxu0 0.0
    %4353 = vmatpush.msra.mxu0 0.0
    %4354 = vmatpush.msra.mxu0 0.0
    %4355 = vmatpush.msra.mxu0 0.0
    %4356 = vmatpush.msra.mxu0 0.0
    %4357 = vmatpush.msra.mxu0 0.0
    %v4358 = vand.u32 %v326, 4294901760
    %v4359 = vsub.f32 %v326, %v4358
    %4360 = vmatpush.msra.mxu0 %v4359
    %v4361 = vand.u32 %v325, 4294901760
    %v4362 = vsub.f32 %v325, %v4361
    %4363 = vmatpush.msra.mxu0 %v4362
    %v4364 = vand.u32 %v324, 4294901760
    %v4365 = vsub.f32 %v324, %v4364
    %4366 = vmatpush.msra.mxu0 %v4365
    %v4367 = vand.u32 %v323, 4294901760
    %v4368 = vsub.f32 %v323, %v4367
    %4369 = vmatpush.msra.mxu0 %v4368
    %v4370 = vand.u32 %v4274, 4294901760
    %v4371 = vsub.f32 %v4274, %v4370
    %4372 = vmatmul.f32.gmra.mxu0 %v4371
    %v4373 = vpop.f32.mrf.mxu0
    %v4374 = vadd.f32 %v4344, %v4373
    %4375 = vdwg.mxu0
    %4376 = vmatpush.msra.mxu0 0.0
    %4377 = vmatpush.msra.mxu0 0.0
    %4378 = vmatpush.msra.mxu0 0.0
    %4379 = vmatpush.msra.mxu0 0.0
    %4380 = vmatpush.msra.mxu0 0.0
    %4381 = vmatpush.msra.mxu0 0.0
    %4382 = vmatpush.msra.mxu0 0.0
    %4383 = vmatpush.msra.mxu0 0.0
    %4384 = vmatpush.msra.mxu0 0.0
    %4385 = vmatpush.msra.mxu0 0.0
    %4386 = vmatpush.msra.mxu0 0.0
    %4387 = vmatpush.msra.mxu0 0.0
    %v4388 = vand.u32 %v326, 4294901760
    %4389 = vmatpush.msra.mxu0 %v4388
    %v4390 = vand.u32 %v325, 4294901760
    %4391 = vmatpush.msra.mxu0 %v4390
    %v4392 = vand.u32 %v324, 4294901760
    %4393 = vmatpush.msra.mxu0 %v4392
    %v4394 = vand.u32 %v323, 4294901760
    %4395 = vmatpush.msra.mxu0 %v4394
    %v4396 = vand.u32 %v4274, 4294901760
    %v4397 = vsub.f32 %v4274, %v4396
    %v4398 = vand.u32 %v4397, 4294901760
    %4399 = vmatmul.f32.gmra.mxu0 %v4398
    %v4400 = vpop.f32.mrf.mxu0
    %v4401 = vadd.f32 %v4374, %v4400
    %4402 = vdwg.mxu0
    %4403 = vmatpush.msra.mxu0 0.0
    %4404 = vmatpush.msra.mxu0 0.0
    %4405 = vmatpush.msra.mxu0 0.0
    %4406 = vmatpush.msra.mxu0 0.0
    %4407 = vmatpush.msra.mxu0 0.0
    %4408 = vmatpush.msra.mxu0 0.0
    %4409 = vmatpush.msra.mxu0 0.0
    %4410 = vmatpush.msra.mxu0 0.0
    %4411 = vmatpush.msra.mxu0 0.0
    %4412 = vmatpush.msra.mxu0 0.0
    %4413 = vmatpush.msra.mxu0 0.0
    %4414 = vmatpush.msra.mxu0 0.0
    %v4415 = vand.u32 %v326, 4294901760
    %v4416 = vsub.f32 %v326, %v4415
    %v4417 = vand.u32 %v4416, 4294901760
    %4418 = vmatpush.msra.mxu0 %v4417
    %v4419 = vand.u32 %v325, 4294901760
    %v4420 = vsub.f32 %v325, %v4419
    %v4421 = vand.u32 %v4420, 4294901760
    %4422 = vmatpush.msra.mxu0 %v4421
    %v4423 = vand.u32 %v324, 4294901760
    %v4424 = vsub.f32 %v324, %v4423
    %v4425 = vand.u32 %v4424, 4294901760
    %4426 = vmatpush.msra.mxu0 %v4425
    %v4427 = vand.u32 %v323, 4294901760
    %v4428 = vsub.f32 %v323, %v4427
    %v4429 = vand.u32 %v4428, 4294901760
    %4430 = vmatpush.msra.mxu0 %v4429
    %v4431 = vand.u32 %v4274, 4294901760
    %4432 = vmatmul.f32.gmra.mxu0 %v4431
    %v4433 = vpop.f32.mrf.mxu0
    %v4434 = vadd.f32 %v4401, %v4433
    %4435 = vdwg.mxu0
    %4436 = vmatpush.msra.mxu0 0.0
    %4437 = vmatpush.msra.mxu0 0.0
    %4438 = vmatpush.msra.mxu0 0.0
    %4439 = vmatpush.msra.mxu0 0.0
    %4440 = vmatpush.msra.mxu0 0.0
    %4441 = vmatpush.msra.mxu0 0.0
    %4442 = vmatpush.msra.mxu0 0.0
    %4443 = vmatpush.msra.mxu0 0.0
    %4444 = vmatpush.msra.mxu0 0.0
    %4445 = vmatpush.msra.mxu0 0.0
    %4446 = vmatpush.msra.mxu0 0.0
    %4447 = vmatpush.msra.mxu0 0.0
    %v4448 = vand.u32 %v326, 4294901760
    %4449 = vmatpush.msra.mxu0 %v4448
    %v4450 = vand.u32 %v325, 4294901760
    %4451 = vmatpush.msra.mxu0 %v4450
    %v4452 = vand.u32 %v324, 4294901760
    %4453 = vmatpush.msra.mxu0 %v4452
    %v4454 = vand.u32 %v323, 4294901760
    %4455 = vmatpush.msra.mxu0 %v4454
    %v4456 = vand.u32 %v4274, 4294901760
    %4457 = vmatmul.f32.gmra.mxu0 %v4456
    %v4458 = vpop.f32.mrf.mxu0
    %v4459 = vadd.f32 %v4434, %v4458
    %4460 = vdwg.mxu0
    %v4462 = vrot.slane %v4459, 2
    %v4464 = vadd.f32 %v321, %v4462
    %v4465 = vsub.f32 0.0, %v4464
    %v4466 = vmul.f32 %v4465, 1.442695
    %v4467 = vpow.pop %v4466
    %v4468 = vadd.f32 %v4467, 1.0
    %v4469 = vrcp.pop %v4468
    %v4470 = vmul.f32 %v4468, %v4469
    %v4471 = vsub.f32 1.0, %v4470
    %v4472 = vmul.f32 %v4469, %v4471
    %v4473 = vadd.f32 %v4469, %v4472
    %vm4474 = vweird.f32 %v4468
    %vm4475 = vweird.f32 %v4469
    %vm4476 = vmor %vm4474, %vm4475
    %v4477 = vsel %vm4476, %v4469, %v4473
    %v4478 = vand.u32 2147483647, %v4468
    %vm4479 = vcmp.eq.f32.partialorder %v4478, 8.507059e+37
    %v4480 = vand.u32 %v4468, 2147483648
    %v4481 = vor.u32 1.1754944e-38, %v4480
    %v4482 = vsel %vm4479, %v4481, %v4477
    %v4483 = vmul.f32 1.0, %v4482
    %v4484 = vtanh.pop %v4464
    %v4486 = vrot.slane %v3934, 6
    %v4488 = vmul.f32 %v4483, %v4486
    %4490 = vrot.lane.b32.xlu0 %v4484, 64
    %v4491 = vpop.permute.xlu0 %4490
    %v4493 = vmul.f32 %v4483, %v4491
    %4495 = vrot.lane.b32.xlu0 %v4493, 32
    %v4496 = vpop.permute.xlu0 %4495
    %v4498 = vadd.f32 %v4488, %v4496
    %v4499 = vtanh.pop %v4498
    %4501 = vrot.lane.b32.xlu0 %v4499, 64
    %v4502 = vpop.permute.xlu0 %4501
    %v4504 = vmul.f32 %v4483, %v4502
    %4506 = vrot.lane.b32.xlu0 %v4504, 32
    %v4507 = vpop.permute.xlu0 %4506
    %v4510 = vrot.slane %v4228, 2
    %4511 = vrot.lane.b32.xlu0 %v4510, 64
    %v4512 = vpop.permute.xlu0 %4511
    %v4514 = vsel %vm100, %v4507, %v4512
    %v4516 = vrot.slane %v4514, 6
    %v4517 = vsel %vm571, %v4516, 0
    %4519 = vmatpush.msra.mxu0 0.0
    %4520 = vmatpush.msra.mxu0 0.0
    %4521 = vmatpush.msra.mxu0 0.0
    %4522 = vmatpush.msra.mxu0 0.0
    %4523 = vmatpush.msra.mxu0 0.0
    %4524 = vmatpush.msra.mxu0 0.0
    %4525 = vmatpush.msra.mxu0 0.0
    %4526 = vmatpush.msra.mxu0 0.0
    %v4527 = vand.u32 %v334, 4294901760
    %4528 = vmatpush.msra.mxu0 %v4527
    %v4529 = vand.u32 %v333, 4294901760
    %4530 = vmatpush.msra.mxu0 %v4529
    %v4531 = vand.u32 %v332, 4294901760
    %4532 = vmatpush.msra.mxu0 %v4531
    %v4533 = vand.u32 %v331, 4294901760
    %4534 = vmatpush.msra.mxu0 %v4533
    %v4535 = vand.u32 %v330, 4294901760
    %4536 = vmatpush.msra.mxu0 %v4535
    %v4537 = vand.u32 %v329, 4294901760
    %4538 = vmatpush.msra.mxu0 %v4537
    %v4539 = vand.u32 %v328, 4294901760
    %4540 = vmatpush.msra.mxu0 %v4539
    %v4541 = vand.u32 %v327, 4294901760
    %4542 = vmatpush.msra.mxu0 %v4541
    %v4543 = vand.u32 %v4517, 4294901760
    %v4544 = vsub.f32 %v4517, %v4543
    %v4545 = vand.u32 %v4544, 4294901760
    %v4546 = vsub.f32 %v4544, %v4545
    %v4547 = vand.u32 %v4546, 4294901760
    %4548 = vmatmul.f32.gmra.mxu0 %v4547
    %v4549 = vpop.f32.mrf.mxu0
    %v4550 = vadd.f32 %v569, %v4549
    %4551 = vdwg.mxu0
    %4552 = vmatpush.msra.mxu0 0.0
    %4553 = vmatpush.msra.mxu0 0.0
    %4554 = vmatpush.msra.mxu0 0.0
    %4555 = vmatpush.msra.mxu0 0.0
    %4556 = vmatpush.msra.mxu0 0.0
    %4557 = vmatpush.msra.mxu0 0.0
    %4558 = vmatpush.msra.mxu0 0.0
    %4559 = vmatpush.msra.mxu0 0.0
    %v4560 = vand.u32 %v334, 4294901760
    %v4561 = vsub.f32 %v334, %v4560
    %v4562 = vand.u32 %v4561, 4294901760
    %v4563 = vsub.f32 %v4561, %v4562
    %v4564 = vand.u32 %v4563, 4294901760
    %4565 = vmatpush.msra.mxu0 %v4564
    %v4566 = vand.u32 %v333, 4294901760
    %v4567 = vsub.f32 %v333, %v4566
    %v4568 = vand.u32 %v4567, 4294901760
    %v4569 = vsub.f32 %v4567, %v4568
    %v4570 = vand.u32 %v4569, 4294901760
    %4571 = vmatpush.msra.mxu0 %v4570
    %v4572 = vand.u32 %v332, 4294901760
    %v4573 = vsub.f32 %v332, %v4572
    %v4574 = vand.u32 %v4573, 4294901760
    %v4575 = vsub.f32 %v4573, %v4574
    %v4576 = vand.u32 %v4575, 4294901760
    %4577 = vmatpush.msra.mxu0 %v4576
    %v4578 = vand.u32 %v331, 4294901760
    %v4579 = vsub.f32 %v331, %v4578
    %v4580 = vand.u32 %v4579, 4294901760
    %v4581 = vsub.f32 %v4579, %v4580
    %v4582 = vand.u32 %v4581, 4294901760
    %4583 = vmatpush.msra.mxu0 %v4582
    %v4584 = vand.u32 %v330, 4294901760
    %v4585 = vsub.f32 %v330, %v4584
    %v4586 = vand.u32 %v4585, 4294901760
    %v4587 = vsub.f32 %v4585, %v4586
    %v4588 = vand.u32 %v4587, 4294901760
    %4589 = vmatpush.msra.mxu0 %v4588
    %v4590 = vand.u32 %v329, 4294901760
    %v4591 = vsub.f32 %v329, %v4590
    %v4592 = vand.u32 %v4591, 4294901760
    %v4593 = vsub.f32 %v4591, %v4592
    %v4594 = vand.u32 %v4593, 4294901760
    %4595 = vmatpush.msra.mxu0 %v4594
    %v4596 = vand.u32 %v328, 4294901760
    %v4597 = vsub.f32 %v328, %v4596
    %v4598 = vand.u32 %v4597, 4294901760
    %v4599 = vsub.f32 %v4597, %v4598
    %v4600 = vand.u32 %v4599, 4294901760
    %4601 = vmatpush.msra.mxu0 %v4600
    %v4602 = vand.u32 %v327, 4294901760
    %v4603 = vsub.f32 %v327, %v4602
    %v4604 = vand.u32 %v4603, 4294901760
    %v4605 = vsub.f32 %v4603, %v4604
    %v4606 = vand.u32 %v4605, 4294901760
    %4607 = vmatpush.msra.mxu0 %v4606
    %v4608 = vand.u32 %v4517, 4294901760
    %4609 = vmatmul.f32.gmra.mxu0 %v4608
    %v4610 = vpop.f32.mrf.mxu0
    %v4611 = vadd.f32 %v4550, %v4610
    %4612 = vdwg.mxu0
    %4613 = vmatpush.msra.mxu0 0.0
    %4614 = vmatpush.msra.mxu0 0.0
    %4615 = vmatpush.msra.mxu0 0.0
    %4616 = vmatpush.msra.mxu0 0.0
    %4617 = vmatpush.msra.mxu0 0.0
    %4618 = vmatpush.msra.mxu0 0.0
    %4619 = vmatpush.msra.mxu0 0.0
    %4620 = vmatpush.msra.mxu0 0.0
    %v4621 = vand.u32 %v334, 4294901760
    %v4622 = vsub.f32 %v334, %v4621
    %4623 = vmatpush.msra.mxu0 %v4622
    %v4624 = vand.u32 %v333, 4294901760
    %v4625 = vsub.f32 %v333, %v4624
    %4626 = vmatpush.msra.mxu0 %v4625
    %v4627 = vand.u32 %v332, 4294901760
    %v4628 = vsub.f32 %v332, %v4627
    %4629 = vmatpush.msra.mxu0 %v4628
    %v4630 = vand.u32 %v331, 4294901760
    %v4631 = vsub.f32 %v331, %v4630
    %4632 = vmatpush.msra.mxu0 %v4631
    %v4633 = vand.u32 %v330, 4294901760
    %v4634 = vsub.f32 %v330, %v4633
    %4635 = vmatpush.msra.mxu0 %v4634
    %v4636 = vand.u32 %v329, 4294901760
    %v4637 = vsub.f32 %v329, %v4636
    %4638 = vmatpush.msra.mxu0 %v4637
    %v4639 = vand.u32 %v328, 4294901760
    %v4640 = vsub.f32 %v328, %v4639
    %4641 = vmatpush.msra.mxu0 %v4640
    %v4642 = vand.u32 %v327, 4294901760
    %v4643 = vsub.f32 %v327, %v4642
    %4644 = vmatpush.msra.mxu0 %v4643
    %v4645 = vand.u32 %v4517, 4294901760
    %v4646 = vsub.f32 %v4517, %v4645
    %4647 = vmatmul.f32.gmra.mxu0 %v4646
    %v4648 = vpop.f32.mrf.mxu0
    %v4649 = vadd.f32 %v4611, %v4648
    %4650 = vdwg.mxu0
    %4651 = vmatpush.msra.mxu0 0.0
    %4652 = vmatpush.msra.mxu0 0.0
    %4653 = vmatpush.msra.mxu0 0.0
    %4654 = vmatpush.msra.mxu0 0.0
    %4655 = vmatpush.msra.mxu0 0.0
    %4656 = vmatpush.msra.mxu0 0.0
    %4657 = vmatpush.msra.mxu0 0.0
    %4658 = vmatpush.msra.mxu0 0.0
    %v4659 = vand.u32 %v334, 4294901760
    %4660 = vmatpush.msra.mxu0 %v4659
    %v4661 = vand.u32 %v333, 4294901760
    %4662 = vmatpush.msra.mxu0 %v4661
    %v4663 = vand.u32 %v332, 4294901760
    %4664 = vmatpush.msra.mxu0 %v4663
    %v4665 = vand.u32 %v331, 4294901760
    %4666 = vmatpush.msra.mxu0 %v4665
    %v4667 = vand.u32 %v330, 4294901760
    %4668 = vmatpush.msra.mxu0 %v4667
    %v4669 = vand.u32 %v329, 4294901760
    %4670 = vmatpush.msra.mxu0 %v4669
    %v4671 = vand.u32 %v328, 4294901760
    %4672 = vmatpush.msra.mxu0 %v4671
    %v4673 = vand.u32 %v327, 4294901760
    %4674 = vmatpush.msra.mxu0 %v4673
    %v4675 = vand.u32 %v4517, 4294901760
    %v4676 = vsub.f32 %v4517, %v4675
    %v4677 = vand.u32 %v4676, 4294901760
    %4678 = vmatmul.f32.gmra.mxu0 %v4677
    %v4679 = vpop.f32.mrf.mxu0
    %v4680 = vadd.f32 %v4649, %v4679
    %4681 = vdwg.mxu0
    %4682 = vmatpush.msra.mxu0 0.0
    %4683 = vmatpush.msra.mxu0 0.0
    %4684 = vmatpush.msra.mxu0 0.0
    %4685 = vmatpush.msra.mxu0 0.0
    %4686 = vmatpush.msra.mxu0 0.0
    %4687 = vmatpush.msra.mxu0 0.0
    %4688 = vmatpush.msra.mxu0 0.0
    %4689 = vmatpush.msra.mxu0 0.0
    %v4690 = vand.u32 %v334, 4294901760
    %v4691 = vsub.f32 %v334, %v4690
    %v4692 = vand.u32 %v4691, 4294901760
    %4693 = vmatpush.msra.mxu0 %v4692
    %v4694 = vand.u32 %v333, 4294901760
    %v4695 = vsub.f32 %v333, %v4694
    %v4696 = vand.u32 %v4695, 4294901760
    %4697 = vmatpush.msra.mxu0 %v4696
    %v4698 = vand.u32 %v332, 4294901760
    %v4699 = vsub.f32 %v332, %v4698
    %v4700 = vand.u32 %v4699, 4294901760
    %4701 = vmatpush.msra.mxu0 %v4700
    %v4702 = vand.u32 %v331, 4294901760
    %v4703 = vsub.f32 %v331, %v4702
    %v4704 = vand.u32 %v4703, 4294901760
    %4705 = vmatpush.msra.mxu0 %v4704
    %v4706 = vand.u32 %v330, 4294901760
    %v4707 = vsub.f32 %v330, %v4706
    %v4708 = vand.u32 %v4707, 4294901760
    %4709 = vmatpush.msra.mxu0 %v4708
    %v4710 = vand.u32 %v329, 4294901760
    %v4711 = vsub.f32 %v329, %v4710
    %v4712 = vand.u32 %v4711, 4294901760
    %4713 = vmatpush.msra.mxu0 %v4712
    %v4714 = vand.u32 %v328, 4294901760
    %v4715 = vsub.f32 %v328, %v4714
    %v4716 = vand.u32 %v4715, 4294901760
    %4717 = vmatpush.msra.mxu0 %v4716
    %v4718 = vand.u32 %v327, 4294901760
    %v4719 = vsub.f32 %v327, %v4718
    %v4720 = vand.u32 %v4719, 4294901760
    %4721 = vmatpush.msra.mxu0 %v4720
    %v4722 = vand.u32 %v4517, 4294901760
    %4723 = vmatmul.f32.gmra.mxu0 %v4722
    %v4724 = vpop.f32.mrf.mxu0
    %v4725 = vadd.f32 %v4680, %v4724
    %4726 = vdwg.mxu0
    %4727 = vmatpush.msra.mxu0 0.0
    %4728 = vmatpush.msra.mxu0 0.0
    %4729 = vmatpush.msra.mxu0 0.0
    %4730 = vmatpush.msra.mxu0 0.0
    %4731 = vmatpush.msra.mxu0 0.0
    %4732 = vmatpush.msra.mxu0 0.0
    %4733 = vmatpush.msra.mxu0 0.0
    %4734 = vmatpush.msra.mxu0 0.0
    %v4735 = vand.u32 %v334, 4294901760
    %4736 = vmatpush.msra.mxu0 %v4735
    %v4737 = vand.u32 %v333, 4294901760
    %4738 = vmatpush.msra.mxu0 %v4737
    %v4739 = vand.u32 %v332, 4294901760
    %4740 = vmatpush.msra.mxu0 %v4739
    %v4741 = vand.u32 %v331, 4294901760
    %4742 = vmatpush.msra.mxu0 %v4741
    %v4743 = vand.u32 %v330, 4294901760
    %4744 = vmatpush.msra.mxu0 %v4743
    %v4745 = vand.u32 %v329, 4294901760
    %4746 = vmatpush.msra.mxu0 %v4745
    %v4747 = vand.u32 %v328, 4294901760
    %4748 = vmatpush.msra.mxu0 %v4747
    %v4749 = vand.u32 %v327, 4294901760
    %4750 = vmatpush.msra.mxu0 %v4749
    %v4751 = vand.u32 %v4517, 4294901760
    %4752 = vmatmul.f32.gmra.mxu0 %v4751
    %v4753 = vpop.f32.mrf.mxu0
    %v4754 = vadd.f32 %v4725, %v4753
    %4755 = vdwg.mxu0
    %v4756 = vsub.f32 0.0, %v4754
    %v4757 = vmul.f32 %v4756, 1.442695
    %v4758 = vpow.pop %v4757
    %v4759 = vadd.f32 %v4758, 1.0
    %v4760 = vrcp.pop %v4759
    %v4761 = vmul.f32 %v4759, %v4760
    %v4762 = vsub.f32 1.0, %v4761
    %v4763 = vmul.f32 %v4760, %v4762
    %v4764 = vadd.f32 %v4760, %v4763
    %vm4765 = vweird.f32 %v4759
    %vm4766 = vweird.f32 %v4760
    %vm4767 = vmor %vm4765, %vm4766
    %v4768 = vsel %vm4767, %v4760, %v4764
    %v4769 = vand.u32 2147483647, %v4759
    %vm4770 = vcmp.eq.f32.partialorder %v4769, 8.507059e+37
    %v4771 = vand.u32 %v4759, 2147483648
    %v4772 = vor.u32 1.1754944e-38, %v4771
    %v4773 = vsel %vm4770, %v4772, %v4768
    %v4774 = vmul.f32 1.0, %v4773
    %v4775 = vtanh.pop %v4754
    %v4776 = vmul.f32 %v4774, %v4222
    %4778 = vrot.lane.b32.xlu0 %v4775, 64
    %v4779 = vpop.permute.xlu0 %4778
    %v4781 = vmul.f32 %v4774, %v4779
    %4783 = vrot.lane.b32.xlu0 %v4781, 32
    %v4784 = vpop.permute.xlu0 %4783
    %v4786 = vadd.f32 %v4776, %v4784
    %v4787 = vtanh.pop %v4786
    %4789 = vrot.lane.b32.xlu0 %v4787, 64
    %v4790 = vpop.permute.xlu0 %4789
    %v4792 = vmul.f32 %v4774, %v4790
    %v4793 = vmul.f32 %v4792, %v852
    %4795 = vrot.lane.b32.xlu0 %v4793, 32
    %v4796 = vpop.permute.xlu0 %4795
    %v4798 = vsel %vm859, %v4796, 0.0
    %4799 = vadd.xlane.f32.xlu0 %v4798
    %v4800 = vpop.xlane.xlu0 %4799
    %v4801 = vsel %vm863, %v4800, -inf
    %v4802 = vrot.slane %v4801, 4
    %v4803 = vmax.f32 %v4801, %v4802
    %v4804 = vrot.slane %v4803, 2
    %v4805 = vmax.f32 %v4803, %v4804
    %v4806 = vrot.slane %v4805, 1
    %v4807 = vmax.f32 %v4805, %v4806
    %v4808 = vsub.f32 %v4800, %v4807
    %v4809 = vmul.f32 %v4808, 1.442695
    %v4810 = vpow.pop %v4809
    %v4811 = vsel %vm863, %v4810, 0.0
    %v4812 = vrot.slane %v4811, 4
    %v4813 = vadd.f32 %v4811, %v4812
    %v4814 = vrot.slane %v4813, 2
    %v4815 = vadd.f32 %v4813, %v4814
    %v4816 = vrot.slane %v4815, 1
    %v4817 = vadd.f32 %v4815, %v4816
    %v4818 = vrcp.pop %v4817
    %v4819 = vmul.f32 %v4817, %v4818
    %v4820 = vsub.f32 1.0, %v4819
    %v4821 = vmul.f32 %v4818, %v4820
    %v4822 = vadd.f32 %v4818, %v4821
    %vm4823 = vweird.f32 %v4817
    %vm4824 = vweird.f32 %v4818
    %vm4825 = vmor %vm4823, %vm4824
    %v4826 = vsel %vm4825, %v4818, %v4822
    %v4827 = vand.u32 2147483647, %v4817
    %vm4828 = vcmp.eq.f32.partialorder %v4827, 8.507059e+37
    %v4829 = vand.u32 %v4817, 2147483648
    %v4830 = vor.u32 1.1754944e-38, %v4829
    %v4831 = vsel %vm4828, %v4830, %v4826
    %v4832 = vmul.f32 %v4810, %v4831
    %v4833 = vmul.f32 %v4792, %v4832
    %v4834 = vadd.f32 %v4270, %v4833
    %4836 = vrot.lane.b32.xlu0 %v4834, 32
    %v4837 = vpop.permute.xlu0 %4836
    %4839 = vst.msk [vmem:[#allocation10] sm:$0x3] %vm859, %v4837
    // Predicated region
    $region46: #{tpu_custom_call.1} parent=1 // pred_check
      _
    $region47: #{tpu_custom_call.1} parent=1 // pred_check_branch
      %4841 = sbr.rel (0) target = $region49
    $region48: #{tpu_custom_call.1} parent=1 // pred_region
      %4843 = vsyncadd [#allocation4], 0
      %s4845 = sshll.u32 [#allocation10], 4
      %s4846 = int_to_ptr.vmem [resolvable:$true] %s4845
      %s4847 = sshll.u32 %s7, 4
      %s4848 = int_to_ptr.hbm [resolvable:$true] %s4847
      %4850 = dma.vmem_to_hbm [thread:$0]  %s4846, 32, %s4848, [#allocation4]
    $region49: #{tpu_custom_call.1} parent=1 // pred_fallthru
      _
    // Predicated region
    $region50: #{tpu_custom_call.1} parent=1 // pred_check
      _
    $region51: #{tpu_custom_call.1} parent=1 // pred_check_branch
      %4852 = sbr.rel (0) target = $region53
    $region52: #{tpu_custom_call.1} parent=1 // pred_region
      %4854 = dma.done [#allocation4], 32
    $region53: #{tpu_custom_call.1} parent=1 // pred_fallthru
      _
    %4855 = vsyncpa [#allocation3], 1
    %4856 = vsyncpa [#allocation6], 1
    %4857 = vsyncpa [#allocation9], 1
    %4858 = vsyncpa [#allocation4], 1

</llo_original>
